<compile_context>
chip_gen: v7x
topology: tpu7x:2x2x1
jax: 0.10.0
libtpu: 0.0.40
codegen_flags: <defaults>
</compile_context>

<pallas_src>
import functools

import jax
import jax.numpy as jnp
from jax import lax
from jax.experimental import pallas as pl
from jax.experimental.pallas import tpu as pltpu


def _round_up(x, m):
    return (x + m - 1) // m * m


def _pick_strip_height(H, th_max):
    th = min(th_max, H)
    while H % th:
        th -= 1
    return th


def _conv_dw_conv_kernel(x_ref, top_ref, bot_ref, wdw_ref, bdw_ref,
                         wpw_ref, bpw_ref, o_ref, *, TH, W, Cp, Coutp, K):
    # x_ref:   (1, TH, W, Cp)   current row strip (channels lane-padded)
    # top_ref: (1, 1, W, Cp)    row above the strip (clamped at image top)
    # bot_ref: (1, 1, W, Cp)    row below the strip (clamped at image bottom)
    # wdw_ref: (K, K, Cp)  f32  depthwise weight, BN scale folded in
    # bdw_ref: (1, Cp)     f32  depthwise BN bias
    # wpw_ref: (Cp, Coutp) bf16 pointwise weight, BN scale folded in
    # bpw_ref: (1, Coutp)  f32  pointwise BN bias
    # o_ref:   (1, TH, W, Coutp)
    h = pl.program_id(1)
    n_strips = pl.num_programs(1)
    f32 = jnp.float32

    # Halo rows arrive via clamped row reads; zero them at true image borders.
    vt = (h > 0).astype(f32)
    vb = (h < n_strips - 1).astype(f32)

    # Hoisted loop invariants.
    wdw = wdw_ref[...]                                        # (K, K, Cp)
    wt = [[wdw[i, j] for j in range(K)] for i in range(K)]    # 9 x (Cp,)
    bdw = bdw_ref[...]                                        # (1, Cp)
    wpw = wpw_ref[...]                                        # (Cp, Coutp) bf16
    bpw = bpw_ref[...]                                        # (1, Coutp)
    col = lax.broadcasted_iota(jnp.int32, (W, Cp), 0)
    has_left = col > 0           # output col 0 has no w-1 neighbour (pad=1)
    has_right = col < W - 1      # output col W-1 has no w+1 neighbour

    # Sliding 3-row window over the strip: aligned leading-dim reads, each
    # input row loaded exactly once; per-row accumulator stays in vregs.
    row_m1 = top_ref[0, 0].astype(f32) * vt
    row_0 = x_ref[0, 0].astype(f32)
    for r in range(TH):
        if r + 1 < TH:
            row_p1 = x_ref[0, r + 1].astype(f32)
        else:
            row_p1 = bot_ref[0, 0].astype(f32) * vb
        rows = (row_m1, row_0, row_p1)

        # Vertical contraction per column offset j, then shift the j=0 / j=2
        # partials along W with pltpu.roll (XLU) + edge masks (no scratch,
        # no unaligned sublane slices).
        cs = []
        for j in range(K):
            s = rows[0] * wt[0][j]
            for i in range(1, K):
                s = s + rows[i] * wt[i][j]
            cs.append(s)
        acc = cs[1]
        acc = acc + jnp.where(has_left, pltpu.roll(cs[0], 1, axis=0), 0.0)
        acc = acc + jnp.where(has_right, pltpu.roll(cs[2], W - 1, axis=0), 0.0)

        # Depthwise BN bias (scale pre-folded) + ReLU.
        y = jnp.maximum(acc + bdw, 0.0)                       # (W, Cp)

        # Pointwise 1x1 conv on the MXU (bf16 in, f32 acc) + BN bias + ReLU.
        z = jnp.dot(y.astype(jnp.bfloat16), wpw,
                    preferred_element_type=jnp.float32)       # (W, Coutp)
        z = jnp.maximum(z + bpw, 0.0)

        # Lane-dense store of the MXU result for this row (no reshape).
        o_ref[0, r] = z.astype(o_ref.dtype)

        row_m1, row_0 = row_0, row_p1


def conv_dw_conv_nhwc(x_nhwc, w_dw, dw_bn, w_pw, pw_bn, *, eps=1e-5, th_max=16):
    """x_nhwc: (N,H,W,C). w_dw: (K,K,C). w_pw: (C,Cout).
    dw_bn / pw_bn: dicts with gamma, beta, mean, var (eval-mode BN)."""
    N, H, W, C = x_nhwc.shape
    K = w_dw.shape[0]
    Cout = w_pw.shape[1]
    assert K == 3, "Conv_dw_Conv uses a fixed 3x3 depthwise kernel"
    # TODO(synk): stride=2 depthwise variant (used by other MobileNetV1 blocks)
    # not implemented; module defaults here are stride=1, padding=1, ReLU.

    Cp = _round_up(C, 128)
    Coutp = _round_up(Cout, 128)
    TH = _pick_strip_height(H, th_max)
    n_strips = H // TH

    # Fold eval-mode BN into per-channel scale/bias; scale goes into weights.
    def fold(bn):
        scale = bn["gamma"] * lax.rsqrt(bn["var"] + eps)
        bias = bn["beta"] - bn["mean"] * scale
        return scale.astype(jnp.float32), bias.astype(jnp.float32)

    s_dw, b_dw = fold(dw_bn)
    s_pw, b_pw = fold(pw_bn)

    # Lane-dense (128-padded) weights / biases; padded channels are zero so
    # they contribute nothing and their outputs are sliced off below.
    w_dw_f = jnp.zeros((K, K, Cp), jnp.float32)
    w_dw_f = w_dw_f.at[:, :, :C].set(w_dw.astype(jnp.float32) * s_dw[None, None, :])
    b_dw_f = jnp.zeros((1, Cp), jnp.float32).at[0, :C].set(b_dw)
    w_pw_f = jnp.zeros((Cp, Coutp), jnp.bfloat16)
    w_pw_f = w_pw_f.at[:C, :Cout].set(
        (w_pw.astype(jnp.float32) * s_pw[None, :]).astype(jnp.bfloat16))
    b_pw_f = jnp.zeros((1, Coutp), jnp.float32).at[0, :Cout].set(b_pw)

    # Lane-dense activations (layout plumbing: keep activations channel-padded
    # NHWC end-to-end in a full network so this pad and the output slice go away).
    x_p = x_nhwc if Cp == C else jnp.pad(
        x_nhwc, ((0, 0), (0, 0), (0, 0), (0, Cp - C)))
    # TODO(synk): feed x as bf16 (halves strip load bytes) when the caller can
    # supply bf16 activations; depthwise accumulation stays f32 in-kernel.

    kernel = functools.partial(_conv_dw_conv_kernel,
                               TH=TH, W=W, Cp=Cp, Coutp=Coutp, K=K)

    out_p = pl.pallas_call(
        kernel,
        out_shape=jax.ShapeDtypeStruct((N, H, W, Coutp), x_nhwc.dtype),
        grid_spec=pltpu.PrefetchScalarGridSpec(
            num_scalar_prefetch=0,
            grid=(N, n_strips),
            in_specs=[
                # main (non-overlapping) row strip
                # TODO(synk): sweep pipeline_mode=pl.Buffered(2..4) here.
                pl.BlockSpec((1, TH, W, Cp), lambda n, h: (n, h, 0, 0)),
                # halo row above (block-size-1 H dim => row index; clamped)
                pl.BlockSpec((1, 1, W, Cp),
                             lambda n, h: (n, jnp.maximum(h * TH - 1, 0), 0, 0)),
                # halo row below (clamped)
                pl.BlockSpec((1, 1, W, Cp),
                             lambda n, h: (n, jnp.minimum(h * TH + TH, H - 1), 0, 0)),
                pl.BlockSpec((K, K, Cp), lambda n, h: (0, 0, 0)),
                pl.BlockSpec((1, Cp), lambda n, h: (0, 0)),
                pl.BlockSpec((Cp, Coutp), lambda n, h: (0, 0)),
                pl.BlockSpec((1, Coutp), lambda n, h: (0, 0)),
            ],
            out_specs=pl.BlockSpec((1, TH, W, Coutp), lambda n, h: (n, h, 0, 0)),
        ),
        compiler_params=pltpu.CompilerParams(
            dimension_semantics=("parallel", "parallel"),
            # 32 MiB is v7x-safe; raise toward 64 MiB on v5e/v6e for larger
            # strips / deeper buffering.
            vmem_limit_bytes=32 * 1024 * 1024),
    )(x_p, x_p, x_p, w_dw_f, b_dw_f, w_pw_f, b_pw_f)

    return out_p if Coutp == Cout else out_p[..., :Cout]


def conv_dw_conv_nchw(x_nchw, w_dw, dw_bn, w_pw, pw_bn):
    """PyTorch-layout entry point (NCHW in / NCHW out).  The transposes here
    are test-only layout plumbing; production use should call the NHWC path."""
    x_nhwc = jnp.transpose(x_nchw, (0, 2, 3, 1))
    y_nhwc = conv_dw_conv_nhwc(x_nhwc, w_dw, dw_bn, w_pw, pw_bn)
    return jnp.transpose(y_nhwc, (0, 3, 1, 2))


def _reference_nhwc(x, w_dw, dw_bn, w_pw, pw_bn, eps=1e-5):
    """Pure-JAX f32 reference (NHWC), mirrors the PyTorch module."""
    C = x.shape[-1]
    Cout = w_pw.shape[1]
    dn = ("NHWC", "HWIO", "NHWC")
    y = lax.conv_general_dilated(
        x.astype(jnp.float32), w_dw.reshape(3, 3, 1, C).astype(jnp.float32),
        window_strides=(1, 1), padding="SAME",
        dimension_numbers=dn, feature_group_count=C)
    s = dw_bn["gamma"] * lax.rsqrt(dw_bn["var"] + eps)
    y = jnp.maximum(y * s + (dw_bn["beta"] - dw_bn["mean"] * s), 0.0)
    z = lax.conv_general_dilated(
        y, w_pw.reshape(1, 1, C, Cout).astype(jnp.float32),
        window_strides=(1, 1), padding="VALID", dimension_numbers=dn)
    s2 = pw_bn["gamma"] * lax.rsqrt(pw_bn["var"] + eps)
    z = jnp.maximum(z * s2 + (pw_bn["beta"] - pw_bn["mean"] * s2), 0.0)
    return z.astype(x.dtype)


if __name__ == "__main__":
    # Small shapes consistent with the module: N=2, C_in=4, H=W=16, C_out=8.
    N, C, H, W, Cout, K = 2, 4, 16, 16, 8, 3

    key = jax.random.PRNGKey(0)
    kx, kdw, kpw, kg1, kb1, kg2, kb2, km1, kv1, km2, kv2 = jax.random.split(key, 11)

    x_nchw = jax.random.normal(kx, (N, C, H, W), dtype=jnp.float32)

    # Depthwise conv weight: PyTorch shape (C, 1, K, K) -> kernel layout (K, K, C).
    w_dw_torch = jax.random.normal(kdw, (C, 1, K, K), dtype=jnp.float32) * 0.2
    w_dw = jnp.transpose(w_dw_torch[:, 0, :, :], (1, 2, 0))          # (K, K, C)

    # Pointwise conv weight: PyTorch shape (Cout, C, 1, 1) -> (C, Cout).
    w_pw_torch = jax.random.normal(kpw, (Cout, C, 1, 1), dtype=jnp.float32) * 0.2
    w_pw = jnp.transpose(w_pw_torch[:, :, 0, 0], (1, 0))             # (C, Cout)

    # BatchNorm params (eval mode, deterministic synthetic stats).
    dw_bn = dict(gamma=1.0 + 0.1 * jax.random.normal(kg1, (C,)),
                 beta=0.1 * jax.random.normal(kb1, (C,)),
                 mean=0.1 * jax.random.normal(km1, (C,)),
                 var=1.0 + 0.1 * jax.random.uniform(kv1, (C,)))
    pw_bn = dict(gamma=1.0 + 0.1 * jax.random.normal(kg2, (Cout,)),
                 beta=0.1 * jax.random.normal(kb2, (Cout,)),
                 mean=0.1 * jax.random.normal(km2, (Cout,)),
                 var=1.0 + 0.1 * jax.random.uniform(kv2, (Cout,)))

    out = conv_dw_conv_nchw(x_nchw, w_dw, dw_bn, w_pw, pw_bn)
    out = jax.block_until_ready(out)
    assert out.shape == (N, Cout, H, W), out.shape

    # Cross-check against pure-JAX f32 reference (kernel uses bf16 MXU
    # operands for the 1x1 conv, so tolerance is loosened accordingly).
    ref = _reference_nhwc(jnp.transpose(x_nchw, (0, 2, 3, 1)),
                          w_dw, dw_bn, w_pw, pw_bn)
    ref = jnp.transpose(ref, (0, 3, 1, 2))
    max_err = float(jnp.max(jnp.abs(out - ref)))
    assert jnp.allclose(out, ref, atol=2e-2, rtol=2e-2), max_err

    print("KERNEL_OK")
</pallas_src>

<mosaic_0001>
module attributes {stable_mosaic.version = 11 : i64} {
  func.func @_conv_dw_conv_kernel(%arg0: i32, %arg1: i32, %arg2: memref<1x16x16x128xf32, #tpu.memory_space<vmem>>, %arg3: memref<1x1x16x128xf32, #tpu.memory_space<vmem>>, %arg4: memref<1x1x16x128xf32, #tpu.memory_space<vmem>>, %arg5: memref<3x3x128xf32, #tpu.memory_space<vmem>>, %arg6: memref<1x128xf32, #tpu.memory_space<vmem>>, %arg7: memref<128x128xbf16, #tpu.memory_space<vmem>>, %arg8: memref<1x128xf32, #tpu.memory_space<vmem>>, %arg9: memref<1x16x16x128xf32, #tpu.memory_space<vmem>>) attributes {dimension_semantics = [#tpu.dimension_semantics<parallel>, #tpu.dimension_semantics<parallel>], iteration_bounds = array<i64: 2, 1>, scalar_prefetch = 0 : i64, scratch_operands = 0 : i64, tpu.core_type = #tpu.core_type<tc>, window_params = [{transform_indices = @transform_0, window_bounds = array<i64: 1, 16, 16, 128>}, {transform_indices = @transform_1, window_bounds = array<i64: 1, 1, 16, 128>}, {transform_indices = @transform_2, window_bounds = array<i64: 1, 1, 16, 128>}, {pipeline_mode = #tpu.pipeline_mode<synchronous>, transform_indices = @transform_3, window_bounds = array<i64: 3, 3, 128>}, {pipeline_mode = #tpu.pipeline_mode<synchronous>, transform_indices = @transform_4, window_bounds = array<i64: 1, 128>}, {pipeline_mode = #tpu.pipeline_mode<synchronous>, transform_indices = @transform_5, window_bounds = array<i64: 128, 128>}, {pipeline_mode = #tpu.pipeline_mode<synchronous>, transform_indices = @transform_6, window_bounds = array<i64: 1, 128>}, {transform_indices = @transform_7, window_bounds = array<i64: 1, 16, 16, 128>}]} {
    %c0_i32 = arith.constant 0 : i32
    %0 = arith.cmpi sgt, %arg1, %c0_i32 : i32
    %1 = arith.extui %0 : i1 to i32
    %2 = arith.sitofp %1 : i32 to f32
    %c0_i32_0 = arith.constant 0 : i32
    %3 = arith.cmpi slt, %arg1, %c0_i32_0 : i32
    %4 = arith.extui %3 : i1 to i32
    %5 = arith.sitofp %4 : i32 to f32
    %c0 = arith.constant 0 : index
    %c0_1 = arith.constant 0 : index
    %c0_2 = arith.constant 0 : index
    %6 = vector.load %arg5[%c0, %c0_1, %c0_2] : memref<3x3x128xf32, #tpu.memory_space<vmem>>, vector<3x3x128xf32>
    %7 = vector.extract_strided_slice %6 {offsets = [0, 0, 0], sizes = [1, 1, 128], strides = [1, 1, 1]} : vector<3x3x128xf32> to vector<1x1x128xf32>
    %8 = vector.shape_cast %7 : vector<1x1x128xf32> to vector<128xf32>
    %9 = vector.extract_strided_slice %6 {offsets = [0, 1, 0], sizes = [1, 1, 128], strides = [1, 1, 1]} : vector<3x3x128xf32> to vector<1x1x128xf32>
    %10 = vector.shape_cast %9 : vector<1x1x128xf32> to vector<128xf32>
    %11 = vector.extract_strided_slice %6 {offsets = [0, 2, 0], sizes = [1, 1, 128], strides = [1, 1, 1]} : vector<3x3x128xf32> to vector<1x1x128xf32>
    %12 = vector.shape_cast %11 : vector<1x1x128xf32> to vector<128xf32>
    %13 = vector.extract_strided_slice %6 {offsets = [1, 0, 0], sizes = [1, 1, 128], strides = [1, 1, 1]} : vector<3x3x128xf32> to vector<1x1x128xf32>
    %14 = vector.shape_cast %13 : vector<1x1x128xf32> to vector<128xf32>
    %15 = vector.extract_strided_slice %6 {offsets = [1, 1, 0], sizes = [1, 1, 128], strides = [1, 1, 1]} : vector<3x3x128xf32> to vector<1x1x128xf32>
    %16 = vector.shape_cast %15 : vector<1x1x128xf32> to vector<128xf32>
    %17 = vector.extract_strided_slice %6 {offsets = [1, 2, 0], sizes = [1, 1, 128], strides = [1, 1, 1]} : vector<3x3x128xf32> to vector<1x1x128xf32>
    %18 = vector.shape_cast %17 : vector<1x1x128xf32> to vector<128xf32>
    %19 = vector.extract_strided_slice %6 {offsets = [2, 0, 0], sizes = [1, 1, 128], strides = [1, 1, 1]} : vector<3x3x128xf32> to vector<1x1x128xf32>
    %20 = vector.shape_cast %19 : vector<1x1x128xf32> to vector<128xf32>
    %21 = vector.extract_strided_slice %6 {offsets = [2, 1, 0], sizes = [1, 1, 128], strides = [1, 1, 1]} : vector<3x3x128xf32> to vector<1x1x128xf32>
    %22 = vector.shape_cast %21 : vector<1x1x128xf32> to vector<128xf32>
    %23 = vector.extract_strided_slice %6 {offsets = [2, 2, 0], sizes = [1, 1, 128], strides = [1, 1, 1]} : vector<3x3x128xf32> to vector<1x1x128xf32>
    %24 = vector.shape_cast %23 : vector<1x1x128xf32> to vector<128xf32>
    %c0_3 = arith.constant 0 : index
    %c0_4 = arith.constant 0 : index
    %25 = vector.load %arg6[%c0_3, %c0_4] : memref<1x128xf32, #tpu.memory_space<vmem>>, vector<1x128xf32>
    %c0_5 = arith.constant 0 : index
    %c0_6 = arith.constant 0 : index
    %26 = vector.load %arg7[%c0_5, %c0_6] : memref<128x128xbf16, #tpu.memory_space<vmem>>, vector<128x128xbf16>
    %c0_7 = arith.constant 0 : index
    %c0_8 = arith.constant 0 : index
    %27 = vector.load %arg8[%c0_7, %c0_8] : memref<1x128xf32, #tpu.memory_space<vmem>>, vector<1x128xf32>
    %28 = tpu.iota {dimensions = array<i32: 0>} : vector<16x128xi32>
    %c0_i32_9 = arith.constant 0 : i32
    %29 = vector.broadcast %c0_i32_9 : i32 to vector<16x128xi32>
    %30 = arith.cmpi sgt, %28, %29 : vector<16x128xi32>
    %c15_i32 = arith.constant 15 : i32
    %31 = vector.broadcast %c15_i32 : i32 to vector<16x128xi32>
    %32 = arith.cmpi slt, %28, %31 : vector<16x128xi32>
    %c0_10 = arith.constant 0 : index
    %c0_11 = arith.constant 0 : index
    %c0_12 = arith.constant 0 : index
    %c0_13 = arith.constant 0 : index
    %33 = vector.load %arg3[%c0_10, %c0_11, %c0_12, %c0_13] : memref<1x1x16x128xf32, #tpu.memory_space<vmem>>, vector<1x1x16x128xf32>
    %34 = vector.shape_cast %33 : vector<1x1x16x128xf32> to vector<16x128xf32>
    %35 = vector.broadcast %2 : f32 to vector<16x128xf32>
    %36 = arith.mulf %34, %35 : vector<16x128xf32>
    %c0_14 = arith.constant 0 : index
    %c0_15 = arith.constant 0 : index
    %c0_16 = arith.constant 0 : index
    %c0_17 = arith.constant 0 : index
    %37 = vector.load %arg2[%c0_14, %c0_15, %c0_16, %c0_17] : memref<1x16x16x128xf32, #tpu.memory_space<vmem>>, vector<1x1x16x128xf32>
    %38 = vector.shape_cast %37 : vector<1x1x16x128xf32> to vector<16x128xf32>
    %c0_18 = arith.constant 0 : index
    %c1 = arith.constant 1 : index
    %c0_19 = arith.constant 0 : index
    %c0_20 = arith.constant 0 : index
    %39 = vector.load %arg2[%c0_18, %c1, %c0_19, %c0_20] : memref<1x16x16x128xf32, #tpu.memory_space<vmem>>, vector<1x1x16x128xf32>
    %40 = vector.shape_cast %39 : vector<1x1x16x128xf32> to vector<16x128xf32>
    %41 = vector.shape_cast %8 : vector<128xf32> to vector<1x128xf32>
    %42 = vector.broadcast %41 : vector<1x128xf32> to vector<16x128xf32>
    %43 = arith.mulf %36, %42 : vector<16x128xf32>
    %44 = vector.shape_cast %14 : vector<128xf32> to vector<1x128xf32>
    %45 = vector.broadcast %44 : vector<1x128xf32> to vector<16x128xf32>
    %46 = arith.mulf %38, %45 : vector<16x128xf32>
    %47 = arith.addf %43, %46 : vector<16x128xf32>
    %48 = vector.shape_cast %20 : vector<128xf32> to vector<1x128xf32>
    %49 = vector.broadcast %48 : vector<1x128xf32> to vector<16x128xf32>
    %50 = arith.mulf %40, %49 : vector<16x128xf32>
    %51 = arith.addf %47, %50 : vector<16x128xf32>
    %52 = vector.shape_cast %10 : vector<128xf32> to vector<1x128xf32>
    %53 = vector.broadcast %52 : vector<1x128xf32> to vector<16x128xf32>
    %54 = arith.mulf %36, %53 : vector<16x128xf32>
    %55 = vector.shape_cast %16 : vector<128xf32> to vector<1x128xf32>
    %56 = vector.broadcast %55 : vector<1x128xf32> to vector<16x128xf32>
    %57 = arith.mulf %38, %56 : vector<16x128xf32>
    %58 = arith.addf %54, %57 : vector<16x128xf32>
    %59 = vector.shape_cast %22 : vector<128xf32> to vector<1x128xf32>
    %60 = vector.broadcast %59 : vector<1x128xf32> to vector<16x128xf32>
    %61 = arith.mulf %40, %60 : vector<16x128xf32>
    %62 = arith.addf %58, %61 : vector<16x128xf32>
    %63 = vector.shape_cast %12 : vector<128xf32> to vector<1x128xf32>
    %64 = vector.broadcast %63 : vector<1x128xf32> to vector<16x128xf32>
    %65 = arith.mulf %36, %64 : vector<16x128xf32>
    %66 = vector.shape_cast %18 : vector<128xf32> to vector<1x128xf32>
    %67 = vector.broadcast %66 : vector<1x128xf32> to vector<16x128xf32>
    %68 = arith.mulf %38, %67 : vector<16x128xf32>
    %69 = arith.addf %65, %68 : vector<16x128xf32>
    %70 = vector.shape_cast %24 : vector<128xf32> to vector<1x128xf32>
    %71 = vector.broadcast %70 : vector<1x128xf32> to vector<16x128xf32>
    %72 = arith.mulf %40, %71 : vector<16x128xf32>
    %73 = arith.addf %69, %72 : vector<16x128xf32>
    %c1_i32 = arith.constant 1 : i32
    %74 = tpu.dynamic_rotate %51 by %c1_i32 dim 0 : vector<16x128xf32>, i32 -> vector<16x128xf32>
    %cst = arith.constant 0.000000e+00 : f32
    %75 = vector.broadcast %cst : f32 to vector<16x128xf32>
    %76 = arith.select %30, %74, %75 : vector<16x128xi1>, vector<16x128xf32>
    %77 = arith.addf %62, %76 : vector<16x128xf32>
    %c15_i32_21 = arith.constant 15 : i32
    %78 = tpu.dynamic_rotate %73 by %c15_i32_21 dim 0 : vector<16x128xf32>, i32 -> vector<16x128xf32>
    %cst_22 = arith.constant 0.000000e+00 : f32
    %79 = vector.broadcast %cst_22 : f32 to vector<16x128xf32>
    %80 = arith.select %32, %78, %79 : vector<16x128xi1>, vector<16x128xf32>
    %81 = arith.addf %77, %80 : vector<16x128xf32>
    %82 = vector.broadcast %25 : vector<1x128xf32> to vector<16x128xf32>
    %83 = arith.addf %81, %82 : vector<16x128xf32>
    %cst_23 = arith.constant 0.000000e+00 : f32
    %84 = vector.broadcast %cst_23 : f32 to vector<16x128xf32>
    %85 = arith.maximumf %83, %84 : vector<16x128xf32>
    %86 = arith.truncf %85 : vector<16x128xf32> to vector<16x128xbf16>
    %cst_24 = arith.constant dense<0.000000e+00> : vector<16x128xf32>
    %87 = tpu.matmul %86, %26, %cst_24 {dimension_numbers = #tpu.dot_dimension_numbers<[1], [0], [0], [1], [0, 0, 1, 1], [], []>} : vector<16x128xbf16>, vector<128x128xbf16>, vector<16x128xf32> -> vector<16x128xf32>
    %88 = vector.broadcast %27 : vector<1x128xf32> to vector<16x128xf32>
    %89 = arith.addf %87, %88 : vector<16x128xf32>
    %cst_25 = arith.constant 0.000000e+00 : f32
    %90 = vector.broadcast %cst_25 : f32 to vector<16x128xf32>
    %91 = arith.maximumf %89, %90 : vector<16x128xf32>
    %c0_26 = arith.constant 0 : index
    %c0_27 = arith.constant 0 : index
    %c0_28 = arith.constant 0 : index
    %c0_29 = arith.constant 0 : index
    %92 = vector.load %arg9[%c0_26, %c0_27, %c0_28, %c0_29] : memref<1x16x16x128xf32, #tpu.memory_space<vmem>>, vector<1x1x16x128xf32>
    %93 = vector.shape_cast %92 : vector<1x1x16x128xf32> to vector<16x128xf32>
    %94 = vector.shape_cast %91 : vector<16x128xf32> to vector<1x1x16x128xf32>
    tpu.vector_store %arg9[%c0_26, %c0_27, %c0_28, %c0_29], %94 {strides = array<i32>} : memref<1x16x16x128xf32, #tpu.memory_space<vmem>>, vector<1x1x16x128xf32>,
    %c0_30 = arith.constant 0 : index
    %c2 = arith.constant 2 : index
    %c0_31 = arith.constant 0 : index
    %c0_32 = arith.constant 0 : index
    %95 = vector.load %arg2[%c0_30, %c2, %c0_31, %c0_32] : memref<1x16x16x128xf32, #tpu.memory_space<vmem>>, vector<1x1x16x128xf32>
    %96 = vector.shape_cast %95 : vector<1x1x16x128xf32> to vector<16x128xf32>
    %97 = vector.shape_cast %8 : vector<128xf32> to vector<1x128xf32>
    %98 = vector.broadcast %97 : vector<1x128xf32> to vector<16x128xf32>
    %99 = arith.mulf %38, %98 : vector<16x128xf32>
    %100 = vector.shape_cast %14 : vector<128xf32> to vector<1x128xf32>
    %101 = vector.broadcast %100 : vector<1x128xf32> to vector<16x128xf32>
    %102 = arith.mulf %40, %101 : vector<16x128xf32>
    %103 = arith.addf %99, %102 : vector<16x128xf32>
    %104 = vector.shape_cast %20 : vector<128xf32> to vector<1x128xf32>
    %105 = vector.broadcast %104 : vector<1x128xf32> to vector<16x128xf32>
    %106 = arith.mulf %96, %105 : vector<16x128xf32>
    %107 = arith.addf %103, %106 : vector<16x128xf32>
    %108 = vector.shape_cast %10 : vector<128xf32> to vector<1x128xf32>
    %109 = vector.broadcast %108 : vector<1x128xf32> to vector<16x128xf32>
    %110 = arith.mulf %38, %109 : vector<16x128xf32>
    %111 = vector.shape_cast %16 : vector<128xf32> to vector<1x128xf32>
    %112 = vector.broadcast %111 : vector<1x128xf32> to vector<16x128xf32>
    %113 = arith.mulf %40, %112 : vector<16x128xf32>
    %114 = arith.addf %110, %113 : vector<16x128xf32>
    %115 = vector.shape_cast %22 : vector<128xf32> to vector<1x128xf32>
    %116 = vector.broadcast %115 : vector<1x128xf32> to vector<16x128xf32>
    %117 = arith.mulf %96, %116 : vector<16x128xf32>
    %118 = arith.addf %114, %117 : vector<16x128xf32>
    %119 = vector.shape_cast %12 : vector<128xf32> to vector<1x128xf32>
    %120 = vector.broadcast %119 : vector<1x128xf32> to vector<16x128xf32>
    %121 = arith.mulf %38, %120 : vector<16x128xf32>
    %122 = vector.shape_cast %18 : vector<128xf32> to vector<1x128xf32>
    %123 = vector.broadcast %122 : vector<1x128xf32> to vector<16x128xf32>
    %124 = arith.mulf %40, %123 : vector<16x128xf32>
    %125 = arith.addf %121, %124 : vector<16x128xf32>
    %126 = vector.shape_cast %24 : vector<128xf32> to vector<1x128xf32>
    %127 = vector.broadcast %126 : vector<1x128xf32> to vector<16x128xf32>
    %128 = arith.mulf %96, %127 : vector<16x128xf32>
    %129 = arith.addf %125, %128 : vector<16x128xf32>
    %c1_i32_33 = arith.constant 1 : i32
    %130 = tpu.dynamic_rotate %107 by %c1_i32_33 dim 0 : vector<16x128xf32>, i32 -> vector<16x128xf32>
    %cst_34 = arith.constant 0.000000e+00 : f32
    %131 = vector.broadcast %cst_34 : f32 to vector<16x128xf32>
    %132 = arith.select %30, %130, %131 : vector<16x128xi1>, vector<16x128xf32>
    %133 = arith.addf %118, %132 : vector<16x128xf32>
    %c15_i32_35 = arith.constant 15 : i32
    %134 = tpu.dynamic_rotate %129 by %c15_i32_35 dim 0 : vector<16x128xf32>, i32 -> vector<16x128xf32>
    %cst_36 = arith.constant 0.000000e+00 : f32
    %135 = vector.broadcast %cst_36 : f32 to vector<16x128xf32>
    %136 = arith.select %32, %134, %135 : vector<16x128xi1>, vector<16x128xf32>
    %137 = arith.addf %133, %136 : vector<16x128xf32>
    %138 = vector.broadcast %25 : vector<1x128xf32> to vector<16x128xf32>
    %139 = arith.addf %137, %138 : vector<16x128xf32>
    %cst_37 = arith.constant 0.000000e+00 : f32
    %140 = vector.broadcast %cst_37 : f32 to vector<16x128xf32>
    %141 = arith.maximumf %139, %140 : vector<16x128xf32>
    %142 = arith.truncf %141 : vector<16x128xf32> to vector<16x128xbf16>
    %cst_38 = arith.constant dense<0.000000e+00> : vector<16x128xf32>
    %143 = tpu.matmul %142, %26, %cst_38 {dimension_numbers = #tpu.dot_dimension_numbers<[1], [0], [0], [1], [0, 0, 1, 1], [], []>} : vector<16x128xbf16>, vector<128x128xbf16>, vector<16x128xf32> -> vector<16x128xf32>
    %144 = vector.broadcast %27 : vector<1x128xf32> to vector<16x128xf32>
    %145 = arith.addf %143, %144 : vector<16x128xf32>
    %cst_39 = arith.constant 0.000000e+00 : f32
    %146 = vector.broadcast %cst_39 : f32 to vector<16x128xf32>
    %147 = arith.maximumf %145, %146 : vector<16x128xf32>
    %c0_40 = arith.constant 0 : index
    %c1_41 = arith.constant 1 : index
    %c0_42 = arith.constant 0 : index
    %c0_43 = arith.constant 0 : index
    %148 = vector.load %arg9[%c0_40, %c1_41, %c0_42, %c0_43] : memref<1x16x16x128xf32, #tpu.memory_space<vmem>>, vector<1x1x16x128xf32>
    %149 = vector.shape_cast %148 : vector<1x1x16x128xf32> to vector<16x128xf32>
    %150 = vector.shape_cast %147 : vector<16x128xf32> to vector<1x1x16x128xf32>
    tpu.vector_store %arg9[%c0_40, %c1_41, %c0_42, %c0_43], %150 {strides = array<i32>} : memref<1x16x16x128xf32, #tpu.memory_space<vmem>>, vector<1x1x16x128xf32>,
    %c0_44 = arith.constant 0 : index
    %c3 = arith.constant 3 : index
    %c0_45 = arith.constant 0 : index
    %c0_46 = arith.constant 0 : index
    %151 = vector.load %arg2[%c0_44, %c3, %c0_45, %c0_46] : memref<1x16x16x128xf32, #tpu.memory_space<vmem>>, vector<1x1x16x128xf32>
    %152 = vector.shape_cast %151 : vector<1x1x16x128xf32> to vector<16x128xf32>
    %153 = vector.shape_cast %8 : vector<128xf32> to vector<1x128xf32>
    %154 = vector.broadcast %153 : vector<1x128xf32> to vector<16x128xf32>
    %155 = arith.mulf %40, %154 : vector<16x128xf32>
    %156 = vector.shape_cast %14 : vector<128xf32> to vector<1x128xf32>
    %157 = vector.broadcast %156 : vector<1x128xf32> to vector<16x128xf32>
    %158 = arith.mulf %96, %157 : vector<16x128xf32>
    %159 = arith.addf %155, %158 : vector<16x128xf32>
    %160 = vector.shape_cast %20 : vector<128xf32> to vector<1x128xf32>
    %161 = vector.broadcast %160 : vector<1x128xf32> to vector<16x128xf32>
    %162 = arith.mulf %152, %161 : vector<16x128xf32>
    %163 = arith.addf %159, %162 : vector<16x128xf32>
    %164 = vector.shape_cast %10 : vector<128xf32> to vector<1x128xf32>
    %165 = vector.broadcast %164 : vector<1x128xf32> to vector<16x128xf32>
    %166 = arith.mulf %40, %165 : vector<16x128xf32>
    %167 = vector.shape_cast %16 : vector<128xf32> to vector<1x128xf32>
    %168 = vector.broadcast %167 : vector<1x128xf32> to vector<16x128xf32>
    %169 = arith.mulf %96, %168 : vector<16x128xf32>
    %170 = arith.addf %166, %169 : vector<16x128xf32>
    %171 = vector.shape_cast %22 : vector<128xf32> to vector<1x128xf32>
    %172 = vector.broadcast %171 : vector<1x128xf32> to vector<16x128xf32>
    %173 = arith.mulf %152, %172 : vector<16x128xf32>
    %174 = arith.addf %170, %173 : vector<16x128xf32>
    %175 = vector.shape_cast %12 : vector<128xf32> to vector<1x128xf32>
    %176 = vector.broadcast %175 : vector<1x128xf32> to vector<16x128xf32>
    %177 = arith.mulf %40, %176 : vector<16x128xf32>
    %178 = vector.shape_cast %18 : vector<128xf32> to vector<1x128xf32>
    %179 = vector.broadcast %178 : vector<1x128xf32> to vector<16x128xf32>
    %180 = arith.mulf %96, %179 : vector<16x128xf32>
    %181 = arith.addf %177, %180 : vector<16x128xf32>
    %182 = vector.shape_cast %24 : vector<128xf32> to vector<1x128xf32>
    %183 = vector.broadcast %182 : vector<1x128xf32> to vector<16x128xf32>
    %184 = arith.mulf %152, %183 : vector<16x128xf32>
    %185 = arith.addf %181, %184 : vector<16x128xf32>
    %c1_i32_47 = arith.constant 1 : i32
    %186 = tpu.dynamic_rotate %163 by %c1_i32_47 dim 0 : vector<16x128xf32>, i32 -> vector<16x128xf32>
    %cst_48 = arith.constant 0.000000e+00 : f32
    %187 = vector.broadcast %cst_48 : f32 to vector<16x128xf32>
    %188 = arith.select %30, %186, %187 : vector<16x128xi1>, vector<16x128xf32>
    %189 = arith.addf %174, %188 : vector<16x128xf32>
    %c15_i32_49 = arith.constant 15 : i32
    %190 = tpu.dynamic_rotate %185 by %c15_i32_49 dim 0 : vector<16x128xf32>, i32 -> vector<16x128xf32>
    %cst_50 = arith.constant 0.000000e+00 : f32
    %191 = vector.broadcast %cst_50 : f32 to vector<16x128xf32>
    %192 = arith.select %32, %190, %191 : vector<16x128xi1>, vector<16x128xf32>
    %193 = arith.addf %189, %192 : vector<16x128xf32>
    %194 = vector.broadcast %25 : vector<1x128xf32> to vector<16x128xf32>
    %195 = arith.addf %193, %194 : vector<16x128xf32>
    %cst_51 = arith.constant 0.000000e+00 : f32
    %196 = vector.broadcast %cst_51 : f32 to vector<16x128xf32>
    %197 = arith.maximumf %195, %196 : vector<16x128xf32>
    %198 = arith.truncf %197 : vector<16x128xf32> to vector<16x128xbf16>
    %cst_52 = arith.constant dense<0.000000e+00> : vector<16x128xf32>
    %199 = tpu.matmul %198, %26, %cst_52 {dimension_numbers = #tpu.dot_dimension_numbers<[1], [0], [0], [1], [0, 0, 1, 1], [], []>} : vector<16x128xbf16>, vector<128x128xbf16>, vector<16x128xf32> -> vector<16x128xf32>
    %200 = vector.broadcast %27 : vector<1x128xf32> to vector<16x128xf32>
    %201 = arith.addf %199, %200 : vector<16x128xf32>
    %cst_53 = arith.constant 0.000000e+00 : f32
    %202 = vector.broadcast %cst_53 : f32 to vector<16x128xf32>
    %203 = arith.maximumf %201, %202 : vector<16x128xf32>
    %c0_54 = arith.constant 0 : index
    %c2_55 = arith.constant 2 : index
    %c0_56 = arith.constant 0 : index
    %c0_57 = arith.constant 0 : index
    %204 = vector.load %arg9[%c0_54, %c2_55, %c0_56, %c0_57] : memref<1x16x16x128xf32, #tpu.memory_space<vmem>>, vector<1x1x16x128xf32>
    %205 = vector.shape_cast %204 : vector<1x1x16x128xf32> to vector<16x128xf32>
    %206 = vector.shape_cast %203 : vector<16x128xf32> to vector<1x1x16x128xf32>
    tpu.vector_store %arg9[%c0_54, %c2_55, %c0_56, %c0_57], %206 {strides = array<i32>} : memref<1x16x16x128xf32, #tpu.memory_space<vmem>>, vector<1x1x16x128xf32>,
    %c0_58 = arith.constant 0 : index
    %c4 = arith.constant 4 : index
    %c0_59 = arith.constant 0 : index
    %c0_60 = arith.constant 0 : index
    %207 = vector.load %arg2[%c0_58, %c4, %c0_59, %c0_60] : memref<1x16x16x128xf32, #tpu.memory_space<vmem>>, vector<1x1x16x128xf32>
    %208 = vector.shape_cast %207 : vector<1x1x16x128xf32> to vector<16x128xf32>
    %209 = vector.shape_cast %8 : vector<128xf32> to vector<1x128xf32>
    %210 = vector.broadcast %209 : vector<1x128xf32> to vector<16x128xf32>
    %211 = arith.mulf %96, %210 : vector<16x128xf32>
    %212 = vector.shape_cast %14 : vector<128xf32> to vector<1x128xf32>
    %213 = vector.broadcast %212 : vector<1x128xf32> to vector<16x128xf32>
    %214 = arith.mulf %152, %213 : vector<16x128xf32>
    %215 = arith.addf %211, %214 : vector<16x128xf32>
    %216 = vector.shape_cast %20 : vector<128xf32> to vector<1x128xf32>
    %217 = vector.broadcast %216 : vector<1x128xf32> to vector<16x128xf32>
    %218 = arith.mulf %208, %217 : vector<16x128xf32>
    %219 = arith.addf %215, %218 : vector<16x128xf32>
    %220 = vector.shape_cast %10 : vector<128xf32> to vector<1x128xf32>
    %221 = vector.broadcast %220 : vector<1x128xf32> to vector<16x128xf32>
    %222 = arith.mulf %96, %221 : vector<16x128xf32>
    %223 = vector.shape_cast %16 : vector<128xf32> to vector<1x128xf32>
    %224 = vector.broadcast %223 : vector<1x128xf32> to vector<16x128xf32>
    %225 = arith.mulf %152, %224 : vector<16x128xf32>
    %226 = arith.addf %222, %225 : vector<16x128xf32>
    %227 = vector.shape_cast %22 : vector<128xf32> to vector<1x128xf32>
    %228 = vector.broadcast %227 : vector<1x128xf32> to vector<16x128xf32>
    %229 = arith.mulf %208, %228 : vector<16x128xf32>
    %230 = arith.addf %226, %229 : vector<16x128xf32>
    %231 = vector.shape_cast %12 : vector<128xf32> to vector<1x128xf32>
    %232 = vector.broadcast %231 : vector<1x128xf32> to vector<16x128xf32>
    %233 = arith.mulf %96, %232 : vector<16x128xf32>
    %234 = vector.shape_cast %18 : vector<128xf32> to vector<1x128xf32>
    %235 = vector.broadcast %234 : vector<1x128xf32> to vector<16x128xf32>
    %236 = arith.mulf %152, %235 : vector<16x128xf32>
    %237 = arith.addf %233, %236 : vector<16x128xf32>
    %238 = vector.shape_cast %24 : vector<128xf32> to vector<1x128xf32>
    %239 = vector.broadcast %238 : vector<1x128xf32> to vector<16x128xf32>
    %240 = arith.mulf %208, %239 : vector<16x128xf32>
    %241 = arith.addf %237, %240 : vector<16x128xf32>
    %c1_i32_61 = arith.constant 1 : i32
    %242 = tpu.dynamic_rotate %219 by %c1_i32_61 dim 0 : vector<16x128xf32>, i32 -> vector<16x128xf32>
    %cst_62 = arith.constant 0.000000e+00 : f32
    %243 = vector.broadcast %cst_62 : f32 to vector<16x128xf32>
    %244 = arith.select %30, %242, %243 : vector<16x128xi1>, vector<16x128xf32>
    %245 = arith.addf %230, %244 : vector<16x128xf32>
    %c15_i32_63 = arith.constant 15 : i32
    %246 = tpu.dynamic_rotate %241 by %c15_i32_63 dim 0 : vector<16x128xf32>, i32 -> vector<16x128xf32>
    %cst_64 = arith.constant 0.000000e+00 : f32
    %247 = vector.broadcast %cst_64 : f32 to vector<16x128xf32>
    %248 = arith.select %32, %246, %247 : vector<16x128xi1>, vector<16x128xf32>
    %249 = arith.addf %245, %248 : vector<16x128xf32>
    %250 = vector.broadcast %25 : vector<1x128xf32> to vector<16x128xf32>
    %251 = arith.addf %249, %250 : vector<16x128xf32>
    %cst_65 = arith.constant 0.000000e+00 : f32
    %252 = vector.broadcast %cst_65 : f32 to vector<16x128xf32>
    %253 = arith.maximumf %251, %252 : vector<16x128xf32>
    %254 = arith.truncf %253 : vector<16x128xf32> to vector<16x128xbf16>
    %cst_66 = arith.constant dense<0.000000e+00> : vector<16x128xf32>
    %255 = tpu.matmul %254, %26, %cst_66 {dimension_numbers = #tpu.dot_dimension_numbers<[1], [0], [0], [1], [0, 0, 1, 1], [], []>} : vector<16x128xbf16>, vector<128x128xbf16>, vector<16x128xf32> -> vector<16x128xf32>
    %256 = vector.broadcast %27 : vector<1x128xf32> to vector<16x128xf32>
    %257 = arith.addf %255, %256 : vector<16x128xf32>
    %cst_67 = arith.constant 0.000000e+00 : f32
    %258 = vector.broadcast %cst_67 : f32 to vector<16x128xf32>
    %259 = arith.maximumf %257, %258 : vector<16x128xf32>
    %c0_68 = arith.constant 0 : index
    %c3_69 = arith.constant 3 : index
    %c0_70 = arith.constant 0 : index
    %c0_71 = arith.constant 0 : index
    %260 = vector.load %arg9[%c0_68, %c3_69, %c0_70, %c0_71] : memref<1x16x16x128xf32, #tpu.memory_space<vmem>>, vector<1x1x16x128xf32>
    %261 = vector.shape_cast %260 : vector<1x1x16x128xf32> to vector<16x128xf32>
    %262 = vector.shape_cast %259 : vector<16x128xf32> to vector<1x1x16x128xf32>
    tpu.vector_store %arg9[%c0_68, %c3_69, %c0_70, %c0_71], %262 {strides = array<i32>} : memref<1x16x16x128xf32, #tpu.memory_space<vmem>>, vector<1x1x16x128xf32>,
    %c0_72 = arith.constant 0 : index
    %c5 = arith.constant 5 : index
    %c0_73 = arith.constant 0 : index
    %c0_74 = arith.constant 0 : index
    %263 = vector.load %arg2[%c0_72, %c5, %c0_73, %c0_74] : memref<1x16x16x128xf32, #tpu.memory_space<vmem>>, vector<1x1x16x128xf32>
    %264 = vector.shape_cast %263 : vector<1x1x16x128xf32> to vector<16x128xf32>
    %265 = vector.shape_cast %8 : vector<128xf32> to vector<1x128xf32>
    %266 = vector.broadcast %265 : vector<1x128xf32> to vector<16x128xf32>
    %267 = arith.mulf %152, %266 : vector<16x128xf32>
    %268 = vector.shape_cast %14 : vector<128xf32> to vector<1x128xf32>
    %269 = vector.broadcast %268 : vector<1x128xf32> to vector<16x128xf32>
    %270 = arith.mulf %208, %269 : vector<16x128xf32>
    %271 = arith.addf %267, %270 : vector<16x128xf32>
    %272 = vector.shape_cast %20 : vector<128xf32> to vector<1x128xf32>
    %273 = vector.broadcast %272 : vector<1x128xf32> to vector<16x128xf32>
    %274 = arith.mulf %264, %273 : vector<16x128xf32>
    %275 = arith.addf %271, %274 : vector<16x128xf32>
    %276 = vector.shape_cast %10 : vector<128xf32> to vector<1x128xf32>
    %277 = vector.broadcast %276 : vector<1x128xf32> to vector<16x128xf32>
    %278 = arith.mulf %152, %277 : vector<16x128xf32>
    %279 = vector.shape_cast %16 : vector<128xf32> to vector<1x128xf32>
    %280 = vector.broadcast %279 : vector<1x128xf32> to vector<16x128xf32>
    %281 = arith.mulf %208, %280 : vector<16x128xf32>
    %282 = arith.addf %278, %281 : vector<16x128xf32>
    %283 = vector.shape_cast %22 : vector<128xf32> to vector<1x128xf32>
    %284 = vector.broadcast %283 : vector<1x128xf32> to vector<16x128xf32>
    %285 = arith.mulf %264, %284 : vector<16x128xf32>
    %286 = arith.addf %282, %285 : vector<16x128xf32>
    %287 = vector.shape_cast %12 : vector<128xf32> to vector<1x128xf32>
    %288 = vector.broadcast %287 : vector<1x128xf32> to vector<16x128xf32>
    %289 = arith.mulf %152, %288 : vector<16x128xf32>
    %290 = vector.shape_cast %18 : vector<128xf32> to vector<1x128xf32>
    %291 = vector.broadcast %290 : vector<1x128xf32> to vector<16x128xf32>
    %292 = arith.mulf %208, %291 : vector<16x128xf32>
    %293 = arith.addf %289, %292 : vector<16x128xf32>
    %294 = vector.shape_cast %24 : vector<128xf32> to vector<1x128xf32>
    %295 = vector.broadcast %294 : vector<1x128xf32> to vector<16x128xf32>
    %296 = arith.mulf %264, %295 : vector<16x128xf32>
    %297 = arith.addf %293, %296 : vector<16x128xf32>
    %c1_i32_75 = arith.constant 1 : i32
    %298 = tpu.dynamic_rotate %275 by %c1_i32_75 dim 0 : vector<16x128xf32>, i32 -> vector<16x128xf32>
    %cst_76 = arith.constant 0.000000e+00 : f32
    %299 = vector.broadcast %cst_76 : f32 to vector<16x128xf32>
    %300 = arith.select %30, %298, %299 : vector<16x128xi1>, vector<16x128xf32>
    %301 = arith.addf %286, %300 : vector<16x128xf32>
    %c15_i32_77 = arith.constant 15 : i32
    %302 = tpu.dynamic_rotate %297 by %c15_i32_77 dim 0 : vector<16x128xf32>, i32 -> vector<16x128xf32>
    %cst_78 = arith.constant 0.000000e+00 : f32
    %303 = vector.broadcast %cst_78 : f32 to vector<16x128xf32>
    %304 = arith.select %32, %302, %303 : vector<16x128xi1>, vector<16x128xf32>
    %305 = arith.addf %301, %304 : vector<16x128xf32>
    %306 = vector.broadcast %25 : vector<1x128xf32> to vector<16x128xf32>
    %307 = arith.addf %305, %306 : vector<16x128xf32>
    %cst_79 = arith.constant 0.000000e+00 : f32
    %308 = vector.broadcast %cst_79 : f32 to vector<16x128xf32>
    %309 = arith.maximumf %307, %308 : vector<16x128xf32>
    %310 = arith.truncf %309 : vector<16x128xf32> to vector<16x128xbf16>
    %cst_80 = arith.constant dense<0.000000e+00> : vector<16x128xf32>
    %311 = tpu.matmul %310, %26, %cst_80 {dimension_numbers = #tpu.dot_dimension_numbers<[1], [0], [0], [1], [0, 0, 1, 1], [], []>} : vector<16x128xbf16>, vector<128x128xbf16>, vector<16x128xf32> -> vector<16x128xf32>
    %312 = vector.broadcast %27 : vector<1x128xf32> to vector<16x128xf32>
    %313 = arith.addf %311, %312 : vector<16x128xf32>
    %cst_81 = arith.constant 0.000000e+00 : f32
    %314 = vector.broadcast %cst_81 : f32 to vector<16x128xf32>
    %315 = arith.maximumf %313, %314 : vector<16x128xf32>
    %c0_82 = arith.constant 0 : index
    %c4_83 = arith.constant 4 : index
    %c0_84 = arith.constant 0 : index
    %c0_85 = arith.constant 0 : index
    %316 = vector.load %arg9[%c0_82, %c4_83, %c0_84, %c0_85] : memref<1x16x16x128xf32, #tpu.memory_space<vmem>>, vector<1x1x16x128xf32>
    %317 = vector.shape_cast %316 : vector<1x1x16x128xf32> to vector<16x128xf32>
    %318 = vector.shape_cast %315 : vector<16x128xf32> to vector<1x1x16x128xf32>
    tpu.vector_store %arg9[%c0_82, %c4_83, %c0_84, %c0_85], %318 {strides = array<i32>} : memref<1x16x16x128xf32, #tpu.memory_space<vmem>>, vector<1x1x16x128xf32>,
    %c0_86 = arith.constant 0 : index
    %c6 = arith.constant 6 : index
    %c0_87 = arith.constant 0 : index
    %c0_88 = arith.constant 0 : index
    %319 = vector.load %arg2[%c0_86, %c6, %c0_87, %c0_88] : memref<1x16x16x128xf32, #tpu.memory_space<vmem>>, vector<1x1x16x128xf32>
    %320 = vector.shape_cast %319 : vector<1x1x16x128xf32> to vector<16x128xf32>
    %321 = vector.shape_cast %8 : vector<128xf32> to vector<1x128xf32>
    %322 = vector.broadcast %321 : vector<1x128xf32> to vector<16x128xf32>
    %323 = arith.mulf %208, %322 : vector<16x128xf32>
    %324 = vector.shape_cast %14 : vector<128xf32> to vector<1x128xf32>
    %325 = vector.broadcast %324 : vector<1x128xf32> to vector<16x128xf32>
    %326 = arith.mulf %264, %325 : vector<16x128xf32>
    %327 = arith.addf %323, %326 : vector<16x128xf32>
    %328 = vector.shape_cast %20 : vector<128xf32> to vector<1x128xf32>
    %329 = vector.broadcast %328 : vector<1x128xf32> to vector<16x128xf32>
    %330 = arith.mulf %320, %329 : vector<16x128xf32>
    %331 = arith.addf %327, %330 : vector<16x128xf32>
    %332 = vector.shape_cast %10 : vector<128xf32> to vector<1x128xf32>
    %333 = vector.broadcast %332 : vector<1x128xf32> to vector<16x128xf32>
    %334 = arith.mulf %208, %333 : vector<16x128xf32>
    %335 = vector.shape_cast %16 : vector<128xf32> to vector<1x128xf32>
    %336 = vector.broadcast %335 : vector<1x128xf32> to vector<16x128xf32>
    %337 = arith.mulf %264, %336 : vector<16x128xf32>
    %338 = arith.addf %334, %337 : vector<16x128xf32>
    %339 = vector.shape_cast %22 : vector<128xf32> to vector<1x128xf32>
    %340 = vector.broadcast %339 : vector<1x128xf32> to vector<16x128xf32>
    %341 = arith.mulf %320, %340 : vector<16x128xf32>
    %342 = arith.addf %338, %341 : vector<16x128xf32>
    %343 = vector.shape_cast %12 : vector<128xf32> to vector<1x128xf32>
    %344 = vector.broadcast %343 : vector<1x128xf32> to vector<16x128xf32>
    %345 = arith.mulf %208, %344 : vector<16x128xf32>
    %346 = vector.shape_cast %18 : vector<128xf32> to vector<1x128xf32>
    %347 = vector.broadcast %346 : vector<1x128xf32> to vector<16x128xf32>
    %348 = arith.mulf %264, %347 : vector<16x128xf32>
    %349 = arith.addf %345, %348 : vector<16x128xf32>
    %350 = vector.shape_cast %24 : vector<128xf32> to vector<1x128xf32>
    %351 = vector.broadcast %350 : vector<1x128xf32> to vector<16x128xf32>
    %352 = arith.mulf %320, %351 : vector<16x128xf32>
    %353 = arith.addf %349, %352 : vector<16x128xf32>
    %c1_i32_89 = arith.constant 1 : i32
    %354 = tpu.dynamic_rotate %331 by %c1_i32_89 dim 0 : vector<16x128xf32>, i32 -> vector<16x128xf32>
    %cst_90 = arith.constant 0.000000e+00 : f32
    %355 = vector.broadcast %cst_90 : f32 to vector<16x128xf32>
    %356 = arith.select %30, %354, %355 : vector<16x128xi1>, vector<16x128xf32>
    %357 = arith.addf %342, %356 : vector<16x128xf32>
    %c15_i32_91 = arith.constant 15 : i32
    %358 = tpu.dynamic_rotate %353 by %c15_i32_91 dim 0 : vector<16x128xf32>, i32 -> vector<16x128xf32>
    %cst_92 = arith.constant 0.000000e+00 : f32
    %359 = vector.broadcast %cst_92 : f32 to vector<16x128xf32>
    %360 = arith.select %32, %358, %359 : vector<16x128xi1>, vector<16x128xf32>
    %361 = arith.addf %357, %360 : vector<16x128xf32>
    %362 = vector.broadcast %25 : vector<1x128xf32> to vector<16x128xf32>
    %363 = arith.addf %361, %362 : vector<16x128xf32>
    %cst_93 = arith.constant 0.000000e+00 : f32
    %364 = vector.broadcast %cst_93 : f32 to vector<16x128xf32>
    %365 = arith.maximumf %363, %364 : vector<16x128xf32>
    %366 = arith.truncf %365 : vector<16x128xf32> to vector<16x128xbf16>
    %cst_94 = arith.constant dense<0.000000e+00> : vector<16x128xf32>
    %367 = tpu.matmul %366, %26, %cst_94 {dimension_numbers = #tpu.dot_dimension_numbers<[1], [0], [0], [1], [0, 0, 1, 1], [], []>} : vector<16x128xbf16>, vector<128x128xbf16>, vector<16x128xf32> -> vector<16x128xf32>
    %368 = vector.broadcast %27 : vector<1x128xf32> to vector<16x128xf32>
    %369 = arith.addf %367, %368 : vector<16x128xf32>
    %cst_95 = arith.constant 0.000000e+00 : f32
    %370 = vector.broadcast %cst_95 : f32 to vector<16x128xf32>
    %371 = arith.maximumf %369, %370 : vector<16x128xf32>
    %c0_96 = arith.constant 0 : index
    %c5_97 = arith.constant 5 : index
    %c0_98 = arith.constant 0 : index
    %c0_99 = arith.constant 0 : index
    %372 = vector.load %arg9[%c0_96, %c5_97, %c0_98, %c0_99] : memref<1x16x16x128xf32, #tpu.memory_space<vmem>>, vector<1x1x16x128xf32>
    %373 = vector.shape_cast %372 : vector<1x1x16x128xf32> to vector<16x128xf32>
    %374 = vector.shape_cast %371 : vector<16x128xf32> to vector<1x1x16x128xf32>
    tpu.vector_store %arg9[%c0_96, %c5_97, %c0_98, %c0_99], %374 {strides = array<i32>} : memref<1x16x16x128xf32, #tpu.memory_space<vmem>>, vector<1x1x16x128xf32>,
    %c0_100 = arith.constant 0 : index
    %c7 = arith.constant 7 : index
    %c0_101 = arith.constant 0 : index
    %c0_102 = arith.constant 0 : index
    %375 = vector.load %arg2[%c0_100, %c7, %c0_101, %c0_102] : memref<1x16x16x128xf32, #tpu.memory_space<vmem>>, vector<1x1x16x128xf32>
    %376 = vector.shape_cast %375 : vector<1x1x16x128xf32> to vector<16x128xf32>
    %377 = vector.shape_cast %8 : vector<128xf32> to vector<1x128xf32>
    %378 = vector.broadcast %377 : vector<1x128xf32> to vector<16x128xf32>
    %379 = arith.mulf %264, %378 : vector<16x128xf32>
    %380 = vector.shape_cast %14 : vector<128xf32> to vector<1x128xf32>
    %381 = vector.broadcast %380 : vector<1x128xf32> to vector<16x128xf32>
    %382 = arith.mulf %320, %381 : vector<16x128xf32>
    %383 = arith.addf %379, %382 : vector<16x128xf32>
    %384 = vector.shape_cast %20 : vector<128xf32> to vector<1x128xf32>
    %385 = vector.broadcast %384 : vector<1x128xf32> to vector<16x128xf32>
    %386 = arith.mulf %376, %385 : vector<16x128xf32>
    %387 = arith.addf %383, %386 : vector<16x128xf32>
    %388 = vector.shape_cast %10 : vector<128xf32> to vector<1x128xf32>
    %389 = vector.broadcast %388 : vector<1x128xf32> to vector<16x128xf32>
    %390 = arith.mulf %264, %389 : vector<16x128xf32>
    %391 = vector.shape_cast %16 : vector<128xf32> to vector<1x128xf32>
    %392 = vector.broadcast %391 : vector<1x128xf32> to vector<16x128xf32>
    %393 = arith.mulf %320, %392 : vector<16x128xf32>
    %394 = arith.addf %390, %393 : vector<16x128xf32>
    %395 = vector.shape_cast %22 : vector<128xf32> to vector<1x128xf32>
    %396 = vector.broadcast %395 : vector<1x128xf32> to vector<16x128xf32>
    %397 = arith.mulf %376, %396 : vector<16x128xf32>
    %398 = arith.addf %394, %397 : vector<16x128xf32>
    %399 = vector.shape_cast %12 : vector<128xf32> to vector<1x128xf32>
    %400 = vector.broadcast %399 : vector<1x128xf32> to vector<16x128xf32>
    %401 = arith.mulf %264, %400 : vector<16x128xf32>
    %402 = vector.shape_cast %18 : vector<128xf32> to vector<1x128xf32>
    %403 = vector.broadcast %402 : vector<1x128xf32> to vector<16x128xf32>
    %404 = arith.mulf %320, %403 : vector<16x128xf32>
    %405 = arith.addf %401, %404 : vector<16x128xf32>
    %406 = vector.shape_cast %24 : vector<128xf32> to vector<1x128xf32>
    %407 = vector.broadcast %406 : vector<1x128xf32> to vector<16x128xf32>
    %408 = arith.mulf %376, %407 : vector<16x128xf32>
    %409 = arith.addf %405, %408 : vector<16x128xf32>
    %c1_i32_103 = arith.constant 1 : i32
    %410 = tpu.dynamic_rotate %387 by %c1_i32_103 dim 0 : vector<16x128xf32>, i32 -> vector<16x128xf32>
    %cst_104 = arith.constant 0.000000e+00 : f32
    %411 = vector.broadcast %cst_104 : f32 to vector<16x128xf32>
    %412 = arith.select %30, %410, %411 : vector<16x128xi1>, vector<16x128xf32>
    %413 = arith.addf %398, %412 : vector<16x128xf32>
    %c15_i32_105 = arith.constant 15 : i32
    %414 = tpu.dynamic_rotate %409 by %c15_i32_105 dim 0 : vector<16x128xf32>, i32 -> vector<16x128xf32>
    %cst_106 = arith.constant 0.000000e+00 : f32
    %415 = vector.broadcast %cst_106 : f32 to vector<16x128xf32>
    %416 = arith.select %32, %414, %415 : vector<16x128xi1>, vector<16x128xf32>
    %417 = arith.addf %413, %416 : vector<16x128xf32>
    %418 = vector.broadcast %25 : vector<1x128xf32> to vector<16x128xf32>
    %419 = arith.addf %417, %418 : vector<16x128xf32>
    %cst_107 = arith.constant 0.000000e+00 : f32
    %420 = vector.broadcast %cst_107 : f32 to vector<16x128xf32>
    %421 = arith.maximumf %419, %420 : vector<16x128xf32>
    %422 = arith.truncf %421 : vector<16x128xf32> to vector<16x128xbf16>
    %cst_108 = arith.constant dense<0.000000e+00> : vector<16x128xf32>
    %423 = tpu.matmul %422, %26, %cst_108 {dimension_numbers = #tpu.dot_dimension_numbers<[1], [0], [0], [1], [0, 0, 1, 1], [], []>} : vector<16x128xbf16>, vector<128x128xbf16>, vector<16x128xf32> -> vector<16x128xf32>
    %424 = vector.broadcast %27 : vector<1x128xf32> to vector<16x128xf32>
    %425 = arith.addf %423, %424 : vector<16x128xf32>
    %cst_109 = arith.constant 0.000000e+00 : f32
    %426 = vector.broadcast %cst_109 : f32 to vector<16x128xf32>
    %427 = arith.maximumf %425, %426 : vector<16x128xf32>
    %c0_110 = arith.constant 0 : index
    %c6_111 = arith.constant 6 : index
    %c0_112 = arith.constant 0 : index
    %c0_113 = arith.constant 0 : index
    %428 = vector.load %arg9[%c0_110, %c6_111, %c0_112, %c0_113] : memref<1x16x16x128xf32, #tpu.memory_space<vmem>>, vector<1x1x16x128xf32>
    %429 = vector.shape_cast %428 : vector<1x1x16x128xf32> to vector<16x128xf32>
    %430 = vector.shape_cast %427 : vector<16x128xf32> to vector<1x1x16x128xf32>
    tpu.vector_store %arg9[%c0_110, %c6_111, %c0_112, %c0_113], %430 {strides = array<i32>} : memref<1x16x16x128xf32, #tpu.memory_space<vmem>>, vector<1x1x16x128xf32>,
    %c0_114 = arith.constant 0 : index
    %c8 = arith.constant 8 : index
    %c0_115 = arith.constant 0 : index
    %c0_116 = arith.constant 0 : index
    %431 = vector.load %arg2[%c0_114, %c8, %c0_115, %c0_116] : memref<1x16x16x128xf32, #tpu.memory_space<vmem>>, vector<1x1x16x128xf32>
    %432 = vector.shape_cast %431 : vector<1x1x16x128xf32> to vector<16x128xf32>
    %433 = vector.shape_cast %8 : vector<128xf32> to vector<1x128xf32>
    %434 = vector.broadcast %433 : vector<1x128xf32> to vector<16x128xf32>
    %435 = arith.mulf %320, %434 : vector<16x128xf32>
    %436 = vector.shape_cast %14 : vector<128xf32> to vector<1x128xf32>
    %437 = vector.broadcast %436 : vector<1x128xf32> to vector<16x128xf32>
    %438 = arith.mulf %376, %437 : vector<16x128xf32>
    %439 = arith.addf %435, %438 : vector<16x128xf32>
    %440 = vector.shape_cast %20 : vector<128xf32> to vector<1x128xf32>
    %441 = vector.broadcast %440 : vector<1x128xf32> to vector<16x128xf32>
    %442 = arith.mulf %432, %441 : vector<16x128xf32>
    %443 = arith.addf %439, %442 : vector<16x128xf32>
    %444 = vector.shape_cast %10 : vector<128xf32> to vector<1x128xf32>
    %445 = vector.broadcast %444 : vector<1x128xf32> to vector<16x128xf32>
    %446 = arith.mulf %320, %445 : vector<16x128xf32>
    %447 = vector.shape_cast %16 : vector<128xf32> to vector<1x128xf32>
    %448 = vector.broadcast %447 : vector<1x128xf32> to vector<16x128xf32>
    %449 = arith.mulf %376, %448 : vector<16x128xf32>
    %450 = arith.addf %446, %449 : vector<16x128xf32>
    %451 = vector.shape_cast %22 : vector<128xf32> to vector<1x128xf32>
    %452 = vector.broadcast %451 : vector<1x128xf32> to vector<16x128xf32>
    %453 = arith.mulf %432, %452 : vector<16x128xf32>
    %454 = arith.addf %450, %453 : vector<16x128xf32>
    %455 = vector.shape_cast %12 : vector<128xf32> to vector<1x128xf32>
    %456 = vector.broadcast %455 : vector<1x128xf32> to vector<16x128xf32>
    %457 = arith.mulf %320, %456 : vector<16x128xf32>
    %458 = vector.shape_cast %18 : vector<128xf32> to vector<1x128xf32>
    %459 = vector.broadcast %458 : vector<1x128xf32> to vector<16x128xf32>
    %460 = arith.mulf %376, %459 : vector<16x128xf32>
    %461 = arith.addf %457, %460 : vector<16x128xf32>
    %462 = vector.shape_cast %24 : vector<128xf32> to vector<1x128xf32>
    %463 = vector.broadcast %462 : vector<1x128xf32> to vector<16x128xf32>
    %464 = arith.mulf %432, %463 : vector<16x128xf32>
    %465 = arith.addf %461, %464 : vector<16x128xf32>
    %c1_i32_117 = arith.constant 1 : i32
    %466 = tpu.dynamic_rotate %443 by %c1_i32_117 dim 0 : vector<16x128xf32>, i32 -> vector<16x128xf32>
    %cst_118 = arith.constant 0.000000e+00 : f32
    %467 = vector.broadcast %cst_118 : f32 to vector<16x128xf32>
    %468 = arith.select %30, %466, %467 : vector<16x128xi1>, vector<16x128xf32>
    %469 = arith.addf %454, %468 : vector<16x128xf32>
    %c15_i32_119 = arith.constant 15 : i32
    %470 = tpu.dynamic_rotate %465 by %c15_i32_119 dim 0 : vector<16x128xf32>, i32 -> vector<16x128xf32>
    %cst_120 = arith.constant 0.000000e+00 : f32
    %471 = vector.broadcast %cst_120 : f32 to vector<16x128xf32>
    %472 = arith.select %32, %470, %471 : vector<16x128xi1>, vector<16x128xf32>
    %473 = arith.addf %469, %472 : vector<16x128xf32>
    %474 = vector.broadcast %25 : vector<1x128xf32> to vector<16x128xf32>
    %475 = arith.addf %473, %474 : vector<16x128xf32>
    %cst_121 = arith.constant 0.000000e+00 : f32
    %476 = vector.broadcast %cst_121 : f32 to vector<16x128xf32>
    %477 = arith.maximumf %475, %476 : vector<16x128xf32>
    %478 = arith.truncf %477 : vector<16x128xf32> to vector<16x128xbf16>
    %cst_122 = arith.constant dense<0.000000e+00> : vector<16x128xf32>
    %479 = tpu.matmul %478, %26, %cst_122 {dimension_numbers = #tpu.dot_dimension_numbers<[1], [0], [0], [1], [0, 0, 1, 1], [], []>} : vector<16x128xbf16>, vector<128x128xbf16>, vector<16x128xf32> -> vector<16x128xf32>
    %480 = vector.broadcast %27 : vector<1x128xf32> to vector<16x128xf32>
    %481 = arith.addf %479, %480 : vector<16x128xf32>
    %cst_123 = arith.constant 0.000000e+00 : f32
    %482 = vector.broadcast %cst_123 : f32 to vector<16x128xf32>
    %483 = arith.maximumf %481, %482 : vector<16x128xf32>
    %c0_124 = arith.constant 0 : index
    %c7_125 = arith.constant 7 : index
    %c0_126 = arith.constant 0 : index
    %c0_127 = arith.constant 0 : index
    %484 = vector.load %arg9[%c0_124, %c7_125, %c0_126, %c0_127] : memref<1x16x16x128xf32, #tpu.memory_space<vmem>>, vector<1x1x16x128xf32>
    %485 = vector.shape_cast %484 : vector<1x1x16x128xf32> to vector<16x128xf32>
    %486 = vector.shape_cast %483 : vector<16x128xf32> to vector<1x1x16x128xf32>
    tpu.vector_store %arg9[%c0_124, %c7_125, %c0_126, %c0_127], %486 {strides = array<i32>} : memref<1x16x16x128xf32, #tpu.memory_space<vmem>>, vector<1x1x16x128xf32>,
    %c0_128 = arith.constant 0 : index
    %c9 = arith.constant 9 : index
    %c0_129 = arith.constant 0 : index
    %c0_130 = arith.constant 0 : index
    %487 = vector.load %arg2[%c0_128, %c9, %c0_129, %c0_130] : memref<1x16x16x128xf32, #tpu.memory_space<vmem>>, vector<1x1x16x128xf32>
    %488 = vector.shape_cast %487 : vector<1x1x16x128xf32> to vector<16x128xf32>
    %489 = vector.shape_cast %8 : vector<128xf32> to vector<1x128xf32>
    %490 = vector.broadcast %489 : vector<1x128xf32> to vector<16x128xf32>
    %491 = arith.mulf %376, %490 : vector<16x128xf32>
    %492 = vector.shape_cast %14 : vector<128xf32> to vector<1x128xf32>
    %493 = vector.broadcast %492 : vector<1x128xf32> to vector<16x128xf32>
    %494 = arith.mulf %432, %493 : vector<16x128xf32>
    %495 = arith.addf %491, %494 : vector<16x128xf32>
    %496 = vector.shape_cast %20 : vector<128xf32> to vector<1x128xf32>
    %497 = vector.broadcast %496 : vector<1x128xf32> to vector<16x128xf32>
    %498 = arith.mulf %488, %497 : vector<16x128xf32>
    %499 = arith.addf %495, %498 : vector<16x128xf32>
    %500 = vector.shape_cast %10 : vector<128xf32> to vector<1x128xf32>
    %501 = vector.broadcast %500 : vector<1x128xf32> to vector<16x128xf32>
    %502 = arith.mulf %376, %501 : vector<16x128xf32>
    %503 = vector.shape_cast %16 : vector<128xf32> to vector<1x128xf32>
    %504 = vector.broadcast %503 : vector<1x128xf32> to vector<16x128xf32>
    %505 = arith.mulf %432, %504 : vector<16x128xf32>
    %506 = arith.addf %502, %505 : vector<16x128xf32>
    %507 = vector.shape_cast %22 : vector<128xf32> to vector<1x128xf32>
    %508 = vector.broadcast %507 : vector<1x128xf32> to vector<16x128xf32>
    %509 = arith.mulf %488, %508 : vector<16x128xf32>
    %510 = arith.addf %506, %509 : vector<16x128xf32>
    %511 = vector.shape_cast %12 : vector<128xf32> to vector<1x128xf32>
    %512 = vector.broadcast %511 : vector<1x128xf32> to vector<16x128xf32>
    %513 = arith.mulf %376, %512 : vector<16x128xf32>
    %514 = vector.shape_cast %18 : vector<128xf32> to vector<1x128xf32>
    %515 = vector.broadcast %514 : vector<1x128xf32> to vector<16x128xf32>
    %516 = arith.mulf %432, %515 : vector<16x128xf32>
    %517 = arith.addf %513, %516 : vector<16x128xf32>
    %518 = vector.shape_cast %24 : vector<128xf32> to vector<1x128xf32>
    %519 = vector.broadcast %518 : vector<1x128xf32> to vector<16x128xf32>
    %520 = arith.mulf %488, %519 : vector<16x128xf32>
    %521 = arith.addf %517, %520 : vector<16x128xf32>
    %c1_i32_131 = arith.constant 1 : i32
    %522 = tpu.dynamic_rotate %499 by %c1_i32_131 dim 0 : vector<16x128xf32>, i32 -> vector<16x128xf32>
    %cst_132 = arith.constant 0.000000e+00 : f32
    %523 = vector.broadcast %cst_132 : f32 to vector<16x128xf32>
    %524 = arith.select %30, %522, %523 : vector<16x128xi1>, vector<16x128xf32>
    %525 = arith.addf %510, %524 : vector<16x128xf32>
    %c15_i32_133 = arith.constant 15 : i32
    %526 = tpu.dynamic_rotate %521 by %c15_i32_133 dim 0 : vector<16x128xf32>, i32 -> vector<16x128xf32>
    %cst_134 = arith.constant 0.000000e+00 : f32
    %527 = vector.broadcast %cst_134 : f32 to vector<16x128xf32>
    %528 = arith.select %32, %526, %527 : vector<16x128xi1>, vector<16x128xf32>
    %529 = arith.addf %525, %528 : vector<16x128xf32>
    %530 = vector.broadcast %25 : vector<1x128xf32> to vector<16x128xf32>
    %531 = arith.addf %529, %530 : vector<16x128xf32>
    %cst_135 = arith.constant 0.000000e+00 : f32
    %532 = vector.broadcast %cst_135 : f32 to vector<16x128xf32>
    %533 = arith.maximumf %531, %532 : vector<16x128xf32>
    %534 = arith.truncf %533 : vector<16x128xf32> to vector<16x128xbf16>
    %cst_136 = arith.constant dense<0.000000e+00> : vector<16x128xf32>
    %535 = tpu.matmul %534, %26, %cst_136 {dimension_numbers = #tpu.dot_dimension_numbers<[1], [0], [0], [1], [0, 0, 1, 1], [], []>} : vector<16x128xbf16>, vector<128x128xbf16>, vector<16x128xf32> -> vector<16x128xf32>
    %536 = vector.broadcast %27 : vector<1x128xf32> to vector<16x128xf32>
    %537 = arith.addf %535, %536 : vector<16x128xf32>
    %cst_137 = arith.constant 0.000000e+00 : f32
    %538 = vector.broadcast %cst_137 : f32 to vector<16x128xf32>
    %539 = arith.maximumf %537, %538 : vector<16x128xf32>
    %c0_138 = arith.constant 0 : index
    %c8_139 = arith.constant 8 : index
    %c0_140 = arith.constant 0 : index
    %c0_141 = arith.constant 0 : index
    %540 = vector.load %arg9[%c0_138, %c8_139, %c0_140, %c0_141] : memref<1x16x16x128xf32, #tpu.memory_space<vmem>>, vector<1x1x16x128xf32>
    %541 = vector.shape_cast %540 : vector<1x1x16x128xf32> to vector<16x128xf32>
    %542 = vector.shape_cast %539 : vector<16x128xf32> to vector<1x1x16x128xf32>
    tpu.vector_store %arg9[%c0_138, %c8_139, %c0_140, %c0_141], %542 {strides = array<i32>} : memref<1x16x16x128xf32, #tpu.memory_space<vmem>>, vector<1x1x16x128xf32>,
    %c0_142 = arith.constant 0 : index
    %c10 = arith.constant 10 : index
    %c0_143 = arith.constant 0 : index
    %c0_144 = arith.constant 0 : index
    %543 = vector.load %arg2[%c0_142, %c10, %c0_143, %c0_144] : memref<1x16x16x128xf32, #tpu.memory_space<vmem>>, vector<1x1x16x128xf32>
    %544 = vector.shape_cast %543 : vector<1x1x16x128xf32> to vector<16x128xf32>
    %545 = vector.shape_cast %8 : vector<128xf32> to vector<1x128xf32>
    %546 = vector.broadcast %545 : vector<1x128xf32> to vector<16x128xf32>
    %547 = arith.mulf %432, %546 : vector<16x128xf32>
    %548 = vector.shape_cast %14 : vector<128xf32> to vector<1x128xf32>
    %549 = vector.broadcast %548 : vector<1x128xf32> to vector<16x128xf32>
    %550 = arith.mulf %488, %549 : vector<16x128xf32>
    %551 = arith.addf %547, %550 : vector<16x128xf32>
    %552 = vector.shape_cast %20 : vector<128xf32> to vector<1x128xf32>
    %553 = vector.broadcast %552 : vector<1x128xf32> to vector<16x128xf32>
    %554 = arith.mulf %544, %553 : vector<16x128xf32>
    %555 = arith.addf %551, %554 : vector<16x128xf32>
    %556 = vector.shape_cast %10 : vector<128xf32> to vector<1x128xf32>
    %557 = vector.broadcast %556 : vector<1x128xf32> to vector<16x128xf32>
    %558 = arith.mulf %432, %557 : vector<16x128xf32>
    %559 = vector.shape_cast %16 : vector<128xf32> to vector<1x128xf32>
    %560 = vector.broadcast %559 : vector<1x128xf32> to vector<16x128xf32>
    %561 = arith.mulf %488, %560 : vector<16x128xf32>
    %562 = arith.addf %558, %561 : vector<16x128xf32>
    %563 = vector.shape_cast %22 : vector<128xf32> to vector<1x128xf32>
    %564 = vector.broadcast %563 : vector<1x128xf32> to vector<16x128xf32>
    %565 = arith.mulf %544, %564 : vector<16x128xf32>
    %566 = arith.addf %562, %565 : vector<16x128xf32>
    %567 = vector.shape_cast %12 : vector<128xf32> to vector<1x128xf32>
    %568 = vector.broadcast %567 : vector<1x128xf32> to vector<16x128xf32>
    %569 = arith.mulf %432, %568 : vector<16x128xf32>
    %570 = vector.shape_cast %18 : vector<128xf32> to vector<1x128xf32>
    %571 = vector.broadcast %570 : vector<1x128xf32> to vector<16x128xf32>
    %572 = arith.mulf %488, %571 : vector<16x128xf32>
    %573 = arith.addf %569, %572 : vector<16x128xf32>
    %574 = vector.shape_cast %24 : vector<128xf32> to vector<1x128xf32>
    %575 = vector.broadcast %574 : vector<1x128xf32> to vector<16x128xf32>
    %576 = arith.mulf %544, %575 : vector<16x128xf32>
    %577 = arith.addf %573, %576 : vector<16x128xf32>
    %c1_i32_145 = arith.constant 1 : i32
    %578 = tpu.dynamic_rotate %555 by %c1_i32_145 dim 0 : vector<16x128xf32>, i32 -> vector<16x128xf32>
    %cst_146 = arith.constant 0.000000e+00 : f32
    %579 = vector.broadcast %cst_146 : f32 to vector<16x128xf32>
    %580 = arith.select %30, %578, %579 : vector<16x128xi1>, vector<16x128xf32>
    %581 = arith.addf %566, %580 : vector<16x128xf32>
    %c15_i32_147 = arith.constant 15 : i32
    %582 = tpu.dynamic_rotate %577 by %c15_i32_147 dim 0 : vector<16x128xf32>, i32 -> vector<16x128xf32>
    %cst_148 = arith.constant 0.000000e+00 : f32
    %583 = vector.broadcast %cst_148 : f32 to vector<16x128xf32>
    %584 = arith.select %32, %582, %583 : vector<16x128xi1>, vector<16x128xf32>
    %585 = arith.addf %581, %584 : vector<16x128xf32>
    %586 = vector.broadcast %25 : vector<1x128xf32> to vector<16x128xf32>
    %587 = arith.addf %585, %586 : vector<16x128xf32>
    %cst_149 = arith.constant 0.000000e+00 : f32
    %588 = vector.broadcast %cst_149 : f32 to vector<16x128xf32>
    %589 = arith.maximumf %587, %588 : vector<16x128xf32>
    %590 = arith.truncf %589 : vector<16x128xf32> to vector<16x128xbf16>
    %cst_150 = arith.constant dense<0.000000e+00> : vector<16x128xf32>
    %591 = tpu.matmul %590, %26, %cst_150 {dimension_numbers = #tpu.dot_dimension_numbers<[1], [0], [0], [1], [0, 0, 1, 1], [], []>} : vector<16x128xbf16>, vector<128x128xbf16>, vector<16x128xf32> -> vector<16x128xf32>
    %592 = vector.broadcast %27 : vector<1x128xf32> to vector<16x128xf32>
    %593 = arith.addf %591, %592 : vector<16x128xf32>
    %cst_151 = arith.constant 0.000000e+00 : f32
    %594 = vector.broadcast %cst_151 : f32 to vector<16x128xf32>
    %595 = arith.maximumf %593, %594 : vector<16x128xf32>
    %c0_152 = arith.constant 0 : index
    %c9_153 = arith.constant 9 : index
    %c0_154 = arith.constant 0 : index
    %c0_155 = arith.constant 0 : index
    %596 = vector.load %arg9[%c0_152, %c9_153, %c0_154, %c0_155] : memref<1x16x16x128xf32, #tpu.memory_space<vmem>>, vector<1x1x16x128xf32>
    %597 = vector.shape_cast %596 : vector<1x1x16x128xf32> to vector<16x128xf32>
    %598 = vector.shape_cast %595 : vector<16x128xf32> to vector<1x1x16x128xf32>
    tpu.vector_store %arg9[%c0_152, %c9_153, %c0_154, %c0_155], %598 {strides = array<i32>} : memref<1x16x16x128xf32, #tpu.memory_space<vmem>>, vector<1x1x16x128xf32>,
    %c0_156 = arith.constant 0 : index
    %c11 = arith.constant 11 : index
    %c0_157 = arith.constant 0 : index
    %c0_158 = arith.constant 0 : index
    %599 = vector.load %arg2[%c0_156, %c11, %c0_157, %c0_158] : memref<1x16x16x128xf32, #tpu.memory_space<vmem>>, vector<1x1x16x128xf32>
    %600 = vector.shape_cast %599 : vector<1x1x16x128xf32> to vector<16x128xf32>
    %601 = vector.shape_cast %8 : vector<128xf32> to vector<1x128xf32>
    %602 = vector.broadcast %601 : vector<1x128xf32> to vector<16x128xf32>
    %603 = arith.mulf %488, %602 : vector<16x128xf32>
    %604 = vector.shape_cast %14 : vector<128xf32> to vector<1x128xf32>
    %605 = vector.broadcast %604 : vector<1x128xf32> to vector<16x128xf32>
    %606 = arith.mulf %544, %605 : vector<16x128xf32>
    %607 = arith.addf %603, %606 : vector<16x128xf32>
    %608 = vector.shape_cast %20 : vector<128xf32> to vector<1x128xf32>
    %609 = vector.broadcast %608 : vector<1x128xf32> to vector<16x128xf32>
    %610 = arith.mulf %600, %609 : vector<16x128xf32>
    %611 = arith.addf %607, %610 : vector<16x128xf32>
    %612 = vector.shape_cast %10 : vector<128xf32> to vector<1x128xf32>
    %613 = vector.broadcast %612 : vector<1x128xf32> to vector<16x128xf32>
    %614 = arith.mulf %488, %613 : vector<16x128xf32>
    %615 = vector.shape_cast %16 : vector<128xf32> to vector<1x128xf32>
    %616 = vector.broadcast %615 : vector<1x128xf32> to vector<16x128xf32>
    %617 = arith.mulf %544, %616 : vector<16x128xf32>
    %618 = arith.addf %614, %617 : vector<16x128xf32>
    %619 = vector.shape_cast %22 : vector<128xf32> to vector<1x128xf32>
    %620 = vector.broadcast %619 : vector<1x128xf32> to vector<16x128xf32>
    %621 = arith.mulf %600, %620 : vector<16x128xf32>
    %622 = arith.addf %618, %621 : vector<16x128xf32>
    %623 = vector.shape_cast %12 : vector<128xf32> to vector<1x128xf32>
    %624 = vector.broadcast %623 : vector<1x128xf32> to vector<16x128xf32>
    %625 = arith.mulf %488, %624 : vector<16x128xf32>
    %626 = vector.shape_cast %18 : vector<128xf32> to vector<1x128xf32>
    %627 = vector.broadcast %626 : vector<1x128xf32> to vector<16x128xf32>
    %628 = arith.mulf %544, %627 : vector<16x128xf32>
    %629 = arith.addf %625, %628 : vector<16x128xf32>
    %630 = vector.shape_cast %24 : vector<128xf32> to vector<1x128xf32>
    %631 = vector.broadcast %630 : vector<1x128xf32> to vector<16x128xf32>
    %632 = arith.mulf %600, %631 : vector<16x128xf32>
    %633 = arith.addf %629, %632 : vector<16x128xf32>
    %c1_i32_159 = arith.constant 1 : i32
    %634 = tpu.dynamic_rotate %611 by %c1_i32_159 dim 0 : vector<16x128xf32>, i32 -> vector<16x128xf32>
    %cst_160 = arith.constant 0.000000e+00 : f32
    %635 = vector.broadcast %cst_160 : f32 to vector<16x128xf32>
    %636 = arith.select %30, %634, %635 : vector<16x128xi1>, vector<16x128xf32>
    %637 = arith.addf %622, %636 : vector<16x128xf32>
    %c15_i32_161 = arith.constant 15 : i32
    %638 = tpu.dynamic_rotate %633 by %c15_i32_161 dim 0 : vector<16x128xf32>, i32 -> vector<16x128xf32>
    %cst_162 = arith.constant 0.000000e+00 : f32
    %639 = vector.broadcast %cst_162 : f32 to vector<16x128xf32>
    %640 = arith.select %32, %638, %639 : vector<16x128xi1>, vector<16x128xf32>
    %641 = arith.addf %637, %640 : vector<16x128xf32>
    %642 = vector.broadcast %25 : vector<1x128xf32> to vector<16x128xf32>
    %643 = arith.addf %641, %642 : vector<16x128xf32>
    %cst_163 = arith.constant 0.000000e+00 : f32
    %644 = vector.broadcast %cst_163 : f32 to vector<16x128xf32>
    %645 = arith.maximumf %643, %644 : vector<16x128xf32>
    %646 = arith.truncf %645 : vector<16x128xf32> to vector<16x128xbf16>
    %cst_164 = arith.constant dense<0.000000e+00> : vector<16x128xf32>
    %647 = tpu.matmul %646, %26, %cst_164 {dimension_numbers = #tpu.dot_dimension_numbers<[1], [0], [0], [1], [0, 0, 1, 1], [], []>} : vector<16x128xbf16>, vector<128x128xbf16>, vector<16x128xf32> -> vector<16x128xf32>
    %648 = vector.broadcast %27 : vector<1x128xf32> to vector<16x128xf32>
    %649 = arith.addf %647, %648 : vector<16x128xf32>
    %cst_165 = arith.constant 0.000000e+00 : f32
    %650 = vector.broadcast %cst_165 : f32 to vector<16x128xf32>
    %651 = arith.maximumf %649, %650 : vector<16x128xf32>
    %c0_166 = arith.constant 0 : index
    %c10_167 = arith.constant 10 : index
    %c0_168 = arith.constant 0 : index
    %c0_169 = arith.constant 0 : index
    %652 = vector.load %arg9[%c0_166, %c10_167, %c0_168, %c0_169] : memref<1x16x16x128xf32, #tpu.memory_space<vmem>>, vector<1x1x16x128xf32>
    %653 = vector.shape_cast %652 : vector<1x1x16x128xf32> to vector<16x128xf32>
    %654 = vector.shape_cast %651 : vector<16x128xf32> to vector<1x1x16x128xf32>
    tpu.vector_store %arg9[%c0_166, %c10_167, %c0_168, %c0_169], %654 {strides = array<i32>} : memref<1x16x16x128xf32, #tpu.memory_space<vmem>>, vector<1x1x16x128xf32>,
    %c0_170 = arith.constant 0 : index
    %c12 = arith.constant 12 : index
    %c0_171 = arith.constant 0 : index
    %c0_172 = arith.constant 0 : index
    %655 = vector.load %arg2[%c0_170, %c12, %c0_171, %c0_172] : memref<1x16x16x128xf32, #tpu.memory_space<vmem>>, vector<1x1x16x128xf32>
    %656 = vector.shape_cast %655 : vector<1x1x16x128xf32> to vector<16x128xf32>
    %657 = vector.shape_cast %8 : vector<128xf32> to vector<1x128xf32>
    %658 = vector.broadcast %657 : vector<1x128xf32> to vector<16x128xf32>
    %659 = arith.mulf %544, %658 : vector<16x128xf32>
    %660 = vector.shape_cast %14 : vector<128xf32> to vector<1x128xf32>
    %661 = vector.broadcast %660 : vector<1x128xf32> to vector<16x128xf32>
    %662 = arith.mulf %600, %661 : vector<16x128xf32>
    %663 = arith.addf %659, %662 : vector<16x128xf32>
    %664 = vector.shape_cast %20 : vector<128xf32> to vector<1x128xf32>
    %665 = vector.broadcast %664 : vector<1x128xf32> to vector<16x128xf32>
    %666 = arith.mulf %656, %665 : vector<16x128xf32>
    %667 = arith.addf %663, %666 : vector<16x128xf32>
    %668 = vector.shape_cast %10 : vector<128xf32> to vector<1x128xf32>
    %669 = vector.broadcast %668 : vector<1x128xf32> to vector<16x128xf32>
    %670 = arith.mulf %544, %669 : vector<16x128xf32>
    %671 = vector.shape_cast %16 : vector<128xf32> to vector<1x128xf32>
    %672 = vector.broadcast %671 : vector<1x128xf32> to vector<16x128xf32>
    %673 = arith.mulf %600, %672 : vector<16x128xf32>
    %674 = arith.addf %670, %673 : vector<16x128xf32>
    %675 = vector.shape_cast %22 : vector<128xf32> to vector<1x128xf32>
    %676 = vector.broadcast %675 : vector<1x128xf32> to vector<16x128xf32>
    %677 = arith.mulf %656, %676 : vector<16x128xf32>
    %678 = arith.addf %674, %677 : vector<16x128xf32>
    %679 = vector.shape_cast %12 : vector<128xf32> to vector<1x128xf32>
    %680 = vector.broadcast %679 : vector<1x128xf32> to vector<16x128xf32>
    %681 = arith.mulf %544, %680 : vector<16x128xf32>
    %682 = vector.shape_cast %18 : vector<128xf32> to vector<1x128xf32>
    %683 = vector.broadcast %682 : vector<1x128xf32> to vector<16x128xf32>
    %684 = arith.mulf %600, %683 : vector<16x128xf32>
    %685 = arith.addf %681, %684 : vector<16x128xf32>
    %686 = vector.shape_cast %24 : vector<128xf32> to vector<1x128xf32>
    %687 = vector.broadcast %686 : vector<1x128xf32> to vector<16x128xf32>
    %688 = arith.mulf %656, %687 : vector<16x128xf32>
    %689 = arith.addf %685, %688 : vector<16x128xf32>
    %c1_i32_173 = arith.constant 1 : i32
    %690 = tpu.dynamic_rotate %667 by %c1_i32_173 dim 0 : vector<16x128xf32>, i32 -> vector<16x128xf32>
    %cst_174 = arith.constant 0.000000e+00 : f32
    %691 = vector.broadcast %cst_174 : f32 to vector<16x128xf32>
    %692 = arith.select %30, %690, %691 : vector<16x128xi1>, vector<16x128xf32>
    %693 = arith.addf %678, %692 : vector<16x128xf32>
    %c15_i32_175 = arith.constant 15 : i32
    %694 = tpu.dynamic_rotate %689 by %c15_i32_175 dim 0 : vector<16x128xf32>, i32 -> vector<16x128xf32>
    %cst_176 = arith.constant 0.000000e+00 : f32
    %695 = vector.broadcast %cst_176 : f32 to vector<16x128xf32>
    %696 = arith.select %32, %694, %695 : vector<16x128xi1>, vector<16x128xf32>
    %697 = arith.addf %693, %696 : vector<16x128xf32>
    %698 = vector.broadcast %25 : vector<1x128xf32> to vector<16x128xf32>
    %699 = arith.addf %697, %698 : vector<16x128xf32>
    %cst_177 = arith.constant 0.000000e+00 : f32
    %700 = vector.broadcast %cst_177 : f32 to vector<16x128xf32>
    %701 = arith.maximumf %699, %700 : vector<16x128xf32>
    %702 = arith.truncf %701 : vector<16x128xf32> to vector<16x128xbf16>
    %cst_178 = arith.constant dense<0.000000e+00> : vector<16x128xf32>
    %703 = tpu.matmul %702, %26, %cst_178 {dimension_numbers = #tpu.dot_dimension_numbers<[1], [0], [0], [1], [0, 0, 1, 1], [], []>} : vector<16x128xbf16>, vector<128x128xbf16>, vector<16x128xf32> -> vector<16x128xf32>
    %704 = vector.broadcast %27 : vector<1x128xf32> to vector<16x128xf32>
    %705 = arith.addf %703, %704 : vector<16x128xf32>
    %cst_179 = arith.constant 0.000000e+00 : f32
    %706 = vector.broadcast %cst_179 : f32 to vector<16x128xf32>
    %707 = arith.maximumf %705, %706 : vector<16x128xf32>
    %c0_180 = arith.constant 0 : index
    %c11_181 = arith.constant 11 : index
    %c0_182 = arith.constant 0 : index
    %c0_183 = arith.constant 0 : index
    %708 = vector.load %arg9[%c0_180, %c11_181, %c0_182, %c0_183] : memref<1x16x16x128xf32, #tpu.memory_space<vmem>>, vector<1x1x16x128xf32>
    %709 = vector.shape_cast %708 : vector<1x1x16x128xf32> to vector<16x128xf32>
    %710 = vector.shape_cast %707 : vector<16x128xf32> to vector<1x1x16x128xf32>
    tpu.vector_store %arg9[%c0_180, %c11_181, %c0_182, %c0_183], %710 {strides = array<i32>} : memref<1x16x16x128xf32, #tpu.memory_space<vmem>>, vector<1x1x16x128xf32>,
    %c0_184 = arith.constant 0 : index
    %c13 = arith.constant 13 : index
    %c0_185 = arith.constant 0 : index
    %c0_186 = arith.constant 0 : index
    %711 = vector.load %arg2[%c0_184, %c13, %c0_185, %c0_186] : memref<1x16x16x128xf32, #tpu.memory_space<vmem>>, vector<1x1x16x128xf32>
    %712 = vector.shape_cast %711 : vector<1x1x16x128xf32> to vector<16x128xf32>
    %713 = vector.shape_cast %8 : vector<128xf32> to vector<1x128xf32>
    %714 = vector.broadcast %713 : vector<1x128xf32> to vector<16x128xf32>
    %715 = arith.mulf %600, %714 : vector<16x128xf32>
    %716 = vector.shape_cast %14 : vector<128xf32> to vector<1x128xf32>
    %717 = vector.broadcast %716 : vector<1x128xf32> to vector<16x128xf32>
    %718 = arith.mulf %656, %717 : vector<16x128xf32>
    %719 = arith.addf %715, %718 : vector<16x128xf32>
    %720 = vector.shape_cast %20 : vector<128xf32> to vector<1x128xf32>
    %721 = vector.broadcast %720 : vector<1x128xf32> to vector<16x128xf32>
    %722 = arith.mulf %712, %721 : vector<16x128xf32>
    %723 = arith.addf %719, %722 : vector<16x128xf32>
    %724 = vector.shape_cast %10 : vector<128xf32> to vector<1x128xf32>
    %725 = vector.broadcast %724 : vector<1x128xf32> to vector<16x128xf32>
    %726 = arith.mulf %600, %725 : vector<16x128xf32>
    %727 = vector.shape_cast %16 : vector<128xf32> to vector<1x128xf32>
    %728 = vector.broadcast %727 : vector<1x128xf32> to vector<16x128xf32>
    %729 = arith.mulf %656, %728 : vector<16x128xf32>
    %730 = arith.addf %726, %729 : vector<16x128xf32>
    %731 = vector.shape_cast %22 : vector<128xf32> to vector<1x128xf32>
    %732 = vector.broadcast %731 : vector<1x128xf32> to vector<16x128xf32>
    %733 = arith.mulf %712, %732 : vector<16x128xf32>
    %734 = arith.addf %730, %733 : vector<16x128xf32>
    %735 = vector.shape_cast %12 : vector<128xf32> to vector<1x128xf32>
    %736 = vector.broadcast %735 : vector<1x128xf32> to vector<16x128xf32>
    %737 = arith.mulf %600, %736 : vector<16x128xf32>
    %738 = vector.shape_cast %18 : vector<128xf32> to vector<1x128xf32>
    %739 = vector.broadcast %738 : vector<1x128xf32> to vector<16x128xf32>
    %740 = arith.mulf %656, %739 : vector<16x128xf32>
    %741 = arith.addf %737, %740 : vector<16x128xf32>
    %742 = vector.shape_cast %24 : vector<128xf32> to vector<1x128xf32>
    %743 = vector.broadcast %742 : vector<1x128xf32> to vector<16x128xf32>
    %744 = arith.mulf %712, %743 : vector<16x128xf32>
    %745 = arith.addf %741, %744 : vector<16x128xf32>
    %c1_i32_187 = arith.constant 1 : i32
    %746 = tpu.dynamic_rotate %723 by %c1_i32_187 dim 0 : vector<16x128xf32>, i32 -> vector<16x128xf32>
    %cst_188 = arith.constant 0.000000e+00 : f32
    %747 = vector.broadcast %cst_188 : f32 to vector<16x128xf32>
    %748 = arith.select %30, %746, %747 : vector<16x128xi1>, vector<16x128xf32>
    %749 = arith.addf %734, %748 : vector<16x128xf32>
    %c15_i32_189 = arith.constant 15 : i32
    %750 = tpu.dynamic_rotate %745 by %c15_i32_189 dim 0 : vector<16x128xf32>, i32 -> vector<16x128xf32>
    %cst_190 = arith.constant 0.000000e+00 : f32
    %751 = vector.broadcast %cst_190 : f32 to vector<16x128xf32>
    %752 = arith.select %32, %750, %751 : vector<16x128xi1>, vector<16x128xf32>
    %753 = arith.addf %749, %752 : vector<16x128xf32>
    %754 = vector.broadcast %25 : vector<1x128xf32> to vector<16x128xf32>
    %755 = arith.addf %753, %754 : vector<16x128xf32>
    %cst_191 = arith.constant 0.000000e+00 : f32
    %756 = vector.broadcast %cst_191 : f32 to vector<16x128xf32>
    %757 = arith.maximumf %755, %756 : vector<16x128xf32>
    %758 = arith.truncf %757 : vector<16x128xf32> to vector<16x128xbf16>
    %cst_192 = arith.constant dense<0.000000e+00> : vector<16x128xf32>
    %759 = tpu.matmul %758, %26, %cst_192 {dimension_numbers = #tpu.dot_dimension_numbers<[1], [0], [0], [1], [0, 0, 1, 1], [], []>} : vector<16x128xbf16>, vector<128x128xbf16>, vector<16x128xf32> -> vector<16x128xf32>
    %760 = vector.broadcast %27 : vector<1x128xf32> to vector<16x128xf32>
    %761 = arith.addf %759, %760 : vector<16x128xf32>
    %cst_193 = arith.constant 0.000000e+00 : f32
    %762 = vector.broadcast %cst_193 : f32 to vector<16x128xf32>
    %763 = arith.maximumf %761, %762 : vector<16x128xf32>
    %c0_194 = arith.constant 0 : index
    %c12_195 = arith.constant 12 : index
    %c0_196 = arith.constant 0 : index
    %c0_197 = arith.constant 0 : index
    %764 = vector.load %arg9[%c0_194, %c12_195, %c0_196, %c0_197] : memref<1x16x16x128xf32, #tpu.memory_space<vmem>>, vector<1x1x16x128xf32>
    %765 = vector.shape_cast %764 : vector<1x1x16x128xf32> to vector<16x128xf32>
    %766 = vector.shape_cast %763 : vector<16x128xf32> to vector<1x1x16x128xf32>
    tpu.vector_store %arg9[%c0_194, %c12_195, %c0_196, %c0_197], %766 {strides = array<i32>} : memref<1x16x16x128xf32, #tpu.memory_space<vmem>>, vector<1x1x16x128xf32>,
    %c0_198 = arith.constant 0 : index
    %c14 = arith.constant 14 : index
    %c0_199 = arith.constant 0 : index
    %c0_200 = arith.constant 0 : index
    %767 = vector.load %arg2[%c0_198, %c14, %c0_199, %c0_200] : memref<1x16x16x128xf32, #tpu.memory_space<vmem>>, vector<1x1x16x128xf32>
    %768 = vector.shape_cast %767 : vector<1x1x16x128xf32> to vector<16x128xf32>
    %769 = vector.shape_cast %8 : vector<128xf32> to vector<1x128xf32>
    %770 = vector.broadcast %769 : vector<1x128xf32> to vector<16x128xf32>
    %771 = arith.mulf %656, %770 : vector<16x128xf32>
    %772 = vector.shape_cast %14 : vector<128xf32> to vector<1x128xf32>
    %773 = vector.broadcast %772 : vector<1x128xf32> to vector<16x128xf32>
    %774 = arith.mulf %712, %773 : vector<16x128xf32>
    %775 = arith.addf %771, %774 : vector<16x128xf32>
    %776 = vector.shape_cast %20 : vector<128xf32> to vector<1x128xf32>
    %777 = vector.broadcast %776 : vector<1x128xf32> to vector<16x128xf32>
    %778 = arith.mulf %768, %777 : vector<16x128xf32>
    %779 = arith.addf %775, %778 : vector<16x128xf32>
    %780 = vector.shape_cast %10 : vector<128xf32> to vector<1x128xf32>
    %781 = vector.broadcast %780 : vector<1x128xf32> to vector<16x128xf32>
    %782 = arith.mulf %656, %781 : vector<16x128xf32>
    %783 = vector.shape_cast %16 : vector<128xf32> to vector<1x128xf32>
    %784 = vector.broadcast %783 : vector<1x128xf32> to vector<16x128xf32>
    %785 = arith.mulf %712, %784 : vector<16x128xf32>
    %786 = arith.addf %782, %785 : vector<16x128xf32>
    %787 = vector.shape_cast %22 : vector<128xf32> to vector<1x128xf32>
    %788 = vector.broadcast %787 : vector<1x128xf32> to vector<16x128xf32>
    %789 = arith.mulf %768, %788 : vector<16x128xf32>
    %790 = arith.addf %786, %789 : vector<16x128xf32>
    %791 = vector.shape_cast %12 : vector<128xf32> to vector<1x128xf32>
    %792 = vector.broadcast %791 : vector<1x128xf32> to vector<16x128xf32>
    %793 = arith.mulf %656, %792 : vector<16x128xf32>
    %794 = vector.shape_cast %18 : vector<128xf32> to vector<1x128xf32>
    %795 = vector.broadcast %794 : vector<1x128xf32> to vector<16x128xf32>
    %796 = arith.mulf %712, %795 : vector<16x128xf32>
    %797 = arith.addf %793, %796 : vector<16x128xf32>
    %798 = vector.shape_cast %24 : vector<128xf32> to vector<1x128xf32>
    %799 = vector.broadcast %798 : vector<1x128xf32> to vector<16x128xf32>
    %800 = arith.mulf %768, %799 : vector<16x128xf32>
    %801 = arith.addf %797, %800 : vector<16x128xf32>
    %c1_i32_201 = arith.constant 1 : i32
    %802 = tpu.dynamic_rotate %779 by %c1_i32_201 dim 0 : vector<16x128xf32>, i32 -> vector<16x128xf32>
    %cst_202 = arith.constant 0.000000e+00 : f32
    %803 = vector.broadcast %cst_202 : f32 to vector<16x128xf32>
    %804 = arith.select %30, %802, %803 : vector<16x128xi1>, vector<16x128xf32>
    %805 = arith.addf %790, %804 : vector<16x128xf32>
    %c15_i32_203 = arith.constant 15 : i32
    %806 = tpu.dynamic_rotate %801 by %c15_i32_203 dim 0 : vector<16x128xf32>, i32 -> vector<16x128xf32>
    %cst_204 = arith.constant 0.000000e+00 : f32
    %807 = vector.broadcast %cst_204 : f32 to vector<16x128xf32>
    %808 = arith.select %32, %806, %807 : vector<16x128xi1>, vector<16x128xf32>
    %809 = arith.addf %805, %808 : vector<16x128xf32>
    %810 = vector.broadcast %25 : vector<1x128xf32> to vector<16x128xf32>
    %811 = arith.addf %809, %810 : vector<16x128xf32>
    %cst_205 = arith.constant 0.000000e+00 : f32
    %812 = vector.broadcast %cst_205 : f32 to vector<16x128xf32>
    %813 = arith.maximumf %811, %812 : vector<16x128xf32>
    %814 = arith.truncf %813 : vector<16x128xf32> to vector<16x128xbf16>
    %cst_206 = arith.constant dense<0.000000e+00> : vector<16x128xf32>
    %815 = tpu.matmul %814, %26, %cst_206 {dimension_numbers = #tpu.dot_dimension_numbers<[1], [0], [0], [1], [0, 0, 1, 1], [], []>} : vector<16x128xbf16>, vector<128x128xbf16>, vector<16x128xf32> -> vector<16x128xf32>
    %816 = vector.broadcast %27 : vector<1x128xf32> to vector<16x128xf32>
    %817 = arith.addf %815, %816 : vector<16x128xf32>
    %cst_207 = arith.constant 0.000000e+00 : f32
    %818 = vector.broadcast %cst_207 : f32 to vector<16x128xf32>
    %819 = arith.maximumf %817, %818 : vector<16x128xf32>
    %c0_208 = arith.constant 0 : index
    %c13_209 = arith.constant 13 : index
    %c0_210 = arith.constant 0 : index
    %c0_211 = arith.constant 0 : index
    %820 = vector.load %arg9[%c0_208, %c13_209, %c0_210, %c0_211] : memref<1x16x16x128xf32, #tpu.memory_space<vmem>>, vector<1x1x16x128xf32>
    %821 = vector.shape_cast %820 : vector<1x1x16x128xf32> to vector<16x128xf32>
    %822 = vector.shape_cast %819 : vector<16x128xf32> to vector<1x1x16x128xf32>
    tpu.vector_store %arg9[%c0_208, %c13_209, %c0_210, %c0_211], %822 {strides = array<i32>} : memref<1x16x16x128xf32, #tpu.memory_space<vmem>>, vector<1x1x16x128xf32>,
    %c0_212 = arith.constant 0 : index
    %c15 = arith.constant 15 : index
    %c0_213 = arith.constant 0 : index
    %c0_214 = arith.constant 0 : index
    %823 = vector.load %arg2[%c0_212, %c15, %c0_213, %c0_214] : memref<1x16x16x128xf32, #tpu.memory_space<vmem>>, vector<1x1x16x128xf32>
    %824 = vector.shape_cast %823 : vector<1x1x16x128xf32> to vector<16x128xf32>
    %825 = vector.shape_cast %8 : vector<128xf32> to vector<1x128xf32>
    %826 = vector.broadcast %825 : vector<1x128xf32> to vector<16x128xf32>
    %827 = arith.mulf %712, %826 : vector<16x128xf32>
    %828 = vector.shape_cast %14 : vector<128xf32> to vector<1x128xf32>
    %829 = vector.broadcast %828 : vector<1x128xf32> to vector<16x128xf32>
    %830 = arith.mulf %768, %829 : vector<16x128xf32>
    %831 = arith.addf %827, %830 : vector<16x128xf32>
    %832 = vector.shape_cast %20 : vector<128xf32> to vector<1x128xf32>
    %833 = vector.broadcast %832 : vector<1x128xf32> to vector<16x128xf32>
    %834 = arith.mulf %824, %833 : vector<16x128xf32>
    %835 = arith.addf %831, %834 : vector<16x128xf32>
    %836 = vector.shape_cast %10 : vector<128xf32> to vector<1x128xf32>
    %837 = vector.broadcast %836 : vector<1x128xf32> to vector<16x128xf32>
    %838 = arith.mulf %712, %837 : vector<16x128xf32>
    %839 = vector.shape_cast %16 : vector<128xf32> to vector<1x128xf32>
    %840 = vector.broadcast %839 : vector<1x128xf32> to vector<16x128xf32>
    %841 = arith.mulf %768, %840 : vector<16x128xf32>
    %842 = arith.addf %838, %841 : vector<16x128xf32>
    %843 = vector.shape_cast %22 : vector<128xf32> to vector<1x128xf32>
    %844 = vector.broadcast %843 : vector<1x128xf32> to vector<16x128xf32>
    %845 = arith.mulf %824, %844 : vector<16x128xf32>
    %846 = arith.addf %842, %845 : vector<16x128xf32>
    %847 = vector.shape_cast %12 : vector<128xf32> to vector<1x128xf32>
    %848 = vector.broadcast %847 : vector<1x128xf32> to vector<16x128xf32>
    %849 = arith.mulf %712, %848 : vector<16x128xf32>
    %850 = vector.shape_cast %18 : vector<128xf32> to vector<1x128xf32>
    %851 = vector.broadcast %850 : vector<1x128xf32> to vector<16x128xf32>
    %852 = arith.mulf %768, %851 : vector<16x128xf32>
    %853 = arith.addf %849, %852 : vector<16x128xf32>
    %854 = vector.shape_cast %24 : vector<128xf32> to vector<1x128xf32>
    %855 = vector.broadcast %854 : vector<1x128xf32> to vector<16x128xf32>
    %856 = arith.mulf %824, %855 : vector<16x128xf32>
    %857 = arith.addf %853, %856 : vector<16x128xf32>
    %c1_i32_215 = arith.constant 1 : i32
    %858 = tpu.dynamic_rotate %835 by %c1_i32_215 dim 0 : vector<16x128xf32>, i32 -> vector<16x128xf32>
    %cst_216 = arith.constant 0.000000e+00 : f32
    %859 = vector.broadcast %cst_216 : f32 to vector<16x128xf32>
    %860 = arith.select %30, %858, %859 : vector<16x128xi1>, vector<16x128xf32>
    %861 = arith.addf %846, %860 : vector<16x128xf32>
    %c15_i32_217 = arith.constant 15 : i32
    %862 = tpu.dynamic_rotate %857 by %c15_i32_217 dim 0 : vector<16x128xf32>, i32 -> vector<16x128xf32>
    %cst_218 = arith.constant 0.000000e+00 : f32
    %863 = vector.broadcast %cst_218 : f32 to vector<16x128xf32>
    %864 = arith.select %32, %862, %863 : vector<16x128xi1>, vector<16x128xf32>
    %865 = arith.addf %861, %864 : vector<16x128xf32>
    %866 = vector.broadcast %25 : vector<1x128xf32> to vector<16x128xf32>
    %867 = arith.addf %865, %866 : vector<16x128xf32>
    %cst_219 = arith.constant 0.000000e+00 : f32
    %868 = vector.broadcast %cst_219 : f32 to vector<16x128xf32>
    %869 = arith.maximumf %867, %868 : vector<16x128xf32>
    %870 = arith.truncf %869 : vector<16x128xf32> to vector<16x128xbf16>
    %cst_220 = arith.constant dense<0.000000e+00> : vector<16x128xf32>
    %871 = tpu.matmul %870, %26, %cst_220 {dimension_numbers = #tpu.dot_dimension_numbers<[1], [0], [0], [1], [0, 0, 1, 1], [], []>} : vector<16x128xbf16>, vector<128x128xbf16>, vector<16x128xf32> -> vector<16x128xf32>
    %872 = vector.broadcast %27 : vector<1x128xf32> to vector<16x128xf32>
    %873 = arith.addf %871, %872 : vector<16x128xf32>
    %cst_221 = arith.constant 0.000000e+00 : f32
    %874 = vector.broadcast %cst_221 : f32 to vector<16x128xf32>
    %875 = arith.maximumf %873, %874 : vector<16x128xf32>
    %c0_222 = arith.constant 0 : index
    %c14_223 = arith.constant 14 : index
    %c0_224 = arith.constant 0 : index
    %c0_225 = arith.constant 0 : index
    %876 = vector.load %arg9[%c0_222, %c14_223, %c0_224, %c0_225] : memref<1x16x16x128xf32, #tpu.memory_space<vmem>>, vector<1x1x16x128xf32>
    %877 = vector.shape_cast %876 : vector<1x1x16x128xf32> to vector<16x128xf32>
    %878 = vector.shape_cast %875 : vector<16x128xf32> to vector<1x1x16x128xf32>
    tpu.vector_store %arg9[%c0_222, %c14_223, %c0_224, %c0_225], %878 {strides = array<i32>} : memref<1x16x16x128xf32, #tpu.memory_space<vmem>>, vector<1x1x16x128xf32>,
    %c0_226 = arith.constant 0 : index
    %c0_227 = arith.constant 0 : index
    %c0_228 = arith.constant 0 : index
    %c0_229 = arith.constant 0 : index
    %879 = vector.load %arg4[%c0_226, %c0_227, %c0_228, %c0_229] : memref<1x1x16x128xf32, #tpu.memory_space<vmem>>, vector<1x1x16x128xf32>
    %880 = vector.shape_cast %879 : vector<1x1x16x128xf32> to vector<16x128xf32>
    %881 = vector.broadcast %5 : f32 to vector<16x128xf32>
    %882 = arith.mulf %880, %881 : vector<16x128xf32>
    %883 = vector.shape_cast %8 : vector<128xf32> to vector<1x128xf32>
    %884 = vector.broadcast %883 : vector<1x128xf32> to vector<16x128xf32>
    %885 = arith.mulf %768, %884 : vector<16x128xf32>
    %886 = vector.shape_cast %14 : vector<128xf32> to vector<1x128xf32>
    %887 = vector.broadcast %886 : vector<1x128xf32> to vector<16x128xf32>
    %888 = arith.mulf %824, %887 : vector<16x128xf32>
    %889 = arith.addf %885, %888 : vector<16x128xf32>
    %890 = vector.shape_cast %20 : vector<128xf32> to vector<1x128xf32>
    %891 = vector.broadcast %890 : vector<1x128xf32> to vector<16x128xf32>
    %892 = arith.mulf %882, %891 : vector<16x128xf32>
    %893 = arith.addf %889, %892 : vector<16x128xf32>
    %894 = vector.shape_cast %10 : vector<128xf32> to vector<1x128xf32>
    %895 = vector.broadcast %894 : vector<1x128xf32> to vector<16x128xf32>
    %896 = arith.mulf %768, %895 : vector<16x128xf32>
    %897 = vector.shape_cast %16 : vector<128xf32> to vector<1x128xf32>
    %898 = vector.broadcast %897 : vector<1x128xf32> to vector<16x128xf32>
    %899 = arith.mulf %824, %898 : vector<16x128xf32>
    %900 = arith.addf %896, %899 : vector<16x128xf32>
    %901 = vector.shape_cast %22 : vector<128xf32> to vector<1x128xf32>
    %902 = vector.broadcast %901 : vector<1x128xf32> to vector<16x128xf32>
    %903 = arith.mulf %882, %902 : vector<16x128xf32>
    %904 = arith.addf %900, %903 : vector<16x128xf32>
    %905 = vector.shape_cast %12 : vector<128xf32> to vector<1x128xf32>
    %906 = vector.broadcast %905 : vector<1x128xf32> to vector<16x128xf32>
    %907 = arith.mulf %768, %906 : vector<16x128xf32>
    %908 = vector.shape_cast %18 : vector<128xf32> to vector<1x128xf32>
    %909 = vector.broadcast %908 : vector<1x128xf32> to vector<16x128xf32>
    %910 = arith.mulf %824, %909 : vector<16x128xf32>
    %911 = arith.addf %907, %910 : vector<16x128xf32>
    %912 = vector.shape_cast %24 : vector<128xf32> to vector<1x128xf32>
    %913 = vector.broadcast %912 : vector<1x128xf32> to vector<16x128xf32>
    %914 = arith.mulf %882, %913 : vector<16x128xf32>
    %915 = arith.addf %911, %914 : vector<16x128xf32>
    %c1_i32_230 = arith.constant 1 : i32
    %916 = tpu.dynamic_rotate %893 by %c1_i32_230 dim 0 : vector<16x128xf32>, i32 -> vector<16x128xf32>
    %cst_231 = arith.constant 0.000000e+00 : f32
    %917 = vector.broadcast %cst_231 : f32 to vector<16x128xf32>
    %918 = arith.select %30, %916, %917 : vector<16x128xi1>, vector<16x128xf32>
    %919 = arith.addf %904, %918 : vector<16x128xf32>
    %c15_i32_232 = arith.constant 15 : i32
    %920 = tpu.dynamic_rotate %915 by %c15_i32_232 dim 0 : vector<16x128xf32>, i32 -> vector<16x128xf32>
    %cst_233 = arith.constant 0.000000e+00 : f32
    %921 = vector.broadcast %cst_233 : f32 to vector<16x128xf32>
    %922 = arith.select %32, %920, %921 : vector<16x128xi1>, vector<16x128xf32>
    %923 = arith.addf %919, %922 : vector<16x128xf32>
    %924 = vector.broadcast %25 : vector<1x128xf32> to vector<16x128xf32>
    %925 = arith.addf %923, %924 : vector<16x128xf32>
    %cst_234 = arith.constant 0.000000e+00 : f32
    %926 = vector.broadcast %cst_234 : f32 to vector<16x128xf32>
    %927 = arith.maximumf %925, %926 : vector<16x128xf32>
    %928 = arith.truncf %927 : vector<16x128xf32> to vector<16x128xbf16>
    %cst_235 = arith.constant dense<0.000000e+00> : vector<16x128xf32>
    %929 = tpu.matmul %928, %26, %cst_235 {dimension_numbers = #tpu.dot_dimension_numbers<[1], [0], [0], [1], [0, 0, 1, 1], [], []>} : vector<16x128xbf16>, vector<128x128xbf16>, vector<16x128xf32> -> vector<16x128xf32>
    %930 = vector.broadcast %27 : vector<1x128xf32> to vector<16x128xf32>
    %931 = arith.addf %929, %930 : vector<16x128xf32>
    %cst_236 = arith.constant 0.000000e+00 : f32
    %932 = vector.broadcast %cst_236 : f32 to vector<16x128xf32>
    %933 = arith.maximumf %931, %932 : vector<16x128xf32>
    %c0_237 = arith.constant 0 : index
    %c15_238 = arith.constant 15 : index
    %c0_239 = arith.constant 0 : index
    %c0_240 = arith.constant 0 : index
    %934 = vector.load %arg9[%c0_237, %c15_238, %c0_239, %c0_240] : memref<1x16x16x128xf32, #tpu.memory_space<vmem>>, vector<1x1x16x128xf32>
    %935 = vector.shape_cast %934 : vector<1x1x16x128xf32> to vector<16x128xf32>
    %936 = vector.shape_cast %933 : vector<16x128xf32> to vector<1x1x16x128xf32>
    tpu.vector_store %arg9[%c0_237, %c15_238, %c0_239, %c0_240], %936 {strides = array<i32>} : memref<1x16x16x128xf32, #tpu.memory_space<vmem>>, vector<1x1x16x128xf32>,
    return
  }
  func.func @transform_0(%arg0: i32, %arg1: i32) -> (i32, i32, i32, i32) {
    %c0_i32 = arith.constant 0 : i32
    %c0_i32_0 = arith.constant 0 : i32
    %c0_i32_1 = arith.constant 0 : i32
    return %arg0, %arg1, %c0_i32, %c0_i32_0 : i32, i32, i32, i32
  }
  func.func @transform_1(%arg0: i32, %arg1: i32) -> (i32, i32, i32, i32) {
    %c16_i32 = arith.constant 16 : i32
    %0 = arith.muli %arg1, %c16_i32 : i32
    %c1_i32 = arith.constant 1 : i32
    %1 = arith.subi %0, %c1_i32 : i32
    %c0_i32 = arith.constant 0 : i32
    %2 = arith.maxsi %1, %c0_i32 : i32
    %c0_i32_0 = arith.constant 0 : i32
    %c0_i32_1 = arith.constant 0 : i32
    %c0_i32_2 = arith.constant 0 : i32
    return %arg0, %2, %c0_i32_0, %c0_i32_1 : i32, i32, i32, i32
  }
  func.func @transform_2(%arg0: i32, %arg1: i32) -> (i32, i32, i32, i32) {
    %c16_i32 = arith.constant 16 : i32
    %0 = arith.muli %arg1, %c16_i32 : i32
    %c16_i32_0 = arith.constant 16 : i32
    %1 = arith.addi %0, %c16_i32_0 : i32
    %c15_i32 = arith.constant 15 : i32
    %2 = arith.minsi %1, %c15_i32 : i32
    %c0_i32 = arith.constant 0 : i32
    %c0_i32_1 = arith.constant 0 : i32
    %c0_i32_2 = arith.constant 0 : i32
    return %arg0, %2, %c0_i32, %c0_i32_1 : i32, i32, i32, i32
  }
  func.func @transform_3(%arg0: i32, %arg1: i32) -> (i32, i32, i32) {
    %c0_i32 = arith.constant 0 : i32
    %c0_i32_0 = arith.constant 0 : i32
    %c0_i32_1 = arith.constant 0 : i32
    %c0_i32_2 = arith.constant 0 : i32
    return %c0_i32, %c0_i32_0, %c0_i32_1 : i32, i32, i32
  }
  func.func @transform_4(%arg0: i32, %arg1: i32) -> (i32, i32) {
    %c0_i32 = arith.constant 0 : i32
    %c0_i32_0 = arith.constant 0 : i32
    %c0_i32_1 = arith.constant 0 : i32
    return %c0_i32, %c0_i32_0 : i32, i32
  }
  func.func @transform_5(%arg0: i32, %arg1: i32) -> (i32, i32) {
    %c0_i32 = arith.constant 0 : i32
    %c0_i32_0 = arith.constant 0 : i32
    %c0_i32_1 = arith.constant 0 : i32
    return %c0_i32, %c0_i32_0 : i32, i32
  }
  func.func @transform_6(%arg0: i32, %arg1: i32) -> (i32, i32) {
    %c0_i32 = arith.constant 0 : i32
    %c0_i32_0 = arith.constant 0 : i32
    %c0_i32_1 = arith.constant 0 : i32
    return %c0_i32, %c0_i32_0 : i32, i32
  }
  func.func @transform_7(%arg0: i32, %arg1: i32) -> (i32, i32, i32, i32) {
    %c0_i32 = arith.constant 0 : i32
    %c0_i32_0 = arith.constant 0 : i32
    %c0_i32_1 = arith.constant 0 : i32
    return %arg0, %arg1, %c0_i32, %c0_i32_0 : i32, i32, i32, i32
  }
}

</mosaic_0001>

<llo_original>
// kernel: tpu_custom_call.1
$region0: #{tpu_custom_call.1}
  #allocation0 [shape = 'u32[]', space=smem, size = 0x4, offset = 0x4, fixed_abs, tag = 'smem constant byte address 0x4 - core index']
  #allocation1 [shape = 'u32[144,128]{1,0:T(1,128)}', space=vmem, size = 0x12000, scoped, tag = 'internal scratch']
  %s0 = inlined_call_operand.hbm [shape: f32[2,16,16,128], index: 0, kind: input, shape index: {}]
  %s1 = inlined_call_operand.hbm [shape: f32[2,16,16,128], index: 1, kind: input, shape index: {}]
  %s2 = inlined_call_operand.hbm [shape: f32[2,16,16,128], index: 2, kind: input, shape index: {}]
  %s3 = inlined_call_operand.hbm [shape: f32[3,3,128], index: 3, kind: input, shape index: {}]
  %s4 = inlined_call_operand.vmem [shape: f32[1,128], index: 4, kind: input, shape index: {}]
  %s5 = inlined_call_operand.hbm [shape: bf16[128,128], index: 5, kind: input, shape index: {}]
  %s6 = inlined_call_operand.vmem [shape: f32[1,128], index: 6, kind: input, shape index: {}]
  %s7 = inlined_call_operand.hbm [shape: f32[2,16,16,128], index: 7, kind: output, shape index: {}]
  %s8 = sld [smem:[#allocation0]]
  $region81: #{tpu_custom_call.1} parent=0
    _
  %s10 = ssub.s32 1, %s8
  %s11 = scalar_select 0, %s10, %s8
  $region1: #{tpu_custom_call.1} parent=0
    #allocation2 [shape = 'u8[262144]{0}', space=vmem, size = 0x40000, scoped, tag = 'input window, operand 0']
    #allocation3 [shape = 's32[2]{0}', space=sflag, size = 0x8, scoped, tag = 'scoped memory for tpu_custom_call.1']
    #allocation4 [shape = 's32[2]{0}', space=sflag, size = 0x8, scoped, tag = 'scoped memory for tpu_custom_call.1']
    #allocation5 [shape = 'u8[16384]{0}', space=vmem, size = 0x4000, scoped, tag = 'input window, operand 1']
    #allocation6 [shape = 's32[2]{0}', space=sflag, size = 0x8, scoped, tag = 'scoped memory for tpu_custom_call.1']
    #allocation7 [shape = 'u8[16384]{0}', space=vmem, size = 0x4000, scoped, tag = 'input window, operand 2']
    #allocation8 [shape = 'u8[6144]{0}', space=vmem, size = 0x1800, scoped, tag = 'input window, operand 3, single buffered']
    #allocation9 [shape = 's32[1]{0}', space=sflag, size = 0x4, scoped, tag = 'scoped memory for tpu_custom_call.1']
    #allocation10 [shape = 'u8[32768]{0}', space=vmem, size = 0x8000, scoped, tag = 'input window, operand 5, single buffered']
    #allocation11 [shape = 'u8[262144]{0}', space=vmem, size = 0x40000, scoped, tag = 'output window, operand 0']
    %12 = vsyncpa [#allocation3], 0
    %s13 = scalar_lea.sflag [#allocation3], 1
    %14 = vsyncpa %s13, 0
    %15 = vsyncpa [#allocation6], 0
    %s16 = scalar_lea.sflag [#allocation6], 1
    %17 = vsyncpa %s16, 0
    %18 = vsyncpa [#allocation9], 0
    %19 = vsyncpa [#allocation4], 0
    %s20 = scalar_lea.sflag [#allocation4], 1
    %21 = vsyncpa %s20, 0
    loop: start=0, step=1, limit=4
    $region2: #{tpu_custom_call.1} parent=1 // loop_pre_header
      _
    $region3: #{tpu_custom_call.1} parent=1 // loop_header
      %s23 = sphi 0, %s27
      %p24 = scmp.ge.s32.totalorder %s23, 4
      %s30 = sphi 0, %s42
      %s31 = sphi 0, %s38
      %s32 = sphi 0, %s30
      %s33 = sphi 0, %s31
      %s34 = sphi 0, %s32
      %s35 = sphi 0, %s33
      %s47 = sphi 0, %s49
      %s50 = sphi 0, %s47
      %s51 = sphi 0, %s50
      %s67 = sphi 0, %s51
      %s83 = sphi 0, %s85
      %s86 = sphi 0, %s83
      %s87 = sphi 0, %s86
      %s103 = sphi 0, %s87
      %s119 = sphi 0, %s121
      %s122 = sphi 0, %s119
      %s123 = sphi 0, %s122
      %s139 = sphi 0, %s123
      %s143 = sphi 0, %s143
      %s145 = sphi 0, %s143
      %s146 = sphi 0, %s145
      %s160 = sphi 0, %s146
      %s164 = sphi 0, %s164
      %s166 = sphi 0, %s164
      %s167 = sphi 0, %s166
      %s181 = sphi 0, %s167
      %s185 = sphi 0, %s185
      %s187 = sphi 0, %s185
      %s188 = sphi 0, %s187
      %s202 = sphi 0, %s188
      %s206 = sphi 0, %s206
      %s208 = sphi 0, %s206
      %s209 = sphi 0, %s208
      %s223 = sphi 0, %s209
      %s231 = sphi 0, %s233
      %s234 = sphi 0, %s231
      %s235 = sphi 0, %s234
      %s251 = sphi 0, %s235
    $region4: #{tpu_custom_call.1} parent=1 // loop_header_branch
      %26 = sbr.rel (%p24) target = $region8
    $region5: #{tpu_custom_call.1} parent=1 // loop_body
      %s28 = ssub.s32 %s23, 1
      %s29 = ssub.s32 %s23, 2
      %s36 = sadd.s32 1, %s31
      %p37 = scmp.ge.s32.totalorder %s36, 1
      %s38 = scalar_select %p37, 0, %s36
      %s39 = sadd.s32 1, %s30
      %s40 = scalar_select %p37, %s39, %s30
      %p41 = scmp.ge.s32.totalorder %s40, 2
      %s42 = scalar_select %p41, 0, %s40
      %s43 = ssub.s32 %s30, %s42
      %s44 = ssub.s32 %s31, %s38
      %s45 = sor.u32 %s43, %s44
      %p46 = scmp.eq.s32.totalorder %s45, 0
      %s48 = sadd.s32 %s47, 1
      %s49 = scalar_select %p46, %s47, %s48
      %p52 = pneg %p46
      %p53 = scmp.eq.s32.totalorder %s23, 1
      %p54 = por %p52, %p53
      %p55 = scmp.ne.s32.totalorder %s47, %s50
      %p56 = scmp.eq.s32.totalorder %s23, 0
      %p57 = por %p55, %p56
      %p58 = scmp.ne.s32.totalorder %s47, %s50
      %p59 = scmp.eq.s32.totalorder %s28, 1
      %p60 = por %p58, %p59
      %p61 = scmp.ne.s32.totalorder %s50, %s51
      %p62 = scmp.eq.s32.totalorder %s28, 0
      %p63 = por %p61, %p62
      %p64 = scmp.ne.s32.totalorder %s50, %s51
      %p65 = scmp.eq.s32.totalorder %s29, 1
      %p66 = por %p64, %p65
      %p68 = scmp.ne.s32.totalorder %s51, %s67
      %p69 = scmp.eq.s32.totalorder %s29, 0
      %p70 = por %p68, %p69
      %s71 = smul.u32 %s31, 16
      %s72 = ssub.s32 %s71, 1
      %p73 = scmp.gt.s32.totalorder %s72, 0
      %s74 = scalar_select %p73, %s72, 0
      %s75 = smul.u32 %s38, 16
      %s76 = ssub.s32 %s75, 1
      %p77 = scmp.gt.s32.totalorder %s76, 0
      %s78 = scalar_select %p77, %s76, 0
      %s79 = ssub.s32 %s30, %s42
      %s80 = ssub.s32 %s74, %s78
      %s81 = sor.u32 %s79, %s80
      %p82 = scmp.eq.s32.totalorder %s81, 0
      %s84 = sadd.s32 %s83, 1
      %s85 = scalar_select %p82, %s83, %s84
      %p88 = pneg %p82
      %p89 = scmp.eq.s32.totalorder %s23, 1
      %p90 = por %p88, %p89
      %p91 = scmp.ne.s32.totalorder %s83, %s86
      %p92 = scmp.eq.s32.totalorder %s23, 0
      %p93 = por %p91, %p92
      %p94 = scmp.ne.s32.totalorder %s83, %s86
      %p95 = scmp.eq.s32.totalorder %s28, 1
      %p96 = por %p94, %p95
      %p97 = scmp.ne.s32.totalorder %s86, %s87
      %p98 = scmp.eq.s32.totalorder %s28, 0
      %p99 = por %p97, %p98
      %p100 = scmp.ne.s32.totalorder %s86, %s87
      %p101 = scmp.eq.s32.totalorder %s29, 1
      %p102 = por %p100, %p101
      %p104 = scmp.ne.s32.totalorder %s87, %s103
      %p105 = scmp.eq.s32.totalorder %s29, 0
      %p106 = por %p104, %p105
      %s107 = smul.u32 %s31, 16
      %s108 = sadd.s32 %s107, 16
      %p109 = scmp.lt.s32.totalorder %s108, 15
      %s110 = scalar_select %p109, %s108, 15
      %s111 = smul.u32 %s38, 16
      %s112 = sadd.s32 %s111, 16
      %p113 = scmp.lt.s32.totalorder %s112, 15
      %s114 = scalar_select %p113, %s112, 15
      %s115 = ssub.s32 %s30, %s42
      %s116 = ssub.s32 %s110, %s114
      %s117 = sor.u32 %s115, %s116
      %p118 = scmp.eq.s32.totalorder %s117, 0
      %s120 = sadd.s32 %s119, 1
      %s121 = scalar_select %p118, %s119, %s120
      %p124 = pneg %p118
      %p125 = scmp.eq.s32.totalorder %s23, 1
      %p126 = por %p124, %p125
      %p127 = scmp.ne.s32.totalorder %s119, %s122
      %p128 = scmp.eq.s32.totalorder %s23, 0
      %p129 = por %p127, %p128
      %p130 = scmp.ne.s32.totalorder %s119, %s122
      %p131 = scmp.eq.s32.totalorder %s28, 1
      %p132 = por %p130, %p131
      %p133 = scmp.ne.s32.totalorder %s122, %s123
      %p134 = scmp.eq.s32.totalorder %s28, 0
      %p135 = por %p133, %p134
      %p136 = scmp.ne.s32.totalorder %s122, %s123
      %p137 = scmp.eq.s32.totalorder %s29, 1
      %p138 = por %p136, %p137
      %p140 = scmp.ne.s32.totalorder %s123, %s139
      %p141 = scmp.eq.s32.totalorder %s29, 0
      %p142 = por %p140, %p141
      %s144 = sadd.s32 %s143, 1
      %p147 = scmp.eq.s32.totalorder %s23, 1
      %p148 = scmp.ne.s32.totalorder %s143, %s145
      %p149 = scmp.eq.s32.totalorder %s23, 0
      %p150 = por %p148, %p149
      %p151 = scmp.ne.s32.totalorder %s143, %s145
      %p152 = scmp.eq.s32.totalorder %s28, 1
      %p153 = por %p151, %p152
      %p154 = scmp.ne.s32.totalorder %s145, %s146
      %p155 = scmp.eq.s32.totalorder %s28, 0
      %p156 = por %p154, %p155
      %p157 = scmp.ne.s32.totalorder %s145, %s146
      %p158 = scmp.eq.s32.totalorder %s29, 1
      %p159 = por %p157, %p158
      %p161 = scmp.ne.s32.totalorder %s146, %s160
      %p162 = scmp.eq.s32.totalorder %s29, 0
      %p163 = por %p161, %p162
      %s165 = sadd.s32 %s164, 1
      %p168 = scmp.eq.s32.totalorder %s23, 1
      %p169 = scmp.ne.s32.totalorder %s164, %s166
      %p170 = scmp.eq.s32.totalorder %s23, 0
      %p171 = por %p169, %p170
      %p172 = scmp.ne.s32.totalorder %s164, %s166
      %p173 = scmp.eq.s32.totalorder %s28, 1
      %p174 = por %p172, %p173
      %p175 = scmp.ne.s32.totalorder %s166, %s167
      %p176 = scmp.eq.s32.totalorder %s28, 0
      %p177 = por %p175, %p176
      %p178 = scmp.ne.s32.totalorder %s166, %s167
      %p179 = scmp.eq.s32.totalorder %s29, 1
      %p180 = por %p178, %p179
      %p182 = scmp.ne.s32.totalorder %s167, %s181
      %p183 = scmp.eq.s32.totalorder %s29, 0
      %p184 = por %p182, %p183
      %s186 = sadd.s32 %s185, 1
      %p189 = scmp.eq.s32.totalorder %s23, 1
      %p190 = scmp.ne.s32.totalorder %s185, %s187
      %p191 = scmp.eq.s32.totalorder %s23, 0
      %p192 = por %p190, %p191
      %p193 = scmp.ne.s32.totalorder %s185, %s187
      %p194 = scmp.eq.s32.totalorder %s28, 1
      %p195 = por %p193, %p194
      %p196 = scmp.ne.s32.totalorder %s187, %s188
      %p197 = scmp.eq.s32.totalorder %s28, 0
      %p198 = por %p196, %p197
      %p199 = scmp.ne.s32.totalorder %s187, %s188
      %p200 = scmp.eq.s32.totalorder %s29, 1
      %p201 = por %p199, %p200
      %p203 = scmp.ne.s32.totalorder %s188, %s202
      %p204 = scmp.eq.s32.totalorder %s29, 0
      %p205 = por %p203, %p204
      %s207 = sadd.s32 %s206, 1
      %p210 = scmp.eq.s32.totalorder %s23, 1
      %p211 = scmp.ne.s32.totalorder %s206, %s208
      %p212 = scmp.eq.s32.totalorder %s23, 0
      %p213 = por %p211, %p212
      %p214 = scmp.ne.s32.totalorder %s206, %s208
      %p215 = scmp.eq.s32.totalorder %s28, 1
      %p216 = por %p214, %p215
      %p217 = scmp.ne.s32.totalorder %s208, %s209
      %p218 = scmp.eq.s32.totalorder %s28, 0
      %p219 = por %p217, %p218
      %p220 = scmp.ne.s32.totalorder %s208, %s209
      %p221 = scmp.eq.s32.totalorder %s29, 1
      %p222 = por %p220, %p221
      %p224 = scmp.ne.s32.totalorder %s209, %s223
      %p225 = scmp.eq.s32.totalorder %s29, 0
      %p226 = por %p224, %p225
      %s227 = ssub.s32 %s30, %s42
      %s228 = ssub.s32 %s31, %s38
      %s229 = sor.u32 %s227, %s228
      %p230 = scmp.eq.s32.totalorder %s229, 0
      %s232 = sadd.s32 %s231, 1
      %s233 = scalar_select %p230, %s231, %s232
      %p236 = pneg %p230
      %p237 = scmp.eq.s32.totalorder %s23, 1
      %p238 = por %p236, %p237
      %p239 = scmp.ne.s32.totalorder %s231, %s234
      %p240 = scmp.eq.s32.totalorder %s23, 0
      %p241 = por %p239, %p240
      %p242 = scmp.ne.s32.totalorder %s231, %s234
      %p243 = scmp.eq.s32.totalorder %s28, 1
      %p244 = por %p242, %p243
      %p245 = scmp.ne.s32.totalorder %s234, %s235
      %p246 = scmp.eq.s32.totalorder %s28, 0
      %p247 = por %p245, %p246
      %p248 = scmp.ne.s32.totalorder %s234, %s235
      %p249 = scmp.eq.s32.totalorder %s29, 1
      %p250 = por %p248, %p249
      %p252 = scmp.ne.s32.totalorder %s235, %s251
      %p253 = scmp.eq.s32.totalorder %s29, 0
      %p254 = por %p252, %p253
      %p255 = scmp.le.s32.totalorder 1, %s23
      %p256 = scmp.lt.s32.totalorder %s23, 3
      %p257 = pnand %p255, %p256
      %p258 = pneg %p257
      // Predicated region
      $region9: #{tpu_custom_call.1} parent=5 // pred_check
        _
      $region10: #{tpu_custom_call.1} parent=5 // pred_check_branch
        %260 = sbr.rel (%p257) target = $region12
      $region11: #{tpu_custom_call.1} parent=5 // pred_region
        %s261 = ssub.s32 %s23, 1
        // Predicated region
        $region13: #{tpu_custom_call.1} parent=11 // pred_check
          %p262 = pneg %p156
        $region14: #{tpu_custom_call.1} parent=11 // pred_check_branch
          %264 = sbr.rel (%p262) target = $region16
        $region15: #{tpu_custom_call.1} parent=11 // pred_region
          %s266 = ssub.s32 192, 192
          %267 = vsyncadd [#allocation9], %s266
          %s268 = sshll.u32 [#allocation8], 4
          %s269 = int_to_ptr.vmem [resolvable:$true] %s268
          %274 = dma.hbm_to_vmem [thread:$0]  %s3, 192, %s269, [#allocation9], 64, 64, 4
        $region16: #{tpu_custom_call.1} parent=11 // pred_fallthru
          _
        // Predicated region
        $region17: #{tpu_custom_call.1} parent=11 // pred_check
          %p275 = pneg %p177
        $region18: #{tpu_custom_call.1} parent=11 // pred_check_branch
          %277 = sbr.rel (%p275) target = $region20
        $region19: #{tpu_custom_call.1} parent=11 // pred_region
          _
        $region20: #{tpu_custom_call.1} parent=11 // pred_fallthru
          _
        // Predicated region
        $region21: #{tpu_custom_call.1} parent=11 // pred_check
          %p278 = pneg %p198
        $region22: #{tpu_custom_call.1} parent=11 // pred_check_branch
          %280 = sbr.rel (%p278) target = $region24
        $region23: #{tpu_custom_call.1} parent=11 // pred_region
          %s282 = ssub.s32 1024, 1024
          %283 = vsyncadd [#allocation9], %s282
          %s284 = sshll.u32 [#allocation10], 4
          %s285 = int_to_ptr.vmem [resolvable:$true] %s284
          %290 = dma.hbm_to_vmem [thread:$0]  %s5, 1024, %s285, [#allocation9], 64, 64, 4
        $region24: #{tpu_custom_call.1} parent=11 // pred_fallthru
          _
        // Predicated region
        $region25: #{tpu_custom_call.1} parent=11 // pred_check
          %p291 = pneg %p219
        $region26: #{tpu_custom_call.1} parent=11 // pred_check_branch
          %293 = sbr.rel (%p291) target = $region28
        $region27: #{tpu_custom_call.1} parent=11 // pred_region
          _
        $region28: #{tpu_custom_call.1} parent=11 // pred_fallthru
          _
      $region12: #{tpu_custom_call.1} parent=5 // pred_fallthru
        _
      %p294 = scmp.lt.s32.totalorder %s23, 2
      // Predicated region
      $region29: #{tpu_custom_call.1} parent=5 // pred_check
        %p295 = pneg %p294
      $region30: #{tpu_custom_call.1} parent=5 // pred_check_branch
        %297 = sbr.rel (%p295) target = $region32
      $region31: #{tpu_custom_call.1} parent=5 // pred_region
        // Predicated region
        $region33: #{tpu_custom_call.1} parent=31 // pred_check
          %p298 = pneg %p57
        $region34: #{tpu_custom_call.1} parent=31 // pred_check_branch
          %300 = sbr.rel (%p298) target = $region36
        $region35: #{tpu_custom_call.1} parent=31 // pred_region
          %s301 = sand.u32 %s47, 1
          %s302 = scalar_lea.sflag [#allocation3], %s301
          %s303 = sand.u32 %s47, 1
          %s304 = smul.addr %s303, 256
          %s305 = scalar_lea.vmem [#allocation2], %s304
          %s306 = smul.u32 16, %s31
          %s308 = ssub.s32 4096, 4096
          %309 = vsyncadd %s302, %s308
          %s310 = smul.addr %s306, 2
          %s311 = smul.addr %s30, 32
          %s312 = sadd.s32 %s310, %s311
          %s313 = smul.addr %s312, 128
          %s314 = scalar_lea.hbm %s0, %s313
          %s315 = sshll.u32 %s305, 4
          %s316 = int_to_ptr.vmem [resolvable:$true] %s315
          %321 = dma.hbm_to_vmem [thread:$0]  %s314, 4096, %s316, %s302, 128, 128, 8
        $region36: #{tpu_custom_call.1} parent=31 // pred_fallthru
          _
        // Predicated region
        $region37: #{tpu_custom_call.1} parent=31 // pred_check
          %p322 = pneg %p93
        $region38: #{tpu_custom_call.1} parent=31 // pred_check_branch
          %324 = sbr.rel (%p322) target = $region40
        $region39: #{tpu_custom_call.1} parent=31 // pred_region
          %s325 = sand.u32 %s23, 1
          %s326 = scalar_lea.sflag [#allocation6], %s325
          %s327 = sand.u32 %s83, 1
          %s328 = smul.addr %s327, 16
          %s329 = scalar_lea.vmem [#allocation5], %s328
          %s330 = smul.u32 %s31, 16
          %s331 = ssub.s32 %s330, 1
          %p332 = scmp.gt.s32.totalorder %s331, 0
          %s333 = scalar_select %p332, %s331, 0
          %s335 = ssub.s32 256, 256
          %336 = vsyncadd %s326, %s335
          %s337 = smul.addr %s333, 2
          %s338 = smul.addr %s30, 32
          %s339 = sadd.s32 %s337, %s338
          %s340 = smul.addr %s339, 128
          %s341 = scalar_lea.hbm %s1, %s340
          %s342 = sshll.u32 %s329, 4
          %s343 = int_to_ptr.vmem [resolvable:$true] %s342
          %348 = dma.hbm_to_vmem [thread:$0]  %s341, 256, %s343, %s326, 128, 128, 8
        $region40: #{tpu_custom_call.1} parent=31 // pred_fallthru
          _
        // Predicated region
        $region41: #{tpu_custom_call.1} parent=31 // pred_check
          %p349 = pneg %p129
        $region42: #{tpu_custom_call.1} parent=31 // pred_check_branch
          %351 = sbr.rel (%p349) target = $region44
        $region43: #{tpu_custom_call.1} parent=31 // pred_region
          %s352 = sand.u32 %s23, 1
          %s353 = scalar_lea.sflag [#allocation6], %s352
          %s354 = sand.u32 %s119, 1
          %s355 = smul.addr %s354, 16
          %s356 = scalar_lea.vmem [#allocation7], %s355
          %s357 = smul.u32 %s31, 16
          %s358 = sadd.s32 %s357, 16
          %p359 = scmp.lt.s32.totalorder %s358, 15
          %s360 = scalar_select %p359, %s358, 15
          %s362 = ssub.s32 256, 256
          %363 = vsyncadd %s353, %s362
          %s364 = smul.addr %s360, 2
          %s365 = smul.addr %s30, 32
          %s366 = sadd.s32 %s364, %s365
          %s367 = smul.addr %s366, 128
          %s368 = scalar_lea.hbm %s2, %s367
          %s369 = sshll.u32 %s356, 4
          %s370 = int_to_ptr.vmem [resolvable:$true] %s369
          %375 = dma.hbm_to_vmem [thread:$0]  %s368, 256, %s370, %s353, 128, 128, 8
        $region44: #{tpu_custom_call.1} parent=31 // pred_fallthru
          _
      $region32: #{tpu_custom_call.1} parent=5 // pred_fallthru
        _
      %p376 = scmp.le.s32.totalorder 1, %s23
      %p377 = scmp.lt.s32.totalorder %s23, 3
      %p378 = pnand %p376, %p377
      %p379 = pneg %p378
      // Predicated region
      $region45: #{tpu_custom_call.1} parent=5 // pred_check
        _
      $region46: #{tpu_custom_call.1} parent=5 // pred_check_branch
        %381 = sbr.rel (%p378) target = $region48
      $region47: #{tpu_custom_call.1} parent=5 // pred_region
        %s382 = ssub.s32 %s23, 1
        %s383 = sand.u32 %s50, 1
        %s384 = scalar_lea.sflag [#allocation3], %s383
        %s385 = sand.u32 %s50, 1
        %s386 = smul.addr %s385, 256
        %s387 = scalar_lea.vmem [#allocation2], %s386
        // Predicated region
        $region49: #{tpu_custom_call.1} parent=47 // pred_check
          %p388 = pneg %p63
        $region50: #{tpu_custom_call.1} parent=47 // pred_check_branch
          %390 = sbr.rel (%p388) target = $region52
        $region51: #{tpu_custom_call.1} parent=47 // pred_region
          %391 = dma.done %s384, 4096
        $region52: #{tpu_custom_call.1} parent=47 // pred_fallthru
          _
        %s392 = sand.u32 %s28, 1
        %s393 = scalar_lea.sflag [#allocation6], %s392
        %s394 = sand.u32 %s86, 1
        %s395 = smul.addr %s394, 16
        %s396 = scalar_lea.vmem [#allocation5], %s395
        // Predicated region
        $region53: #{tpu_custom_call.1} parent=47 // pred_check
          %p397 = pneg %p99
        $region54: #{tpu_custom_call.1} parent=47 // pred_check_branch
          %399 = sbr.rel (%p397) target = $region56
        $region55: #{tpu_custom_call.1} parent=47 // pred_region
          %400 = dma.done %s393, 256
        $region56: #{tpu_custom_call.1} parent=47 // pred_fallthru
          _
        %s401 = sand.u32 %s28, 1
        %s402 = scalar_lea.sflag [#allocation6], %s401
        %s403 = sand.u32 %s122, 1
        %s404 = smul.addr %s403, 16
        %s405 = scalar_lea.vmem [#allocation7], %s404
        // Predicated region
        $region57: #{tpu_custom_call.1} parent=47 // pred_check
          %p406 = pneg %p135
        $region58: #{tpu_custom_call.1} parent=47 // pred_check_branch
          %408 = sbr.rel (%p406) target = $region60
        $region59: #{tpu_custom_call.1} parent=47 // pred_region
          %409 = dma.done %s402, 256
        $region60: #{tpu_custom_call.1} parent=47 // pred_fallthru
          _
        // Predicated region
        $region61: #{tpu_custom_call.1} parent=47 // pred_check
          %p410 = pneg %p156
        $region62: #{tpu_custom_call.1} parent=47 // pred_check_branch
          %412 = sbr.rel (%p410) target = $region64
        $region63: #{tpu_custom_call.1} parent=47 // pred_region
          %413 = dma.done [#allocation9], 192
        $region64: #{tpu_custom_call.1} parent=47 // pred_fallthru
          _
        // Predicated region
        $region65: #{tpu_custom_call.1} parent=47 // pred_check
          %p414 = pneg %p198
        $region66: #{tpu_custom_call.1} parent=47 // pred_check_branch
          %416 = sbr.rel (%p414) target = $region68
        $region67: #{tpu_custom_call.1} parent=47 // pred_region
          %417 = dma.done [#allocation9], 1024
        $region68: #{tpu_custom_call.1} parent=47 // pred_fallthru
          _
        %s418 = sand.u32 %s50, 1
        %s419 = scalar_lea.sflag [#allocation3], %s418
        %s420 = sand.u32 %s50, 1
        %s421 = smul.addr %s420, 256
        %s422 = scalar_lea.vmem [#allocation2], %s421
        %p423 = pneg %p63
        %p424 = pneg %p60
        %s425 = sand.u32 %s28, 1
        %s426 = scalar_lea.sflag [#allocation6], %s425
        %s427 = sand.u32 %s86, 1
        %s428 = smul.addr %s427, 16
        %s429 = scalar_lea.vmem [#allocation5], %s428
        %p430 = pneg %p99
        %p431 = pneg %p96
        %s432 = sand.u32 %s28, 1
        %s433 = scalar_lea.sflag [#allocation6], %s432
        %s434 = sand.u32 %s122, 1
        %s435 = smul.addr %s434, 16
        %s436 = scalar_lea.vmem [#allocation7], %s435
        %p437 = pneg %p135
        %p438 = pneg %p132
        %p439 = pneg %p156
        %p440 = pneg %p153
        %p441 = pneg %p177
        %p442 = pneg %p174
        %p443 = pneg %p198
        %p444 = pneg %p195
        %p445 = pneg %p219
        %p446 = pneg %p216
        %p447 = pneg %p247
        %p448 = pneg %p244
        %s449 = sand.u32 %s234, 1
        %s450 = scalar_lea.sflag [#allocation4], %s449
        %s451 = sand.u32 %s234, 1
        %s452 = smul.addr %s451, 256
        %s453 = scalar_lea.vmem [#allocation11], %s452
        %s454 = smul.u32 16, %s33
        %s455 = smul.u32 %s33, 16
        %s456 = ssub.s32 %s455, 1
        %p457 = scmp.gt.s32.totalorder %s456, 0
        %s458 = scalar_select %p457, %s456, 0
        %s459 = smul.u32 %s33, 16
        %s460 = sadd.s32 %s459, 16
        %p461 = scmp.lt.s32.totalorder %s460, 15
        %s462 = scalar_select %p461, %s460, 15
        %s463 = smul.u32 16, %s33
        %p465 = scmp.gt.s32.totalorder %s33, 0
        %s466 = scalar_select %p465, 1, 0
        %s467 = scvt.s32.f32 %s466
        %p468 = scmp.lt.s32.totalorder %s33, 0
        %s469 = scalar_select %p468, 1, 0
        %s470 = scvt.s32.f32 %s469
        %v471 = vld [vmem:[#allocation8] sm:$0x7]
        %v472 = vld [vmem:[#allocation8 + $0x4] sm:$0x7]
        %v473 = vld [vmem:[#allocation8 + $0x8] sm:$0x7]
        %v474 = vld [vmem:[%s4] sm:$0x1]
        %v475 = vld [vmem:[#allocation10] sm:$0xf]
        %v476 = vld [vmem:[#allocation10 + $0x4] sm:$0xf]
        %v477 = vld [vmem:[#allocation10 + $0x8] sm:$0xf]
        %v478 = vld [vmem:[#allocation10 + $0xc] sm:$0xf]
        %v479 = vld [vmem:[#allocation10 + $0x10] sm:$0xf]
        %v480 = vld [vmem:[#allocation10 + $0x14] sm:$0xf]
        %v481 = vld [vmem:[#allocation10 + $0x18] sm:$0xf]
        %v482 = vld [vmem:[#allocation10 + $0x1c] sm:$0xf]
        %v483 = vld [vmem:[#allocation10 + $0x20] sm:$0xf]
        %v484 = vld [vmem:[#allocation10 + $0x24] sm:$0xf]
        %v485 = vld [vmem:[#allocation10 + $0x28] sm:$0xf]
        %v486 = vld [vmem:[#allocation10 + $0x2c] sm:$0xf]
        %v487 = vld [vmem:[#allocation10 + $0x30] sm:$0xf]
        %v488 = vld [vmem:[#allocation10 + $0x34] sm:$0xf]
        %v489 = vld [vmem:[#allocation10 + $0x38] sm:$0xf]
        %v490 = vld [vmem:[#allocation10 + $0x3c] sm:$0xf]
        %v491 = vld [vmem:[%s6] sm:$0x1]
        %v492 = vlaneseq
        %v493 = vshrl.u32 %v492, 7
        %v494 = vadd.s32 %v493, 8
        %vm495 = vcmp.gt.s32.totalorder %v493, 0
        %vm496 = vcmp.gt.s32.totalorder %v494, 0
        %vm497 = vcmp.lt.s32.totalorder %v493, 15
        %vm498 = vcmp.lt.s32.totalorder %v494, 15
        %v499 = vld [vmem:[%s396] sm:$0xff]
        %v500 = vld [vmem:[%s396 + $0x8] sm:$0xff]
        %v501 = vstv %s467
        %v502 = vmul.f32 %v499, %v501
        %v503 = vmul.f32 %v500, %v501
        %v504 = vld [vmem:[%s387] sm:$0xff]
        %v505 = vld [vmem:[%s387 + $0x8] sm:$0xff]
        %s506 = scalar_lea.vmem %s387, 16 [#allocation2]
        %v507 = vld [vmem:[%s506] sm:$0xff]
        %v508 = vld [vmem:[%s506 + $0x8] sm:$0xff]
        %v509 = vlaneseq
        %v510 = vshrl.u32 %v509, 7
        %v511 = vsub.s32 0, %v510
        %v512 = vrot.slane %v471, %v511
        %v513 = vmul.f32 %v502, %v512
        %v514 = vmul.f32 %v503, %v512
        %v515 = vlaneseq
        %v516 = vshrl.u32 %v515, 7
        %v517 = vsub.s32 0, %v516
        %v518 = vrot.slane %v472, %v517
        %v519 = vmul.f32 %v504, %v518
        %v520 = vmul.f32 %v505, %v518
        %v521 = vadd.f32 %v513, %v519
        %v522 = vadd.f32 %v514, %v520
        %v523 = vlaneseq
        %v524 = vshrl.u32 %v523, 7
        %v525 = vsub.s32 0, %v524
        %v526 = vrot.slane %v473, %v525
        %v527 = vmul.f32 %v507, %v526
        %v528 = vmul.f32 %v508, %v526
        %v529 = vadd.f32 %v521, %v527
        %v530 = vadd.f32 %v522, %v528
        %v531 = vlaneseq
        %v532 = vshrl.u32 %v531, 7
        %v533 = vsub.s32 1, %v532
        %v534 = vrot.slane %v471, %v533
        %v535 = vmul.f32 %v502, %v534
        %v536 = vmul.f32 %v503, %v534
        %v537 = vlaneseq
        %v538 = vshrl.u32 %v537, 7
        %v539 = vsub.s32 1, %v538
        %v540 = vrot.slane %v472, %v539
        %v541 = vmul.f32 %v504, %v540
        %v542 = vmul.f32 %v505, %v540
        %v543 = vadd.f32 %v535, %v541
        %v544 = vadd.f32 %v536, %v542
        %v545 = vlaneseq
        %v546 = vshrl.u32 %v545, 7
        %v547 = vsub.s32 1, %v546
        %v548 = vrot.slane %v473, %v547
        %v549 = vmul.f32 %v507, %v548
        %v550 = vmul.f32 %v508, %v548
        %v551 = vadd.f32 %v543, %v549
        %v552 = vadd.f32 %v544, %v550
        %v553 = vlaneseq
        %v554 = vshrl.u32 %v553, 7
        %v555 = vsub.s32 2, %v554
        %v556 = vrot.slane %v471, %v555
        %v557 = vmul.f32 %v502, %v556
        %v558 = vmul.f32 %v503, %v556
        %v559 = vlaneseq
        %v560 = vshrl.u32 %v559, 7
        %v561 = vsub.s32 2, %v560
        %v562 = vrot.slane %v472, %v561
        %v563 = vmul.f32 %v504, %v562
        %v564 = vmul.f32 %v505, %v562
        %v565 = vadd.f32 %v557, %v563
        %v566 = vadd.f32 %v558, %v564
        %v567 = vlaneseq
        %v568 = vshrl.u32 %v567, 7
        %v569 = vsub.s32 2, %v568
        %v570 = vrot.slane %v473, %v569
        %v571 = vmul.f32 %v507, %v570
        %v572 = vmul.f32 %v508, %v570
        %v573 = vadd.f32 %v565, %v571
        %v574 = vadd.f32 %v566, %v572
        %v575 = vrot.slane %v529, 7
        %v576 = vrot.slane %v530, 7
        %vm577 = vcmp.lt.s32.totalorder %v493, 1
        %v578 = vsel %vm577, %v575, %v576
        %v579 = vsel %vm577, %v576, %v575
        %v580 = vsel %vm495, %v579, 0.0
        %v581 = vsel %vm496, %v578, 0.0
        %v582 = vadd.f32 %v551, %v580
        %v583 = vadd.f32 %v552, %v581
        %v584 = vrot.slane %v573, 1
        %v585 = vrot.slane %v574, 1
        %vm586 = vcmp.lt.s32.totalorder %v493, 7
        %v587 = vsel %vm586, %v584, %v585
        %v588 = vsel %vm586, %v585, %v584
        %v589 = vsel %vm497, %v587, 0.0
        %v590 = vsel %vm498, %v588, 0.0
        %v591 = vadd.f32 %v582, %v589
        %v592 = vadd.f32 %v583, %v590
        %v594 = vlaneseq
        %v595 = vshrl.u32 %v594, 7
        %v596 = vsub.s32 0, %v595
        %v597 = vrot.slane %v474, %v596
        %v599 = vadd.f32 %v591, %v597
        %v600 = vadd.f32 %v592, %v597
        %v601 = vmax.f32 %v599, 0.0
        %v602 = vmax.f32 %v600, 0.0
        %v603 = vpack.c.bf16 %v602, %v601
        %v605 = vlaneseq
        %v606 = vshrl.u32 %v605, 7
        %v607 = vsub.s32 0, %v606
        %v608 = vrot.slane %v491, %v607
        %v626 = vunpack.c.l.b16 %v475
        %v627 = vunpack.c.l.b16 %v476
        %v628 = vunpack.c.l.b16 %v477
        %v629 = vunpack.c.l.b16 %v478
        %v630 = vunpack.c.l.b16 %v479
        %v631 = vunpack.c.l.b16 %v480
        %v632 = vunpack.c.l.b16 %v481
        %v633 = vunpack.c.l.b16 %v482
        %v634 = vunpack.c.l.b16 %v483
        %v635 = vunpack.c.l.b16 %v484
        %v636 = vunpack.c.l.b16 %v485
        %v637 = vunpack.c.l.b16 %v486
        %v638 = vunpack.c.l.b16 %v487
        %v639 = vunpack.c.l.b16 %v488
        %v640 = vunpack.c.l.b16 %v489
        %v641 = vunpack.c.l.b16 %v490
        %v642 = vpack.c.b16 %v627, %v626
        %v643 = vpack.c.b16 %v629, %v628
        %v644 = vpack.c.b16 %v631, %v630
        %v645 = vpack.c.b16 %v633, %v632
        %v646 = vpack.c.b16 %v635, %v634
        %v647 = vpack.c.b16 %v637, %v636
        %v648 = vpack.c.b16 %v639, %v638
        %v649 = vpack.c.b16 %v641, %v640
        %658 = vmatprep.subr.bf16.mxu0 0
        %659 = vmatpush1.bf16.msra.mxu0 %v642
        %660 = vmatprep.subr.bf16.mxu0 0
        %661 = vmatpush1.bf16.msra.mxu0 %v643
        %662 = vmatprep.subr.bf16.mxu0 0
        %663 = vmatpush1.bf16.msra.mxu0 %v644
        %664 = vmatprep.subr.bf16.mxu0 0
        %665 = vmatpush1.bf16.msra.mxu0 %v645
        %666 = vmatprep.subr.bf16.mxu0 0
        %667 = vmatpush1.bf16.msra.mxu0 %v646
        %668 = vmatprep.subr.bf16.mxu0 0
        %669 = vmatpush1.bf16.msra.mxu0 %v647
        %670 = vmatprep.subr.bf16.mxu0 0
        %671 = vmatpush1.bf16.msra.mxu0 %v648
        %672 = vmatprep.subr.bf16.mxu0 0
        %673 = vmatpush1.bf16.msra.mxu0 %v649
        %674 = vmatprep.subr.bf16.mxu0 0
        %675 = vmatpush1.bf16.msra.mxu0 0
        %676 = vmatprep.subr.bf16.mxu0 0
        %677 = vmatpush1.bf16.msra.mxu0 0
        %678 = vmatprep.subr.bf16.mxu0 0
        %679 = vmatpush1.bf16.msra.mxu0 0
        %680 = vmatprep.subr.bf16.mxu0 0
        %681 = vmatpush1.bf16.msra.mxu0 0
        %682 = vmatprep.subr.bf16.mxu0 0
        %683 = vmatpush1.bf16.msra.mxu0 0
        %684 = vmatprep.subr.bf16.mxu0 0
        %685 = vmatpush1.bf16.msra.mxu0 0
        %686 = vmatprep.subr.bf16.mxu0 0
        %687 = vmatpush1.bf16.msra.mxu0 0
        %688 = vmatprep.subr.bf16.mxu0 0
        %689 = vmatpush1.bf16.msra.mxu0 0
        %690 = vmatprep.mubr.bf16.mxu0 0
        %691 = vmatmul.mubr.bf16.gmra.mrb[0].mxu0 %v603
        %v692 = vpop.f32.mrb[0].mxu0
        %v693 = vadd.f32 %v608, %v692
        %v694 = vpop.f32.mrb[0].mxu0
        %v695 = vpop.f32.mrb[0].mxu0
        %v696 = vadd.f32 %v608, %v695
        %v697 = vpop.f32.mrb[0].mxu0
        %698 = vdwg.mxu0
        %v699 = vmax.f32 %v693, 0.0
        %v700 = vmax.f32 %v696, 0.0
        %701 = vst [vmem:[%s453] sm:$0xff] %v699
        %702 = vst [vmem:[%s453 + $0x8] sm:$0xff] %v700
        %s703 = scalar_lea.vmem %s387, 32 [#allocation2]
        %v704 = vld [vmem:[%s703] sm:$0xff]
        %v705 = vld [vmem:[%s703 + $0x8] sm:$0xff]
        %v706 = vmul.f32 %v504, %v512
        %v707 = vmul.f32 %v505, %v512
        %v708 = vmul.f32 %v507, %v518
        %v709 = vmul.f32 %v508, %v518
        %v710 = vadd.f32 %v706, %v708
        %v711 = vadd.f32 %v707, %v709
        %v712 = vmul.f32 %v704, %v526
        %v713 = vmul.f32 %v705, %v526
        %v714 = vadd.f32 %v710, %v712
        %v715 = vadd.f32 %v711, %v713
        %v716 = vmul.f32 %v504, %v534
        %v717 = vmul.f32 %v505, %v534
        %v718 = vmul.f32 %v507, %v540
        %v719 = vmul.f32 %v508, %v540
        %v720 = vadd.f32 %v716, %v718
        %v721 = vadd.f32 %v717, %v719
        %v722 = vmul.f32 %v704, %v548
        %v723 = vmul.f32 %v705, %v548
        %v724 = vadd.f32 %v720, %v722
        %v725 = vadd.f32 %v721, %v723
        %v726 = vmul.f32 %v504, %v556
        %v727 = vmul.f32 %v505, %v556
        %v728 = vmul.f32 %v507, %v562
        %v729 = vmul.f32 %v508, %v562
        %v730 = vadd.f32 %v726, %v728
        %v731 = vadd.f32 %v727, %v729
        %v732 = vmul.f32 %v704, %v570
        %v733 = vmul.f32 %v705, %v570
        %v734 = vadd.f32 %v730, %v732
        %v735 = vadd.f32 %v731, %v733
        %v736 = vrot.slane %v714, 7
        %v737 = vrot.slane %v715, 7
        %v738 = vsel %vm577, %v736, %v737
        %v739 = vsel %vm577, %v737, %v736
        %v740 = vsel %vm495, %v739, 0.0
        %v741 = vsel %vm496, %v738, 0.0
        %v742 = vadd.f32 %v724, %v740
        %v743 = vadd.f32 %v725, %v741
        %v744 = vrot.slane %v734, 1
        %v745 = vrot.slane %v735, 1
        %v746 = vsel %vm586, %v744, %v745
        %v747 = vsel %vm586, %v745, %v744
        %v748 = vsel %vm497, %v746, 0.0
        %v749 = vsel %vm498, %v747, 0.0
        %v750 = vadd.f32 %v742, %v748
        %v751 = vadd.f32 %v743, %v749
        %v752 = vadd.f32 %v750, %v597
        %v753 = vadd.f32 %v751, %v597
        %v754 = vmax.f32 %v752, 0.0
        %v755 = vmax.f32 %v753, 0.0
        %v756 = vpack.c.bf16 %v755, %v754
        %757 = vmatprep.subr.bf16.mxu0 0
        %758 = vmatpush1.bf16.msra.mxu0 %v642
        %759 = vmatprep.subr.bf16.mxu0 0
        %760 = vmatpush1.bf16.msra.mxu0 %v643
        %761 = vmatprep.subr.bf16.mxu0 0
        %762 = vmatpush1.bf16.msra.mxu0 %v644
        %763 = vmatprep.subr.bf16.mxu0 0
        %764 = vmatpush1.bf16.msra.mxu0 %v645
        %765 = vmatprep.subr.bf16.mxu0 0
        %766 = vmatpush1.bf16.msra.mxu0 %v646
        %767 = vmatprep.subr.bf16.mxu0 0
        %768 = vmatpush1.bf16.msra.mxu0 %v647
        %769 = vmatprep.subr.bf16.mxu0 0
        %770 = vmatpush1.bf16.msra.mxu0 %v648
        %771 = vmatprep.subr.bf16.mxu0 0
        %772 = vmatpush1.bf16.msra.mxu0 %v649
        %773 = vmatprep.subr.bf16.mxu0 0
        %774 = vmatpush1.bf16.msra.mxu0 0
        %775 = vmatprep.subr.bf16.mxu0 0
        %776 = vmatpush1.bf16.msra.mxu0 0
        %777 = vmatprep.subr.bf16.mxu0 0
        %778 = vmatpush1.bf16.msra.mxu0 0
        %779 = vmatprep.subr.bf16.mxu0 0
        %780 = vmatpush1.bf16.msra.mxu0 0
        %781 = vmatprep.subr.bf16.mxu0 0
        %782 = vmatpush1.bf16.msra.mxu0 0
        %783 = vmatprep.subr.bf16.mxu0 0
        %784 = vmatpush1.bf16.msra.mxu0 0
        %785 = vmatprep.subr.bf16.mxu0 0
        %786 = vmatpush1.bf16.msra.mxu0 0
        %787 = vmatprep.subr.bf16.mxu0 0
        %788 = vmatpush1.bf16.msra.mxu0 0
        %789 = vmatprep.mubr.bf16.mxu0 0
        %790 = vmatmul.mubr.bf16.gmra.mrb[0].mxu0 %v756
        %v791 = vpop.f32.mrb[0].mxu0
        %v792 = vadd.f32 %v608, %v791
        %v793 = vpop.f32.mrb[0].mxu0
        %v794 = vpop.f32.mrb[0].mxu0
        %v795 = vadd.f32 %v608, %v794
        %v796 = vpop.f32.mrb[0].mxu0
        %797 = vdwg.mxu0
        %v798 = vmax.f32 %v792, 0.0
        %v799 = vmax.f32 %v795, 0.0
        %s800 = scalar_lea.vmem %s453, 16 [#allocation11]
        %801 = vst [vmem:[%s800] sm:$0xff] %v798
        %802 = vst [vmem:[%s800 + $0x8] sm:$0xff] %v799
        %s803 = scalar_lea.vmem %s387, 48 [#allocation2]
        %v804 = vld [vmem:[%s803] sm:$0xff]
        %v805 = vld [vmem:[%s803 + $0x8] sm:$0xff]
        %v806 = vmul.f32 %v507, %v512
        %v807 = vmul.f32 %v508, %v512
        %v808 = vmul.f32 %v704, %v518
        %v809 = vmul.f32 %v705, %v518
        %v810 = vadd.f32 %v806, %v808
        %v811 = vadd.f32 %v807, %v809
        %v812 = vmul.f32 %v804, %v526
        %v813 = vmul.f32 %v805, %v526
        %v814 = vadd.f32 %v810, %v812
        %v815 = vadd.f32 %v811, %v813
        %v816 = vmul.f32 %v507, %v534
        %v817 = vmul.f32 %v508, %v534
        %v818 = vmul.f32 %v704, %v540
        %v819 = vmul.f32 %v705, %v540
        %v820 = vadd.f32 %v816, %v818
        %v821 = vadd.f32 %v817, %v819
        %v822 = vmul.f32 %v804, %v548
        %v823 = vmul.f32 %v805, %v548
        %v824 = vadd.f32 %v820, %v822
        %v825 = vadd.f32 %v821, %v823
        %v826 = vmul.f32 %v507, %v556
        %v827 = vmul.f32 %v508, %v556
        %v828 = vmul.f32 %v704, %v562
        %v829 = vmul.f32 %v705, %v562
        %v830 = vadd.f32 %v826, %v828
        %v831 = vadd.f32 %v827, %v829
        %v832 = vmul.f32 %v804, %v570
        %v833 = vmul.f32 %v805, %v570
        %v834 = vadd.f32 %v830, %v832
        %v835 = vadd.f32 %v831, %v833
        %v836 = vrot.slane %v814, 7
        %v837 = vrot.slane %v815, 7
        %v838 = vsel %vm577, %v836, %v837
        %v839 = vsel %vm577, %v837, %v836
        %v840 = vsel %vm495, %v839, 0.0
        %v841 = vsel %vm496, %v838, 0.0
        %v842 = vadd.f32 %v824, %v840
        %v843 = vadd.f32 %v825, %v841
        %v844 = vrot.slane %v834, 1
        %v845 = vrot.slane %v835, 1
        %v846 = vsel %vm586, %v844, %v845
        %v847 = vsel %vm586, %v845, %v844
        %v848 = vsel %vm497, %v846, 0.0
        %v849 = vsel %vm498, %v847, 0.0
        %v850 = vadd.f32 %v842, %v848
        %v851 = vadd.f32 %v843, %v849
        %v852 = vadd.f32 %v850, %v597
        %v853 = vadd.f32 %v851, %v597
        %v854 = vmax.f32 %v852, 0.0
        %v855 = vmax.f32 %v853, 0.0
        %v856 = vpack.c.bf16 %v855, %v854
        %857 = vmatprep.subr.bf16.mxu0 0
        %858 = vmatpush1.bf16.msra.mxu0 %v642
        %859 = vmatprep.subr.bf16.mxu0 0
        %860 = vmatpush1.bf16.msra.mxu0 %v643
        %861 = vmatprep.subr.bf16.mxu0 0
        %862 = vmatpush1.bf16.msra.mxu0 %v644
        %863 = vmatprep.subr.bf16.mxu0 0
        %864 = vmatpush1.bf16.msra.mxu0 %v645
        %865 = vmatprep.subr.bf16.mxu0 0
        %866 = vmatpush1.bf16.msra.mxu0 %v646
        %867 = vmatprep.subr.bf16.mxu0 0
        %868 = vmatpush1.bf16.msra.mxu0 %v647
        %869 = vmatprep.subr.bf16.mxu0 0
        %870 = vmatpush1.bf16.msra.mxu0 %v648
        %871 = vmatprep.subr.bf16.mxu0 0
        %872 = vmatpush1.bf16.msra.mxu0 %v649
        %873 = vmatprep.subr.bf16.mxu0 0
        %874 = vmatpush1.bf16.msra.mxu0 0
        %875 = vmatprep.subr.bf16.mxu0 0
        %876 = vmatpush1.bf16.msra.mxu0 0
        %877 = vmatprep.subr.bf16.mxu0 0
        %878 = vmatpush1.bf16.msra.mxu0 0
        %879 = vmatprep.subr.bf16.mxu0 0
        %880 = vmatpush1.bf16.msra.mxu0 0
        %881 = vmatprep.subr.bf16.mxu0 0
        %882 = vmatpush1.bf16.msra.mxu0 0
        %883 = vmatprep.subr.bf16.mxu0 0
        %884 = vmatpush1.bf16.msra.mxu0 0
        %885 = vmatprep.subr.bf16.mxu0 0
        %886 = vmatpush1.bf16.msra.mxu0 0
        %887 = vmatprep.subr.bf16.mxu0 0
        %888 = vmatpush1.bf16.msra.mxu0 0
        %889 = vmatprep.mubr.bf16.mxu0 0
        %890 = vmatmul.mubr.bf16.gmra.mrb[0].mxu0 %v856
        %v891 = vpop.f32.mrb[0].mxu0
        %v892 = vadd.f32 %v608, %v891
        %v893 = vpop.f32.mrb[0].mxu0
        %v894 = vpop.f32.mrb[0].mxu0
        %v895 = vadd.f32 %v608, %v894
        %v896 = vpop.f32.mrb[0].mxu0
        %897 = vdwg.mxu0
        %v898 = vmax.f32 %v892, 0.0
        %v899 = vmax.f32 %v895, 0.0
        %s900 = scalar_lea.vmem %s453, 32 [#allocation11]
        %901 = vst [vmem:[%s900] sm:$0xff] %v898
        %902 = vst [vmem:[%s900 + $0x8] sm:$0xff] %v899
        %s903 = scalar_lea.vmem %s387, 64 [#allocation2]
        %v904 = vld [vmem:[%s903] sm:$0xff]
        %v905 = vld [vmem:[%s903 + $0x8] sm:$0xff]
        %v906 = vmul.f32 %v704, %v512
        %v907 = vmul.f32 %v705, %v512
        %v908 = vmul.f32 %v804, %v518
        %v909 = vmul.f32 %v805, %v518
        %v910 = vadd.f32 %v906, %v908
        %v911 = vadd.f32 %v907, %v909
        %v912 = vmul.f32 %v904, %v526
        %v913 = vmul.f32 %v905, %v526
        %v914 = vadd.f32 %v910, %v912
        %v915 = vadd.f32 %v911, %v913
        %v916 = vmul.f32 %v704, %v534
        %v917 = vmul.f32 %v705, %v534
        %v918 = vmul.f32 %v804, %v540
        %v919 = vmul.f32 %v805, %v540
        %v920 = vadd.f32 %v916, %v918
        %v921 = vadd.f32 %v917, %v919
        %v922 = vmul.f32 %v904, %v548
        %v923 = vmul.f32 %v905, %v548
        %v924 = vadd.f32 %v920, %v922
        %v925 = vadd.f32 %v921, %v923
        %v926 = vmul.f32 %v704, %v556
        %v927 = vmul.f32 %v705, %v556
        %v928 = vmul.f32 %v804, %v562
        %v929 = vmul.f32 %v805, %v562
        %v930 = vadd.f32 %v926, %v928
        %v931 = vadd.f32 %v927, %v929
        %v932 = vmul.f32 %v904, %v570
        %v933 = vmul.f32 %v905, %v570
        %v934 = vadd.f32 %v930, %v932
        %v935 = vadd.f32 %v931, %v933
        %v936 = vrot.slane %v914, 7
        %v937 = vrot.slane %v915, 7
        %v938 = vsel %vm577, %v936, %v937
        %v939 = vsel %vm577, %v937, %v936
        %v940 = vsel %vm495, %v939, 0.0
        %v941 = vsel %vm496, %v938, 0.0
        %v942 = vadd.f32 %v924, %v940
        %v943 = vadd.f32 %v925, %v941
        %v944 = vrot.slane %v934, 1
        %v945 = vrot.slane %v935, 1
        %v946 = vsel %vm586, %v944, %v945
        %v947 = vsel %vm586, %v945, %v944
        %v948 = vsel %vm497, %v946, 0.0
        %v949 = vsel %vm498, %v947, 0.0
        %v950 = vadd.f32 %v942, %v948
        %v951 = vadd.f32 %v943, %v949
        %v952 = vadd.f32 %v950, %v597
        %v953 = vadd.f32 %v951, %v597
        %v954 = vmax.f32 %v952, 0.0
        %v955 = vmax.f32 %v953, 0.0
        %v956 = vpack.c.bf16 %v955, %v954
        %957 = vmatprep.subr.bf16.mxu0 0
        %958 = vmatpush1.bf16.msra.mxu0 %v642
        %959 = vmatprep.subr.bf16.mxu0 0
        %960 = vmatpush1.bf16.msra.mxu0 %v643
        %961 = vmatprep.subr.bf16.mxu0 0
        %962 = vmatpush1.bf16.msra.mxu0 %v644
        %963 = vmatprep.subr.bf16.mxu0 0
        %964 = vmatpush1.bf16.msra.mxu0 %v645
        %965 = vmatprep.subr.bf16.mxu0 0
        %966 = vmatpush1.bf16.msra.mxu0 %v646
        %967 = vmatprep.subr.bf16.mxu0 0
        %968 = vmatpush1.bf16.msra.mxu0 %v647
        %969 = vmatprep.subr.bf16.mxu0 0
        %970 = vmatpush1.bf16.msra.mxu0 %v648
        %971 = vmatprep.subr.bf16.mxu0 0
        %972 = vmatpush1.bf16.msra.mxu0 %v649
        %973 = vmatprep.subr.bf16.mxu0 0
        %974 = vmatpush1.bf16.msra.mxu0 0
        %975 = vmatprep.subr.bf16.mxu0 0
        %976 = vmatpush1.bf16.msra.mxu0 0
        %977 = vmatprep.subr.bf16.mxu0 0
        %978 = vmatpush1.bf16.msra.mxu0 0
        %979 = vmatprep.subr.bf16.mxu0 0
        %980 = vmatpush1.bf16.msra.mxu0 0
        %981 = vmatprep.subr.bf16.mxu0 0
        %982 = vmatpush1.bf16.msra.mxu0 0
        %983 = vmatprep.subr.bf16.mxu0 0
        %984 = vmatpush1.bf16.msra.mxu0 0
        %985 = vmatprep.subr.bf16.mxu0 0
        %986 = vmatpush1.bf16.msra.mxu0 0
        %987 = vmatprep.subr.bf16.mxu0 0
        %988 = vmatpush1.bf16.msra.mxu0 0
        %989 = vmatprep.mubr.bf16.mxu0 0
        %990 = vmatmul.mubr.bf16.gmra.mrb[0].mxu0 %v956
        %v991 = vpop.f32.mrb[0].mxu0
        %v992 = vadd.f32 %v608, %v991
        %v993 = vpop.f32.mrb[0].mxu0
        %v994 = vpop.f32.mrb[0].mxu0
        %v995 = vadd.f32 %v608, %v994
        %v996 = vpop.f32.mrb[0].mxu0
        %997 = vdwg.mxu0
        %v998 = vmax.f32 %v992, 0.0
        %v999 = vmax.f32 %v995, 0.0
        %s1000 = scalar_lea.vmem %s453, 48 [#allocation11]
        %1001 = vst [vmem:[%s1000] sm:$0xff] %v998
        %1002 = vst [vmem:[%s1000 + $0x8] sm:$0xff] %v999
        %s1003 = scalar_lea.vmem %s387, 80 [#allocation2]
        %v1004 = vld [vmem:[%s1003] sm:$0xff]
        %v1005 = vld [vmem:[%s1003 + $0x8] sm:$0xff]
        %v1006 = vmul.f32 %v804, %v512
        %v1007 = vmul.f32 %v805, %v512
        %v1008 = vmul.f32 %v904, %v518
        %v1009 = vmul.f32 %v905, %v518
        %v1010 = vadd.f32 %v1006, %v1008
        %v1011 = vadd.f32 %v1007, %v1009
        %v1012 = vmul.f32 %v1004, %v526
        %v1013 = vmul.f32 %v1005, %v526
        %v1014 = vadd.f32 %v1010, %v1012
        %v1015 = vadd.f32 %v1011, %v1013
        %v1016 = vmul.f32 %v804, %v534
        %v1017 = vmul.f32 %v805, %v534
        %v1018 = vmul.f32 %v904, %v540
        %v1019 = vmul.f32 %v905, %v540
        %v1020 = vadd.f32 %v1016, %v1018
        %v1021 = vadd.f32 %v1017, %v1019
        %v1022 = vmul.f32 %v1004, %v548
        %v1023 = vmul.f32 %v1005, %v548
        %v1024 = vadd.f32 %v1020, %v1022
        %v1025 = vadd.f32 %v1021, %v1023
        %v1026 = vmul.f32 %v804, %v556
        %v1027 = vmul.f32 %v805, %v556
        %v1028 = vmul.f32 %v904, %v562
        %v1029 = vmul.f32 %v905, %v562
        %v1030 = vadd.f32 %v1026, %v1028
        %v1031 = vadd.f32 %v1027, %v1029
        %v1032 = vmul.f32 %v1004, %v570
        %v1033 = vmul.f32 %v1005, %v570
        %v1034 = vadd.f32 %v1030, %v1032
        %v1035 = vadd.f32 %v1031, %v1033
        %v1036 = vrot.slane %v1014, 7
        %v1037 = vrot.slane %v1015, 7
        %v1038 = vsel %vm577, %v1036, %v1037
        %v1039 = vsel %vm577, %v1037, %v1036
        %v1040 = vsel %vm495, %v1039, 0.0
        %v1041 = vsel %vm496, %v1038, 0.0
        %v1042 = vadd.f32 %v1024, %v1040
        %v1043 = vadd.f32 %v1025, %v1041
        %v1044 = vrot.slane %v1034, 1
        %v1045 = vrot.slane %v1035, 1
        %v1046 = vsel %vm586, %v1044, %v1045
        %v1047 = vsel %vm586, %v1045, %v1044
        %v1048 = vsel %vm497, %v1046, 0.0
        %v1049 = vsel %vm498, %v1047, 0.0
        %v1050 = vadd.f32 %v1042, %v1048
        %v1051 = vadd.f32 %v1043, %v1049
        %v1052 = vadd.f32 %v1050, %v597
        %v1053 = vadd.f32 %v1051, %v597
        %v1054 = vmax.f32 %v1052, 0.0
        %v1055 = vmax.f32 %v1053, 0.0
        %v1056 = vpack.c.bf16 %v1055, %v1054
        %1057 = vmatprep.subr.bf16.mxu0 0
        %1058 = vmatpush1.bf16.msra.mxu0 %v642
        %1059 = vmatprep.subr.bf16.mxu0 0
        %1060 = vmatpush1.bf16.msra.mxu0 %v643
        %1061 = vmatprep.subr.bf16.mxu0 0
        %1062 = vmatpush1.bf16.msra.mxu0 %v644
        %1063 = vmatprep.subr.bf16.mxu0 0
        %1064 = vmatpush1.bf16.msra.mxu0 %v645
        %1065 = vmatprep.subr.bf16.mxu0 0
        %1066 = vmatpush1.bf16.msra.mxu0 %v646
        %1067 = vmatprep.subr.bf16.mxu0 0
        %1068 = vmatpush1.bf16.msra.mxu0 %v647
        %1069 = vmatprep.subr.bf16.mxu0 0
        %1070 = vmatpush1.bf16.msra.mxu0 %v648
        %1071 = vmatprep.subr.bf16.mxu0 0
        %1072 = vmatpush1.bf16.msra.mxu0 %v649
        %1073 = vmatprep.subr.bf16.mxu0 0
        %1074 = vmatpush1.bf16.msra.mxu0 0
        %1075 = vmatprep.subr.bf16.mxu0 0
        %1076 = vmatpush1.bf16.msra.mxu0 0
        %1077 = vmatprep.subr.bf16.mxu0 0
        %1078 = vmatpush1.bf16.msra.mxu0 0
        %1079 = vmatprep.subr.bf16.mxu0 0
        %1080 = vmatpush1.bf16.msra.mxu0 0
        %1081 = vmatprep.subr.bf16.mxu0 0
        %1082 = vmatpush1.bf16.msra.mxu0 0
        %1083 = vmatprep.subr.bf16.mxu0 0
        %1084 = vmatpush1.bf16.msra.mxu0 0
        %1085 = vmatprep.subr.bf16.mxu0 0
        %1086 = vmatpush1.bf16.msra.mxu0 0
        %1087 = vmatprep.subr.bf16.mxu0 0
        %1088 = vmatpush1.bf16.msra.mxu0 0
        %1089 = vmatprep.mubr.bf16.mxu0 0
        %1090 = vmatmul.mubr.bf16.gmra.mrb[0].mxu0 %v1056
        %v1091 = vpop.f32.mrb[0].mxu0
        %v1092 = vadd.f32 %v608, %v1091
        %v1093 = vpop.f32.mrb[0].mxu0
        %v1094 = vpop.f32.mrb[0].mxu0
        %v1095 = vadd.f32 %v608, %v1094
        %v1096 = vpop.f32.mrb[0].mxu0
        %1097 = vdwg.mxu0
        %v1098 = vmax.f32 %v1092, 0.0
        %v1099 = vmax.f32 %v1095, 0.0
        %s1100 = scalar_lea.vmem %s453, 64 [#allocation11]
        %1101 = vst [vmem:[%s1100] sm:$0xff] %v1098
        %1102 = vst [vmem:[%s1100 + $0x8] sm:$0xff] %v1099
        %s1103 = scalar_lea.vmem %s387, 96 [#allocation2]
        %v1104 = vld [vmem:[%s1103] sm:$0xff]
        %v1105 = vld [vmem:[%s1103 + $0x8] sm:$0xff]
        %v1106 = vmul.f32 %v904, %v512
        %v1107 = vmul.f32 %v905, %v512
        %v1108 = vmul.f32 %v1004, %v518
        %v1109 = vmul.f32 %v1005, %v518
        %v1110 = vadd.f32 %v1106, %v1108
        %v1111 = vadd.f32 %v1107, %v1109
        %v1112 = vmul.f32 %v1104, %v526
        %v1113 = vmul.f32 %v1105, %v526
        %v1114 = vadd.f32 %v1110, %v1112
        %v1115 = vadd.f32 %v1111, %v1113
        %v1116 = vmul.f32 %v904, %v534
        %v1117 = vmul.f32 %v905, %v534
        %v1118 = vmul.f32 %v1004, %v540
        %v1119 = vmul.f32 %v1005, %v540
        %v1120 = vadd.f32 %v1116, %v1118
        %v1121 = vadd.f32 %v1117, %v1119
        %v1122 = vmul.f32 %v1104, %v548
        %v1123 = vmul.f32 %v1105, %v548
        %v1124 = vadd.f32 %v1120, %v1122
        %v1125 = vadd.f32 %v1121, %v1123
        %v1126 = vmul.f32 %v904, %v556
        %v1127 = vmul.f32 %v905, %v556
        %v1128 = vmul.f32 %v1004, %v562
        %v1129 = vmul.f32 %v1005, %v562
        %v1130 = vadd.f32 %v1126, %v1128
        %v1131 = vadd.f32 %v1127, %v1129
        %v1132 = vmul.f32 %v1104, %v570
        %v1133 = vmul.f32 %v1105, %v570
        %v1134 = vadd.f32 %v1130, %v1132
        %v1135 = vadd.f32 %v1131, %v1133
        %v1136 = vrot.slane %v1114, 7
        %v1137 = vrot.slane %v1115, 7
        %v1138 = vsel %vm577, %v1136, %v1137
        %v1139 = vsel %vm577, %v1137, %v1136
        %v1140 = vsel %vm495, %v1139, 0.0
        %v1141 = vsel %vm496, %v1138, 0.0
        %v1142 = vadd.f32 %v1124, %v1140
        %v1143 = vadd.f32 %v1125, %v1141
        %v1144 = vrot.slane %v1134, 1
        %v1145 = vrot.slane %v1135, 1
        %v1146 = vsel %vm586, %v1144, %v1145
        %v1147 = vsel %vm586, %v1145, %v1144
        %v1148 = vsel %vm497, %v1146, 0.0
        %v1149 = vsel %vm498, %v1147, 0.0
        %v1150 = vadd.f32 %v1142, %v1148
        %v1151 = vadd.f32 %v1143, %v1149
        %v1152 = vadd.f32 %v1150, %v597
        %v1153 = vadd.f32 %v1151, %v597
        %v1154 = vmax.f32 %v1152, 0.0
        %v1155 = vmax.f32 %v1153, 0.0
        %v1156 = vpack.c.bf16 %v1155, %v1154
        %1157 = vmatprep.subr.bf16.mxu0 0
        %1158 = vmatpush1.bf16.msra.mxu0 %v642
        %1159 = vmatprep.subr.bf16.mxu0 0
        %1160 = vmatpush1.bf16.msra.mxu0 %v643
        %1161 = vmatprep.subr.bf16.mxu0 0
        %1162 = vmatpush1.bf16.msra.mxu0 %v644
        %1163 = vmatprep.subr.bf16.mxu0 0
        %1164 = vmatpush1.bf16.msra.mxu0 %v645
        %1165 = vmatprep.subr.bf16.mxu0 0
        %1166 = vmatpush1.bf16.msra.mxu0 %v646
        %1167 = vmatprep.subr.bf16.mxu0 0
        %1168 = vmatpush1.bf16.msra.mxu0 %v647
        %1169 = vmatprep.subr.bf16.mxu0 0
        %1170 = vmatpush1.bf16.msra.mxu0 %v648
        %1171 = vmatprep.subr.bf16.mxu0 0
        %1172 = vmatpush1.bf16.msra.mxu0 %v649
        %1173 = vmatprep.subr.bf16.mxu0 0
        %1174 = vmatpush1.bf16.msra.mxu0 0
        %1175 = vmatprep.subr.bf16.mxu0 0
        %1176 = vmatpush1.bf16.msra.mxu0 0
        %1177 = vmatprep.subr.bf16.mxu0 0
        %1178 = vmatpush1.bf16.msra.mxu0 0
        %1179 = vmatprep.subr.bf16.mxu0 0
        %1180 = vmatpush1.bf16.msra.mxu0 0
        %1181 = vmatprep.subr.bf16.mxu0 0
        %1182 = vmatpush1.bf16.msra.mxu0 0
        %1183 = vmatprep.subr.bf16.mxu0 0
        %1184 = vmatpush1.bf16.msra.mxu0 0
        %1185 = vmatprep.subr.bf16.mxu0 0
        %1186 = vmatpush1.bf16.msra.mxu0 0
        %1187 = vmatprep.subr.bf16.mxu0 0
        %1188 = vmatpush1.bf16.msra.mxu0 0
        %1189 = vmatprep.mubr.bf16.mxu0 0
        %1190 = vmatmul.mubr.bf16.gmra.mrb[0].mxu0 %v1156
        %v1191 = vpop.f32.mrb[0].mxu0
        %v1192 = vadd.f32 %v608, %v1191
        %v1193 = vpop.f32.mrb[0].mxu0
        %v1194 = vpop.f32.mrb[0].mxu0
        %v1195 = vadd.f32 %v608, %v1194
        %v1196 = vpop.f32.mrb[0].mxu0
        %1197 = vdwg.mxu0
        %v1198 = vmax.f32 %v1192, 0.0
        %v1199 = vmax.f32 %v1195, 0.0
        %s1200 = scalar_lea.vmem %s453, 80 [#allocation11]
        %1201 = vst [vmem:[%s1200] sm:$0xff] %v1198
        %1202 = vst [vmem:[%s1200 + $0x8] sm:$0xff] %v1199
        %s1203 = scalar_lea.vmem %s387, 112 [#allocation2]
        %v1204 = vld [vmem:[%s1203] sm:$0xff]
        %v1205 = vld [vmem:[%s1203 + $0x8] sm:$0xff]
        %v1206 = vmul.f32 %v1004, %v512
        %v1207 = vmul.f32 %v1005, %v512
        %v1208 = vmul.f32 %v1104, %v518
        %v1209 = vmul.f32 %v1105, %v518
        %v1210 = vadd.f32 %v1206, %v1208
        %v1211 = vadd.f32 %v1207, %v1209
        %v1212 = vmul.f32 %v1204, %v526
        %v1213 = vmul.f32 %v1205, %v526
        %v1214 = vadd.f32 %v1210, %v1212
        %v1215 = vadd.f32 %v1211, %v1213
        %v1216 = vmul.f32 %v1004, %v534
        %v1217 = vmul.f32 %v1005, %v534
        %v1218 = vmul.f32 %v1104, %v540
        %v1219 = vmul.f32 %v1105, %v540
        %v1220 = vadd.f32 %v1216, %v1218
        %v1221 = vadd.f32 %v1217, %v1219
        %v1222 = vmul.f32 %v1204, %v548
        %v1223 = vmul.f32 %v1205, %v548
        %v1224 = vadd.f32 %v1220, %v1222
        %v1225 = vadd.f32 %v1221, %v1223
        %v1226 = vmul.f32 %v1004, %v556
        %v1227 = vmul.f32 %v1005, %v556
        %v1228 = vmul.f32 %v1104, %v562
        %v1229 = vmul.f32 %v1105, %v562
        %v1230 = vadd.f32 %v1226, %v1228
        %v1231 = vadd.f32 %v1227, %v1229
        %v1232 = vmul.f32 %v1204, %v570
        %v1233 = vmul.f32 %v1205, %v570
        %v1234 = vadd.f32 %v1230, %v1232
        %v1235 = vadd.f32 %v1231, %v1233
        %v1236 = vrot.slane %v1214, 7
        %v1237 = vrot.slane %v1215, 7
        %v1238 = vsel %vm577, %v1236, %v1237
        %v1239 = vsel %vm577, %v1237, %v1236
        %v1240 = vsel %vm495, %v1239, 0.0
        %v1241 = vsel %vm496, %v1238, 0.0
        %v1242 = vadd.f32 %v1224, %v1240
        %v1243 = vadd.f32 %v1225, %v1241
        %v1244 = vrot.slane %v1234, 1
        %v1245 = vrot.slane %v1235, 1
        %v1246 = vsel %vm586, %v1244, %v1245
        %v1247 = vsel %vm586, %v1245, %v1244
        %v1248 = vsel %vm497, %v1246, 0.0
        %v1249 = vsel %vm498, %v1247, 0.0
        %v1250 = vadd.f32 %v1242, %v1248
        %v1251 = vadd.f32 %v1243, %v1249
        %v1252 = vadd.f32 %v1250, %v597
        %v1253 = vadd.f32 %v1251, %v597
        %v1254 = vmax.f32 %v1252, 0.0
        %v1255 = vmax.f32 %v1253, 0.0
        %v1256 = vpack.c.bf16 %v1255, %v1254
        %1257 = vmatprep.subr.bf16.mxu0 0
        %1258 = vmatpush1.bf16.msra.mxu0 %v642
        %1259 = vmatprep.subr.bf16.mxu0 0
        %1260 = vmatpush1.bf16.msra.mxu0 %v643
        %1261 = vmatprep.subr.bf16.mxu0 0
        %1262 = vmatpush1.bf16.msra.mxu0 %v644
        %1263 = vmatprep.subr.bf16.mxu0 0
        %1264 = vmatpush1.bf16.msra.mxu0 %v645
        %1265 = vmatprep.subr.bf16.mxu0 0
        %1266 = vmatpush1.bf16.msra.mxu0 %v646
        %1267 = vmatprep.subr.bf16.mxu0 0
        %1268 = vmatpush1.bf16.msra.mxu0 %v647
        %1269 = vmatprep.subr.bf16.mxu0 0
        %1270 = vmatpush1.bf16.msra.mxu0 %v648
        %1271 = vmatprep.subr.bf16.mxu0 0
        %1272 = vmatpush1.bf16.msra.mxu0 %v649
        %1273 = vmatprep.subr.bf16.mxu0 0
        %1274 = vmatpush1.bf16.msra.mxu0 0
        %1275 = vmatprep.subr.bf16.mxu0 0
        %1276 = vmatpush1.bf16.msra.mxu0 0
        %1277 = vmatprep.subr.bf16.mxu0 0
        %1278 = vmatpush1.bf16.msra.mxu0 0
        %1279 = vmatprep.subr.bf16.mxu0 0
        %1280 = vmatpush1.bf16.msra.mxu0 0
        %1281 = vmatprep.subr.bf16.mxu0 0
        %1282 = vmatpush1.bf16.msra.mxu0 0
        %1283 = vmatprep.subr.bf16.mxu0 0
        %1284 = vmatpush1.bf16.msra.mxu0 0
        %1285 = vmatprep.subr.bf16.mxu0 0
        %1286 = vmatpush1.bf16.msra.mxu0 0
        %1287 = vmatprep.subr.bf16.mxu0 0
        %1288 = vmatpush1.bf16.msra.mxu0 0
        %1289 = vmatprep.mubr.bf16.mxu0 0
        %1290 = vmatmul.mubr.bf16.gmra.mrb[0].mxu0 %v1256
        %v1291 = vpop.f32.mrb[0].mxu0
        %v1292 = vadd.f32 %v608, %v1291
        %v1293 = vpop.f32.mrb[0].mxu0
        %v1294 = vpop.f32.mrb[0].mxu0
        %v1295 = vadd.f32 %v608, %v1294
        %v1296 = vpop.f32.mrb[0].mxu0
        %1297 = vdwg.mxu0
        %v1298 = vmax.f32 %v1292, 0.0
        %v1299 = vmax.f32 %v1295, 0.0
        %s1300 = scalar_lea.vmem %s453, 96 [#allocation11]
        %1301 = vst [vmem:[%s1300] sm:$0xff] %v1298
        %1302 = vst [vmem:[%s1300 + $0x8] sm:$0xff] %v1299
        %s1303 = scalar_lea.vmem %s387, 128 [#allocation2]
        %v1304 = vld [vmem:[%s1303] sm:$0xff]
        %v1305 = vld [vmem:[%s1303 + $0x8] sm:$0xff]
        %v1306 = vmul.f32 %v1104, %v512
        %v1307 = vmul.f32 %v1105, %v512
        %v1308 = vmul.f32 %v1204, %v518
        %v1309 = vmul.f32 %v1205, %v518
        %v1310 = vadd.f32 %v1306, %v1308
        %v1311 = vadd.f32 %v1307, %v1309
        %v1312 = vmul.f32 %v1304, %v526
        %v1313 = vmul.f32 %v1305, %v526
        %v1314 = vadd.f32 %v1310, %v1312
        %v1315 = vadd.f32 %v1311, %v1313
        %v1316 = vmul.f32 %v1104, %v534
        %v1317 = vmul.f32 %v1105, %v534
        %v1318 = vmul.f32 %v1204, %v540
        %v1319 = vmul.f32 %v1205, %v540
        %v1320 = vadd.f32 %v1316, %v1318
        %v1321 = vadd.f32 %v1317, %v1319
        %v1322 = vmul.f32 %v1304, %v548
        %v1323 = vmul.f32 %v1305, %v548
        %v1324 = vadd.f32 %v1320, %v1322
        %v1325 = vadd.f32 %v1321, %v1323
        %v1326 = vmul.f32 %v1104, %v556
        %v1327 = vmul.f32 %v1105, %v556
        %v1328 = vmul.f32 %v1204, %v562
        %v1329 = vmul.f32 %v1205, %v562
        %v1330 = vadd.f32 %v1326, %v1328
        %v1331 = vadd.f32 %v1327, %v1329
        %v1332 = vmul.f32 %v1304, %v570
        %v1333 = vmul.f32 %v1305, %v570
        %v1334 = vadd.f32 %v1330, %v1332
        %v1335 = vadd.f32 %v1331, %v1333
        %v1336 = vrot.slane %v1314, 7
        %v1337 = vrot.slane %v1315, 7
        %v1338 = vsel %vm577, %v1336, %v1337
        %v1339 = vsel %vm577, %v1337, %v1336
        %v1340 = vsel %vm495, %v1339, 0.0
        %v1341 = vsel %vm496, %v1338, 0.0
        %v1342 = vadd.f32 %v1324, %v1340
        %v1343 = vadd.f32 %v1325, %v1341
        %v1344 = vrot.slane %v1334, 1
        %v1345 = vrot.slane %v1335, 1
        %v1346 = vsel %vm586, %v1344, %v1345
        %v1347 = vsel %vm586, %v1345, %v1344
        %v1348 = vsel %vm497, %v1346, 0.0
        %v1349 = vsel %vm498, %v1347, 0.0
        %v1350 = vadd.f32 %v1342, %v1348
        %v1351 = vadd.f32 %v1343, %v1349
        %v1352 = vadd.f32 %v1350, %v597
        %v1353 = vadd.f32 %v1351, %v597
        %v1354 = vmax.f32 %v1352, 0.0
        %v1355 = vmax.f32 %v1353, 0.0
        %v1356 = vpack.c.bf16 %v1355, %v1354
        %1357 = vmatprep.subr.bf16.mxu0 0
        %1358 = vmatpush1.bf16.msra.mxu0 %v642
        %1359 = vmatprep.subr.bf16.mxu0 0
        %1360 = vmatpush1.bf16.msra.mxu0 %v643
        %1361 = vmatprep.subr.bf16.mxu0 0
        %1362 = vmatpush1.bf16.msra.mxu0 %v644
        %1363 = vmatprep.subr.bf16.mxu0 0
        %1364 = vmatpush1.bf16.msra.mxu0 %v645
        %1365 = vmatprep.subr.bf16.mxu0 0
        %1366 = vmatpush1.bf16.msra.mxu0 %v646
        %1367 = vmatprep.subr.bf16.mxu0 0
        %1368 = vmatpush1.bf16.msra.mxu0 %v647
        %1369 = vmatprep.subr.bf16.mxu0 0
        %1370 = vmatpush1.bf16.msra.mxu0 %v648
        %1371 = vmatprep.subr.bf16.mxu0 0
        %1372 = vmatpush1.bf16.msra.mxu0 %v649
        %1373 = vmatprep.subr.bf16.mxu0 0
        %1374 = vmatpush1.bf16.msra.mxu0 0
        %1375 = vmatprep.subr.bf16.mxu0 0
        %1376 = vmatpush1.bf16.msra.mxu0 0
        %1377 = vmatprep.subr.bf16.mxu0 0
        %1378 = vmatpush1.bf16.msra.mxu0 0
        %1379 = vmatprep.subr.bf16.mxu0 0
        %1380 = vmatpush1.bf16.msra.mxu0 0
        %1381 = vmatprep.subr.bf16.mxu0 0
        %1382 = vmatpush1.bf16.msra.mxu0 0
        %1383 = vmatprep.subr.bf16.mxu0 0
        %1384 = vmatpush1.bf16.msra.mxu0 0
        %1385 = vmatprep.subr.bf16.mxu0 0
        %1386 = vmatpush1.bf16.msra.mxu0 0
        %1387 = vmatprep.subr.bf16.mxu0 0
        %1388 = vmatpush1.bf16.msra.mxu0 0
        %1389 = vmatprep.mubr.bf16.mxu0 0
        %1390 = vmatmul.mubr.bf16.gmra.mrb[0].mxu0 %v1356
        %v1391 = vpop.f32.mrb[0].mxu0
        %v1392 = vadd.f32 %v608, %v1391
        %v1393 = vpop.f32.mrb[0].mxu0
        %v1394 = vpop.f32.mrb[0].mxu0
        %v1395 = vadd.f32 %v608, %v1394
        %v1396 = vpop.f32.mrb[0].mxu0
        %1397 = vdwg.mxu0
        %v1398 = vmax.f32 %v1392, 0.0
        %v1399 = vmax.f32 %v1395, 0.0
        %s1400 = scalar_lea.vmem %s453, 112 [#allocation11]
        %1401 = vst [vmem:[%s1400] sm:$0xff] %v1398
        %1402 = vst [vmem:[%s1400 + $0x8] sm:$0xff] %v1399
        %s1403 = scalar_lea.vmem %s387, 144 [#allocation2]
        %v1404 = vld [vmem:[%s1403] sm:$0xff]
        %v1405 = vld [vmem:[%s1403 + $0x8] sm:$0xff]
        %v1406 = vmul.f32 %v1204, %v512
        %v1407 = vmul.f32 %v1205, %v512
        %v1408 = vmul.f32 %v1304, %v518
        %v1409 = vmul.f32 %v1305, %v518
        %v1410 = vadd.f32 %v1406, %v1408
        %v1411 = vadd.f32 %v1407, %v1409
        %v1412 = vmul.f32 %v1404, %v526
        %v1413 = vmul.f32 %v1405, %v526
        %v1414 = vadd.f32 %v1410, %v1412
        %v1415 = vadd.f32 %v1411, %v1413
        %v1416 = vmul.f32 %v1204, %v534
        %v1417 = vmul.f32 %v1205, %v534
        %v1418 = vmul.f32 %v1304, %v540
        %v1419 = vmul.f32 %v1305, %v540
        %v1420 = vadd.f32 %v1416, %v1418
        %v1421 = vadd.f32 %v1417, %v1419
        %v1422 = vmul.f32 %v1404, %v548
        %v1423 = vmul.f32 %v1405, %v548
        %v1424 = vadd.f32 %v1420, %v1422
        %v1425 = vadd.f32 %v1421, %v1423
        %v1426 = vmul.f32 %v1204, %v556
        %v1427 = vmul.f32 %v1205, %v556
        %v1428 = vmul.f32 %v1304, %v562
        %v1429 = vmul.f32 %v1305, %v562
        %v1430 = vadd.f32 %v1426, %v1428
        %v1431 = vadd.f32 %v1427, %v1429
        %v1432 = vmul.f32 %v1404, %v570
        %v1433 = vmul.f32 %v1405, %v570
        %v1434 = vadd.f32 %v1430, %v1432
        %v1435 = vadd.f32 %v1431, %v1433
        %v1436 = vrot.slane %v1414, 7
        %v1437 = vrot.slane %v1415, 7
        %v1438 = vsel %vm577, %v1436, %v1437
        %v1439 = vsel %vm577, %v1437, %v1436
        %v1440 = vsel %vm495, %v1439, 0.0
        %v1441 = vsel %vm496, %v1438, 0.0
        %v1442 = vadd.f32 %v1424, %v1440
        %v1443 = vadd.f32 %v1425, %v1441
        %v1444 = vrot.slane %v1434, 1
        %v1445 = vrot.slane %v1435, 1
        %v1446 = vsel %vm586, %v1444, %v1445
        %v1447 = vsel %vm586, %v1445, %v1444
        %v1448 = vsel %vm497, %v1446, 0.0
        %v1449 = vsel %vm498, %v1447, 0.0
        %v1450 = vadd.f32 %v1442, %v1448
        %v1451 = vadd.f32 %v1443, %v1449
        %v1452 = vadd.f32 %v1450, %v597
        %v1453 = vadd.f32 %v1451, %v597
        %v1454 = vmax.f32 %v1452, 0.0
        %v1455 = vmax.f32 %v1453, 0.0
        %v1456 = vpack.c.bf16 %v1455, %v1454
        %1457 = vmatprep.subr.bf16.mxu0 0
        %1458 = vmatpush1.bf16.msra.mxu0 %v642
        %1459 = vmatprep.subr.bf16.mxu0 0
        %1460 = vmatpush1.bf16.msra.mxu0 %v643
        %1461 = vmatprep.subr.bf16.mxu0 0
        %1462 = vmatpush1.bf16.msra.mxu0 %v644
        %1463 = vmatprep.subr.bf16.mxu0 0
        %1464 = vmatpush1.bf16.msra.mxu0 %v645
        %1465 = vmatprep.subr.bf16.mxu0 0
        %1466 = vmatpush1.bf16.msra.mxu0 %v646
        %1467 = vmatprep.subr.bf16.mxu0 0
        %1468 = vmatpush1.bf16.msra.mxu0 %v647
        %1469 = vmatprep.subr.bf16.mxu0 0
        %1470 = vmatpush1.bf16.msra.mxu0 %v648
        %1471 = vmatprep.subr.bf16.mxu0 0
        %1472 = vmatpush1.bf16.msra.mxu0 %v649
        %1473 = vmatprep.subr.bf16.mxu0 0
        %1474 = vmatpush1.bf16.msra.mxu0 0
        %1475 = vmatprep.subr.bf16.mxu0 0
        %1476 = vmatpush1.bf16.msra.mxu0 0
        %1477 = vmatprep.subr.bf16.mxu0 0
        %1478 = vmatpush1.bf16.msra.mxu0 0
        %1479 = vmatprep.subr.bf16.mxu0 0
        %1480 = vmatpush1.bf16.msra.mxu0 0
        %1481 = vmatprep.subr.bf16.mxu0 0
        %1482 = vmatpush1.bf16.msra.mxu0 0
        %1483 = vmatprep.subr.bf16.mxu0 0
        %1484 = vmatpush1.bf16.msra.mxu0 0
        %1485 = vmatprep.subr.bf16.mxu0 0
        %1486 = vmatpush1.bf16.msra.mxu0 0
        %1487 = vmatprep.subr.bf16.mxu0 0
        %1488 = vmatpush1.bf16.msra.mxu0 0
        %1489 = vmatprep.mubr.bf16.mxu0 0
        %1490 = vmatmul.mubr.bf16.gmra.mrb[0].mxu0 %v1456
        %v1491 = vpop.f32.mrb[0].mxu0
        %v1492 = vadd.f32 %v608, %v1491
        %v1493 = vpop.f32.mrb[0].mxu0
        %v1494 = vpop.f32.mrb[0].mxu0
        %v1495 = vadd.f32 %v608, %v1494
        %v1496 = vpop.f32.mrb[0].mxu0
        %1497 = vdwg.mxu0
        %v1498 = vmax.f32 %v1492, 0.0
        %v1499 = vmax.f32 %v1495, 0.0
        %s1500 = scalar_lea.vmem %s453, 128 [#allocation11]
        %1501 = vst [vmem:[%s1500] sm:$0xff] %v1498
        %1502 = vst [vmem:[%s1500 + $0x8] sm:$0xff] %v1499
        %s1503 = scalar_lea.vmem %s387, 160 [#allocation2]
        %v1504 = vld [vmem:[%s1503] sm:$0xff]
        %v1505 = vld [vmem:[%s1503 + $0x8] sm:$0xff]
        %v1506 = vmul.f32 %v1304, %v512
        %v1507 = vmul.f32 %v1305, %v512
        %v1508 = vmul.f32 %v1404, %v518
        %v1509 = vmul.f32 %v1405, %v518
        %v1510 = vadd.f32 %v1506, %v1508
        %v1511 = vadd.f32 %v1507, %v1509
        %v1512 = vmul.f32 %v1504, %v526
        %v1513 = vmul.f32 %v1505, %v526
        %v1514 = vadd.f32 %v1510, %v1512
        %v1515 = vadd.f32 %v1511, %v1513
        %v1516 = vmul.f32 %v1304, %v534
        %v1517 = vmul.f32 %v1305, %v534
        %v1518 = vmul.f32 %v1404, %v540
        %v1519 = vmul.f32 %v1405, %v540
        %v1520 = vadd.f32 %v1516, %v1518
        %v1521 = vadd.f32 %v1517, %v1519
        %v1522 = vmul.f32 %v1504, %v548
        %v1523 = vmul.f32 %v1505, %v548
        %v1524 = vadd.f32 %v1520, %v1522
        %v1525 = vadd.f32 %v1521, %v1523
        %v1526 = vmul.f32 %v1304, %v556
        %v1527 = vmul.f32 %v1305, %v556
        %v1528 = vmul.f32 %v1404, %v562
        %v1529 = vmul.f32 %v1405, %v562
        %v1530 = vadd.f32 %v1526, %v1528
        %v1531 = vadd.f32 %v1527, %v1529
        %v1532 = vmul.f32 %v1504, %v570
        %v1533 = vmul.f32 %v1505, %v570
        %v1534 = vadd.f32 %v1530, %v1532
        %v1535 = vadd.f32 %v1531, %v1533
        %v1536 = vrot.slane %v1514, 7
        %v1537 = vrot.slane %v1515, 7
        %v1538 = vsel %vm577, %v1536, %v1537
        %v1539 = vsel %vm577, %v1537, %v1536
        %v1540 = vsel %vm495, %v1539, 0.0
        %v1541 = vsel %vm496, %v1538, 0.0
        %v1542 = vadd.f32 %v1524, %v1540
        %v1543 = vadd.f32 %v1525, %v1541
        %v1544 = vrot.slane %v1534, 1
        %v1545 = vrot.slane %v1535, 1
        %v1546 = vsel %vm586, %v1544, %v1545
        %v1547 = vsel %vm586, %v1545, %v1544
        %v1548 = vsel %vm497, %v1546, 0.0
        %v1549 = vsel %vm498, %v1547, 0.0
        %v1550 = vadd.f32 %v1542, %v1548
        %v1551 = vadd.f32 %v1543, %v1549
        %v1552 = vadd.f32 %v1550, %v597
        %v1553 = vadd.f32 %v1551, %v597
        %v1554 = vmax.f32 %v1552, 0.0
        %v1555 = vmax.f32 %v1553, 0.0
        %v1556 = vpack.c.bf16 %v1555, %v1554
        %1557 = vmatprep.subr.bf16.mxu0 0
        %1558 = vmatpush1.bf16.msra.mxu0 %v642
        %1559 = vmatprep.subr.bf16.mxu0 0
        %1560 = vmatpush1.bf16.msra.mxu0 %v643
        %1561 = vmatprep.subr.bf16.mxu0 0
        %1562 = vmatpush1.bf16.msra.mxu0 %v644
        %1563 = vmatprep.subr.bf16.mxu0 0
        %1564 = vmatpush1.bf16.msra.mxu0 %v645
        %1565 = vmatprep.subr.bf16.mxu0 0
        %1566 = vmatpush1.bf16.msra.mxu0 %v646
        %1567 = vmatprep.subr.bf16.mxu0 0
        %1568 = vmatpush1.bf16.msra.mxu0 %v647
        %1569 = vmatprep.subr.bf16.mxu0 0
        %1570 = vmatpush1.bf16.msra.mxu0 %v648
        %1571 = vmatprep.subr.bf16.mxu0 0
        %1572 = vmatpush1.bf16.msra.mxu0 %v649
        %1573 = vmatprep.subr.bf16.mxu0 0
        %1574 = vmatpush1.bf16.msra.mxu0 0
        %1575 = vmatprep.subr.bf16.mxu0 0
        %1576 = vmatpush1.bf16.msra.mxu0 0
        %1577 = vmatprep.subr.bf16.mxu0 0
        %1578 = vmatpush1.bf16.msra.mxu0 0
        %1579 = vmatprep.subr.bf16.mxu0 0
        %1580 = vmatpush1.bf16.msra.mxu0 0
        %1581 = vmatprep.subr.bf16.mxu0 0
        %1582 = vmatpush1.bf16.msra.mxu0 0
        %1583 = vmatprep.subr.bf16.mxu0 0
        %1584 = vmatpush1.bf16.msra.mxu0 0
        %1585 = vmatprep.subr.bf16.mxu0 0
        %1586 = vmatpush1.bf16.msra.mxu0 0
        %1587 = vmatprep.subr.bf16.mxu0 0
        %1588 = vmatpush1.bf16.msra.mxu0 0
        %1589 = vmatprep.mubr.bf16.mxu0 0
        %1590 = vmatmul.mubr.bf16.gmra.mrb[0].mxu0 %v1556
        %v1591 = vpop.f32.mrb[0].mxu0
        %v1592 = vadd.f32 %v608, %v1591
        %v1593 = vpop.f32.mrb[0].mxu0
        %v1594 = vpop.f32.mrb[0].mxu0
        %v1595 = vadd.f32 %v608, %v1594
        %v1596 = vpop.f32.mrb[0].mxu0
        %1597 = vdwg.mxu0
        %v1598 = vmax.f32 %v1592, 0.0
        %v1599 = vmax.f32 %v1595, 0.0
        %s1600 = scalar_lea.vmem %s453, 144 [#allocation11]
        %1601 = vst [vmem:[%s1600] sm:$0xff] %v1598
        %1602 = vst [vmem:[%s1600 + $0x8] sm:$0xff] %v1599
        %s1603 = scalar_lea.vmem %s387, 176 [#allocation2]
        %v1604 = vld [vmem:[%s1603] sm:$0xff]
        %v1605 = vld [vmem:[%s1603 + $0x8] sm:$0xff]
        %v1606 = vmul.f32 %v1404, %v512
        %v1607 = vmul.f32 %v1405, %v512
        %v1608 = vmul.f32 %v1504, %v518
        %v1609 = vmul.f32 %v1505, %v518
        %v1610 = vadd.f32 %v1606, %v1608
        %v1611 = vadd.f32 %v1607, %v1609
        %v1612 = vmul.f32 %v1604, %v526
        %v1613 = vmul.f32 %v1605, %v526
        %v1614 = vadd.f32 %v1610, %v1612
        %v1615 = vadd.f32 %v1611, %v1613
        %v1616 = vmul.f32 %v1404, %v534
        %v1617 = vmul.f32 %v1405, %v534
        %v1618 = vmul.f32 %v1504, %v540
        %v1619 = vmul.f32 %v1505, %v540
        %v1620 = vadd.f32 %v1616, %v1618
        %v1621 = vadd.f32 %v1617, %v1619
        %v1622 = vmul.f32 %v1604, %v548
        %v1623 = vmul.f32 %v1605, %v548
        %v1624 = vadd.f32 %v1620, %v1622
        %v1625 = vadd.f32 %v1621, %v1623
        %v1626 = vmul.f32 %v1404, %v556
        %v1627 = vmul.f32 %v1405, %v556
        %v1628 = vmul.f32 %v1504, %v562
        %v1629 = vmul.f32 %v1505, %v562
        %v1630 = vadd.f32 %v1626, %v1628
        %v1631 = vadd.f32 %v1627, %v1629
        %v1632 = vmul.f32 %v1604, %v570
        %v1633 = vmul.f32 %v1605, %v570
        %v1634 = vadd.f32 %v1630, %v1632
        %v1635 = vadd.f32 %v1631, %v1633
        %v1636 = vrot.slane %v1614, 7
        %v1637 = vrot.slane %v1615, 7
        %v1638 = vsel %vm577, %v1636, %v1637
        %v1639 = vsel %vm577, %v1637, %v1636
        %v1640 = vsel %vm495, %v1639, 0.0
        %v1641 = vsel %vm496, %v1638, 0.0
        %v1642 = vadd.f32 %v1624, %v1640
        %v1643 = vadd.f32 %v1625, %v1641
        %v1644 = vrot.slane %v1634, 1
        %v1645 = vrot.slane %v1635, 1
        %v1646 = vsel %vm586, %v1644, %v1645
        %v1647 = vsel %vm586, %v1645, %v1644
        %v1648 = vsel %vm497, %v1646, 0.0
        %v1649 = vsel %vm498, %v1647, 0.0
        %v1650 = vadd.f32 %v1642, %v1648
        %v1651 = vadd.f32 %v1643, %v1649
        %v1652 = vadd.f32 %v1650, %v597
        %v1653 = vadd.f32 %v1651, %v597
        %v1654 = vmax.f32 %v1652, 0.0
        %v1655 = vmax.f32 %v1653, 0.0
        %v1656 = vpack.c.bf16 %v1655, %v1654
        %1657 = vmatprep.subr.bf16.mxu0 0
        %1658 = vmatpush1.bf16.msra.mxu0 %v642
        %1659 = vmatprep.subr.bf16.mxu0 0
        %1660 = vmatpush1.bf16.msra.mxu0 %v643
        %1661 = vmatprep.subr.bf16.mxu0 0
        %1662 = vmatpush1.bf16.msra.mxu0 %v644
        %1663 = vmatprep.subr.bf16.mxu0 0
        %1664 = vmatpush1.bf16.msra.mxu0 %v645
        %1665 = vmatprep.subr.bf16.mxu0 0
        %1666 = vmatpush1.bf16.msra.mxu0 %v646
        %1667 = vmatprep.subr.bf16.mxu0 0
        %1668 = vmatpush1.bf16.msra.mxu0 %v647
        %1669 = vmatprep.subr.bf16.mxu0 0
        %1670 = vmatpush1.bf16.msra.mxu0 %v648
        %1671 = vmatprep.subr.bf16.mxu0 0
        %1672 = vmatpush1.bf16.msra.mxu0 %v649
        %1673 = vmatprep.subr.bf16.mxu0 0
        %1674 = vmatpush1.bf16.msra.mxu0 0
        %1675 = vmatprep.subr.bf16.mxu0 0
        %1676 = vmatpush1.bf16.msra.mxu0 0
        %1677 = vmatprep.subr.bf16.mxu0 0
        %1678 = vmatpush1.bf16.msra.mxu0 0
        %1679 = vmatprep.subr.bf16.mxu0 0
        %1680 = vmatpush1.bf16.msra.mxu0 0
        %1681 = vmatprep.subr.bf16.mxu0 0
        %1682 = vmatpush1.bf16.msra.mxu0 0
        %1683 = vmatprep.subr.bf16.mxu0 0
        %1684 = vmatpush1.bf16.msra.mxu0 0
        %1685 = vmatprep.subr.bf16.mxu0 0
        %1686 = vmatpush1.bf16.msra.mxu0 0
        %1687 = vmatprep.subr.bf16.mxu0 0
        %1688 = vmatpush1.bf16.msra.mxu0 0
        %1689 = vmatprep.mubr.bf16.mxu0 0
        %1690 = vmatmul.mubr.bf16.gmra.mrb[0].mxu0 %v1656
        %v1691 = vpop.f32.mrb[0].mxu0
        %v1692 = vadd.f32 %v608, %v1691
        %v1693 = vpop.f32.mrb[0].mxu0
        %v1694 = vpop.f32.mrb[0].mxu0
        %v1695 = vadd.f32 %v608, %v1694
        %v1696 = vpop.f32.mrb[0].mxu0
        %1697 = vdwg.mxu0
        %v1698 = vmax.f32 %v1692, 0.0
        %v1699 = vmax.f32 %v1695, 0.0
        %s1700 = scalar_lea.vmem %s453, 160 [#allocation11]
        %1701 = vst [vmem:[%s1700] sm:$0xff] %v1698
        %1702 = vst [vmem:[%s1700 + $0x8] sm:$0xff] %v1699
        %s1703 = scalar_lea.vmem %s387, 192 [#allocation2]
        %v1704 = vld [vmem:[%s1703] sm:$0xff]
        %v1705 = vld [vmem:[%s1703 + $0x8] sm:$0xff]
        %v1706 = vmul.f32 %v1504, %v512
        %v1707 = vmul.f32 %v1505, %v512
        %v1708 = vmul.f32 %v1604, %v518
        %v1709 = vmul.f32 %v1605, %v518
        %v1710 = vadd.f32 %v1706, %v1708
        %v1711 = vadd.f32 %v1707, %v1709
        %v1712 = vmul.f32 %v1704, %v526
        %v1713 = vmul.f32 %v1705, %v526
        %v1714 = vadd.f32 %v1710, %v1712
        %v1715 = vadd.f32 %v1711, %v1713
        %v1716 = vmul.f32 %v1504, %v534
        %v1717 = vmul.f32 %v1505, %v534
        %v1718 = vmul.f32 %v1604, %v540
        %v1719 = vmul.f32 %v1605, %v540
        %v1720 = vadd.f32 %v1716, %v1718
        %v1721 = vadd.f32 %v1717, %v1719
        %v1722 = vmul.f32 %v1704, %v548
        %v1723 = vmul.f32 %v1705, %v548
        %v1724 = vadd.f32 %v1720, %v1722
        %v1725 = vadd.f32 %v1721, %v1723
        %v1726 = vmul.f32 %v1504, %v556
        %v1727 = vmul.f32 %v1505, %v556
        %v1728 = vmul.f32 %v1604, %v562
        %v1729 = vmul.f32 %v1605, %v562
        %v1730 = vadd.f32 %v1726, %v1728
        %v1731 = vadd.f32 %v1727, %v1729
        %v1732 = vmul.f32 %v1704, %v570
        %v1733 = vmul.f32 %v1705, %v570
        %v1734 = vadd.f32 %v1730, %v1732
        %v1735 = vadd.f32 %v1731, %v1733
        %v1736 = vrot.slane %v1714, 7
        %v1737 = vrot.slane %v1715, 7
        %v1738 = vsel %vm577, %v1736, %v1737
        %v1739 = vsel %vm577, %v1737, %v1736
        %v1740 = vsel %vm495, %v1739, 0.0
        %v1741 = vsel %vm496, %v1738, 0.0
        %v1742 = vadd.f32 %v1724, %v1740
        %v1743 = vadd.f32 %v1725, %v1741
        %v1744 = vrot.slane %v1734, 1
        %v1745 = vrot.slane %v1735, 1
        %v1746 = vsel %vm586, %v1744, %v1745
        %v1747 = vsel %vm586, %v1745, %v1744
        %v1748 = vsel %vm497, %v1746, 0.0
        %v1749 = vsel %vm498, %v1747, 0.0
        %v1750 = vadd.f32 %v1742, %v1748
        %v1751 = vadd.f32 %v1743, %v1749
        %v1752 = vadd.f32 %v1750, %v597
        %v1753 = vadd.f32 %v1751, %v597
        %v1754 = vmax.f32 %v1752, 0.0
        %v1755 = vmax.f32 %v1753, 0.0
        %v1756 = vpack.c.bf16 %v1755, %v1754
        %1757 = vmatprep.subr.bf16.mxu0 0
        %1758 = vmatpush1.bf16.msra.mxu0 %v642
        %1759 = vmatprep.subr.bf16.mxu0 0
        %1760 = vmatpush1.bf16.msra.mxu0 %v643
        %1761 = vmatprep.subr.bf16.mxu0 0
        %1762 = vmatpush1.bf16.msra.mxu0 %v644
        %1763 = vmatprep.subr.bf16.mxu0 0
        %1764 = vmatpush1.bf16.msra.mxu0 %v645
        %1765 = vmatprep.subr.bf16.mxu0 0
        %1766 = vmatpush1.bf16.msra.mxu0 %v646
        %1767 = vmatprep.subr.bf16.mxu0 0
        %1768 = vmatpush1.bf16.msra.mxu0 %v647
        %1769 = vmatprep.subr.bf16.mxu0 0
        %1770 = vmatpush1.bf16.msra.mxu0 %v648
        %1771 = vmatprep.subr.bf16.mxu0 0
        %1772 = vmatpush1.bf16.msra.mxu0 %v649
        %1773 = vmatprep.subr.bf16.mxu0 0
        %1774 = vmatpush1.bf16.msra.mxu0 0
        %1775 = vmatprep.subr.bf16.mxu0 0
        %1776 = vmatpush1.bf16.msra.mxu0 0
        %1777 = vmatprep.subr.bf16.mxu0 0
        %1778 = vmatpush1.bf16.msra.mxu0 0
        %1779 = vmatprep.subr.bf16.mxu0 0
        %1780 = vmatpush1.bf16.msra.mxu0 0
        %1781 = vmatprep.subr.bf16.mxu0 0
        %1782 = vmatpush1.bf16.msra.mxu0 0
        %1783 = vmatprep.subr.bf16.mxu0 0
        %1784 = vmatpush1.bf16.msra.mxu0 0
        %1785 = vmatprep.subr.bf16.mxu0 0
        %1786 = vmatpush1.bf16.msra.mxu0 0
        %1787 = vmatprep.subr.bf16.mxu0 0
        %1788 = vmatpush1.bf16.msra.mxu0 0
        %1789 = vmatprep.mubr.bf16.mxu0 0
        %1790 = vmatmul.mubr.bf16.gmra.mrb[0].mxu0 %v1756
        %v1791 = vpop.f32.mrb[0].mxu0
        %v1792 = vadd.f32 %v608, %v1791
        %v1793 = vpop.f32.mrb[0].mxu0
        %v1794 = vpop.f32.mrb[0].mxu0
        %v1795 = vadd.f32 %v608, %v1794
        %v1796 = vpop.f32.mrb[0].mxu0
        %1797 = vdwg.mxu0
        %v1798 = vmax.f32 %v1792, 0.0
        %v1799 = vmax.f32 %v1795, 0.0
        %s1800 = scalar_lea.vmem %s453, 176 [#allocation11]
        %1801 = vst [vmem:[%s1800] sm:$0xff] %v1798
        %1802 = vst [vmem:[%s1800 + $0x8] sm:$0xff] %v1799
        %s1803 = scalar_lea.vmem %s387, 208 [#allocation2]
        %v1804 = vld [vmem:[%s1803] sm:$0xff]
        %v1805 = vld [vmem:[%s1803 + $0x8] sm:$0xff]
        %v1806 = vmul.f32 %v1604, %v512
        %v1807 = vmul.f32 %v1605, %v512
        %v1808 = vmul.f32 %v1704, %v518
        %v1809 = vmul.f32 %v1705, %v518
        %v1810 = vadd.f32 %v1806, %v1808
        %v1811 = vadd.f32 %v1807, %v1809
        %v1812 = vmul.f32 %v1804, %v526
        %v1813 = vmul.f32 %v1805, %v526
        %v1814 = vadd.f32 %v1810, %v1812
        %v1815 = vadd.f32 %v1811, %v1813
        %v1816 = vmul.f32 %v1604, %v534
        %v1817 = vmul.f32 %v1605, %v534
        %v1818 = vmul.f32 %v1704, %v540
        %v1819 = vmul.f32 %v1705, %v540
        %v1820 = vadd.f32 %v1816, %v1818
        %v1821 = vadd.f32 %v1817, %v1819
        %v1822 = vmul.f32 %v1804, %v548
        %v1823 = vmul.f32 %v1805, %v548
        %v1824 = vadd.f32 %v1820, %v1822
        %v1825 = vadd.f32 %v1821, %v1823
        %v1826 = vmul.f32 %v1604, %v556
        %v1827 = vmul.f32 %v1605, %v556
        %v1828 = vmul.f32 %v1704, %v562
        %v1829 = vmul.f32 %v1705, %v562
        %v1830 = vadd.f32 %v1826, %v1828
        %v1831 = vadd.f32 %v1827, %v1829
        %v1832 = vmul.f32 %v1804, %v570
        %v1833 = vmul.f32 %v1805, %v570
        %v1834 = vadd.f32 %v1830, %v1832
        %v1835 = vadd.f32 %v1831, %v1833
        %v1836 = vrot.slane %v1814, 7
        %v1837 = vrot.slane %v1815, 7
        %v1838 = vsel %vm577, %v1836, %v1837
        %v1839 = vsel %vm577, %v1837, %v1836
        %v1840 = vsel %vm495, %v1839, 0.0
        %v1841 = vsel %vm496, %v1838, 0.0
        %v1842 = vadd.f32 %v1824, %v1840
        %v1843 = vadd.f32 %v1825, %v1841
        %v1844 = vrot.slane %v1834, 1
        %v1845 = vrot.slane %v1835, 1
        %v1846 = vsel %vm586, %v1844, %v1845
        %v1847 = vsel %vm586, %v1845, %v1844
        %v1848 = vsel %vm497, %v1846, 0.0
        %v1849 = vsel %vm498, %v1847, 0.0
        %v1850 = vadd.f32 %v1842, %v1848
        %v1851 = vadd.f32 %v1843, %v1849
        %v1852 = vadd.f32 %v1850, %v597
        %v1853 = vadd.f32 %v1851, %v597
        %v1854 = vmax.f32 %v1852, 0.0
        %v1855 = vmax.f32 %v1853, 0.0
        %v1856 = vpack.c.bf16 %v1855, %v1854
        %1857 = vmatprep.subr.bf16.mxu0 0
        %1858 = vmatpush1.bf16.msra.mxu0 %v642
        %1859 = vmatprep.subr.bf16.mxu0 0
        %1860 = vmatpush1.bf16.msra.mxu0 %v643
        %1861 = vmatprep.subr.bf16.mxu0 0
        %1862 = vmatpush1.bf16.msra.mxu0 %v644
        %1863 = vmatprep.subr.bf16.mxu0 0
        %1864 = vmatpush1.bf16.msra.mxu0 %v645
        %1865 = vmatprep.subr.bf16.mxu0 0
        %1866 = vmatpush1.bf16.msra.mxu0 %v646
        %1867 = vmatprep.subr.bf16.mxu0 0
        %1868 = vmatpush1.bf16.msra.mxu0 %v647
        %1869 = vmatprep.subr.bf16.mxu0 0
        %1870 = vmatpush1.bf16.msra.mxu0 %v648
        %1871 = vmatprep.subr.bf16.mxu0 0
        %1872 = vmatpush1.bf16.msra.mxu0 %v649
        %1873 = vmatprep.subr.bf16.mxu0 0
        %1874 = vmatpush1.bf16.msra.mxu0 0
        %1875 = vmatprep.subr.bf16.mxu0 0
        %1876 = vmatpush1.bf16.msra.mxu0 0
        %1877 = vmatprep.subr.bf16.mxu0 0
        %1878 = vmatpush1.bf16.msra.mxu0 0
        %1879 = vmatprep.subr.bf16.mxu0 0
        %1880 = vmatpush1.bf16.msra.mxu0 0
        %1881 = vmatprep.subr.bf16.mxu0 0
        %1882 = vmatpush1.bf16.msra.mxu0 0
        %1883 = vmatprep.subr.bf16.mxu0 0
        %1884 = vmatpush1.bf16.msra.mxu0 0
        %1885 = vmatprep.subr.bf16.mxu0 0
        %1886 = vmatpush1.bf16.msra.mxu0 0
        %1887 = vmatprep.subr.bf16.mxu0 0
        %1888 = vmatpush1.bf16.msra.mxu0 0
        %1889 = vmatprep.mubr.bf16.mxu0 0
        %1890 = vmatmul.mubr.bf16.gmra.mrb[0].mxu0 %v1856
        %v1891 = vpop.f32.mrb[0].mxu0
        %v1892 = vadd.f32 %v608, %v1891
        %v1893 = vpop.f32.mrb[0].mxu0
        %v1894 = vpop.f32.mrb[0].mxu0
        %v1895 = vadd.f32 %v608, %v1894
        %v1896 = vpop.f32.mrb[0].mxu0
        %1897 = vdwg.mxu0
        %v1898 = vmax.f32 %v1892, 0.0
        %v1899 = vmax.f32 %v1895, 0.0
        %s1900 = scalar_lea.vmem %s453, 192 [#allocation11]
        %1901 = vst [vmem:[%s1900] sm:$0xff] %v1898
        %1902 = vst [vmem:[%s1900 + $0x8] sm:$0xff] %v1899
        %s1903 = scalar_lea.vmem %s387, 224 [#allocation2]
        %v1904 = vld [vmem:[%s1903] sm:$0xff]
        %v1905 = vld [vmem:[%s1903 + $0x8] sm:$0xff]
        %v1906 = vmul.f32 %v1704, %v512
        %v1907 = vmul.f32 %v1705, %v512
        %v1908 = vmul.f32 %v1804, %v518
        %v1909 = vmul.f32 %v1805, %v518
        %v1910 = vadd.f32 %v1906, %v1908
        %v1911 = vadd.f32 %v1907, %v1909
        %v1912 = vmul.f32 %v1904, %v526
        %v1913 = vmul.f32 %v1905, %v526
        %v1914 = vadd.f32 %v1910, %v1912
        %v1915 = vadd.f32 %v1911, %v1913
        %v1916 = vmul.f32 %v1704, %v534
        %v1917 = vmul.f32 %v1705, %v534
        %v1918 = vmul.f32 %v1804, %v540
        %v1919 = vmul.f32 %v1805, %v540
        %v1920 = vadd.f32 %v1916, %v1918
        %v1921 = vadd.f32 %v1917, %v1919
        %v1922 = vmul.f32 %v1904, %v548
        %v1923 = vmul.f32 %v1905, %v548
        %v1924 = vadd.f32 %v1920, %v1922
        %v1925 = vadd.f32 %v1921, %v1923
        %v1926 = vmul.f32 %v1704, %v556
        %v1927 = vmul.f32 %v1705, %v556
        %v1928 = vmul.f32 %v1804, %v562
        %v1929 = vmul.f32 %v1805, %v562
        %v1930 = vadd.f32 %v1926, %v1928
        %v1931 = vadd.f32 %v1927, %v1929
        %v1932 = vmul.f32 %v1904, %v570
        %v1933 = vmul.f32 %v1905, %v570
        %v1934 = vadd.f32 %v1930, %v1932
        %v1935 = vadd.f32 %v1931, %v1933
        %v1936 = vrot.slane %v1914, 7
        %v1937 = vrot.slane %v1915, 7
        %v1938 = vsel %vm577, %v1936, %v1937
        %v1939 = vsel %vm577, %v1937, %v1936
        %v1940 = vsel %vm495, %v1939, 0.0
        %v1941 = vsel %vm496, %v1938, 0.0
        %v1942 = vadd.f32 %v1924, %v1940
        %v1943 = vadd.f32 %v1925, %v1941
        %v1944 = vrot.slane %v1934, 1
        %v1945 = vrot.slane %v1935, 1
        %v1946 = vsel %vm586, %v1944, %v1945
        %v1947 = vsel %vm586, %v1945, %v1944
        %v1948 = vsel %vm497, %v1946, 0.0
        %v1949 = vsel %vm498, %v1947, 0.0
        %v1950 = vadd.f32 %v1942, %v1948
        %v1951 = vadd.f32 %v1943, %v1949
        %v1952 = vadd.f32 %v1950, %v597
        %v1953 = vadd.f32 %v1951, %v597
        %v1954 = vmax.f32 %v1952, 0.0
        %v1955 = vmax.f32 %v1953, 0.0
        %v1956 = vpack.c.bf16 %v1955, %v1954
        %1957 = vmatprep.subr.bf16.mxu0 0
        %1958 = vmatpush1.bf16.msra.mxu0 %v642
        %1959 = vmatprep.subr.bf16.mxu0 0
        %1960 = vmatpush1.bf16.msra.mxu0 %v643
        %1961 = vmatprep.subr.bf16.mxu0 0
        %1962 = vmatpush1.bf16.msra.mxu0 %v644
        %1963 = vmatprep.subr.bf16.mxu0 0
        %1964 = vmatpush1.bf16.msra.mxu0 %v645
        %1965 = vmatprep.subr.bf16.mxu0 0
        %1966 = vmatpush1.bf16.msra.mxu0 %v646
        %1967 = vmatprep.subr.bf16.mxu0 0
        %1968 = vmatpush1.bf16.msra.mxu0 %v647
        %1969 = vmatprep.subr.bf16.mxu0 0
        %1970 = vmatpush1.bf16.msra.mxu0 %v648
        %1971 = vmatprep.subr.bf16.mxu0 0
        %1972 = vmatpush1.bf16.msra.mxu0 %v649
        %1973 = vmatprep.subr.bf16.mxu0 0
        %1974 = vmatpush1.bf16.msra.mxu0 0
        %1975 = vmatprep.subr.bf16.mxu0 0
        %1976 = vmatpush1.bf16.msra.mxu0 0
        %1977 = vmatprep.subr.bf16.mxu0 0
        %1978 = vmatpush1.bf16.msra.mxu0 0
        %1979 = vmatprep.subr.bf16.mxu0 0
        %1980 = vmatpush1.bf16.msra.mxu0 0
        %1981 = vmatprep.subr.bf16.mxu0 0
        %1982 = vmatpush1.bf16.msra.mxu0 0
        %1983 = vmatprep.subr.bf16.mxu0 0
        %1984 = vmatpush1.bf16.msra.mxu0 0
        %1985 = vmatprep.subr.bf16.mxu0 0
        %1986 = vmatpush1.bf16.msra.mxu0 0
        %1987 = vmatprep.subr.bf16.mxu0 0
        %1988 = vmatpush1.bf16.msra.mxu0 0
        %1989 = vmatprep.mubr.bf16.mxu0 0
        %1990 = vmatmul.mubr.bf16.gmra.mrb[0].mxu0 %v1956
        %v1991 = vpop.f32.mrb[0].mxu0
        %v1992 = vadd.f32 %v608, %v1991
        %v1993 = vpop.f32.mrb[0].mxu0
        %v1994 = vpop.f32.mrb[0].mxu0
        %v1995 = vadd.f32 %v608, %v1994
        %v1996 = vpop.f32.mrb[0].mxu0
        %1997 = vdwg.mxu0
        %v1998 = vmax.f32 %v1992, 0.0
        %v1999 = vmax.f32 %v1995, 0.0
        %s2000 = scalar_lea.vmem %s453, 208 [#allocation11]
        %2001 = vst [vmem:[%s2000] sm:$0xff] %v1998
        %2002 = vst [vmem:[%s2000 + $0x8] sm:$0xff] %v1999
        %s2003 = scalar_lea.vmem %s387, 240 [#allocation2]
        %v2004 = vld [vmem:[%s2003] sm:$0xff]
        %v2005 = vld [vmem:[%s2003 + $0x8] sm:$0xff]
        %v2006 = vmul.f32 %v1804, %v512
        %v2007 = vmul.f32 %v1805, %v512
        %v2008 = vmul.f32 %v1904, %v518
        %v2009 = vmul.f32 %v1905, %v518
        %v2010 = vadd.f32 %v2006, %v2008
        %v2011 = vadd.f32 %v2007, %v2009
        %v2012 = vmul.f32 %v2004, %v526
        %v2013 = vmul.f32 %v2005, %v526
        %v2014 = vadd.f32 %v2010, %v2012
        %v2015 = vadd.f32 %v2011, %v2013
        %v2016 = vmul.f32 %v1804, %v534
        %v2017 = vmul.f32 %v1805, %v534
        %v2018 = vmul.f32 %v1904, %v540
        %v2019 = vmul.f32 %v1905, %v540
        %v2020 = vadd.f32 %v2016, %v2018
        %v2021 = vadd.f32 %v2017, %v2019
        %v2022 = vmul.f32 %v2004, %v548
        %v2023 = vmul.f32 %v2005, %v548
        %v2024 = vadd.f32 %v2020, %v2022
        %v2025 = vadd.f32 %v2021, %v2023
        %v2026 = vmul.f32 %v1804, %v556
        %v2027 = vmul.f32 %v1805, %v556
        %v2028 = vmul.f32 %v1904, %v562
        %v2029 = vmul.f32 %v1905, %v562
        %v2030 = vadd.f32 %v2026, %v2028
        %v2031 = vadd.f32 %v2027, %v2029
        %v2032 = vmul.f32 %v2004, %v570
        %v2033 = vmul.f32 %v2005, %v570
        %v2034 = vadd.f32 %v2030, %v2032
        %v2035 = vadd.f32 %v2031, %v2033
        %v2036 = vrot.slane %v2014, 7
        %v2037 = vrot.slane %v2015, 7
        %v2038 = vsel %vm577, %v2036, %v2037
        %v2039 = vsel %vm577, %v2037, %v2036
        %v2040 = vsel %vm495, %v2039, 0.0
        %v2041 = vsel %vm496, %v2038, 0.0
        %v2042 = vadd.f32 %v2024, %v2040
        %v2043 = vadd.f32 %v2025, %v2041
        %v2044 = vrot.slane %v2034, 1
        %v2045 = vrot.slane %v2035, 1
        %v2046 = vsel %vm586, %v2044, %v2045
        %v2047 = vsel %vm586, %v2045, %v2044
        %v2048 = vsel %vm497, %v2046, 0.0
        %v2049 = vsel %vm498, %v2047, 0.0
        %v2050 = vadd.f32 %v2042, %v2048
        %v2051 = vadd.f32 %v2043, %v2049
        %v2052 = vadd.f32 %v2050, %v597
        %v2053 = vadd.f32 %v2051, %v597
        %v2054 = vmax.f32 %v2052, 0.0
        %v2055 = vmax.f32 %v2053, 0.0
        %v2056 = vpack.c.bf16 %v2055, %v2054
        %2057 = vmatprep.subr.bf16.mxu0 0
        %2058 = vmatpush1.bf16.msra.mxu0 %v642
        %2059 = vmatprep.subr.bf16.mxu0 0
        %2060 = vmatpush1.bf16.msra.mxu0 %v643
        %2061 = vmatprep.subr.bf16.mxu0 0
        %2062 = vmatpush1.bf16.msra.mxu0 %v644
        %2063 = vmatprep.subr.bf16.mxu0 0
        %2064 = vmatpush1.bf16.msra.mxu0 %v645
        %2065 = vmatprep.subr.bf16.mxu0 0
        %2066 = vmatpush1.bf16.msra.mxu0 %v646
        %2067 = vmatprep.subr.bf16.mxu0 0
        %2068 = vmatpush1.bf16.msra.mxu0 %v647
        %2069 = vmatprep.subr.bf16.mxu0 0
        %2070 = vmatpush1.bf16.msra.mxu0 %v648
        %2071 = vmatprep.subr.bf16.mxu0 0
        %2072 = vmatpush1.bf16.msra.mxu0 %v649
        %2073 = vmatprep.subr.bf16.mxu0 0
        %2074 = vmatpush1.bf16.msra.mxu0 0
        %2075 = vmatprep.subr.bf16.mxu0 0
        %2076 = vmatpush1.bf16.msra.mxu0 0
        %2077 = vmatprep.subr.bf16.mxu0 0
        %2078 = vmatpush1.bf16.msra.mxu0 0
        %2079 = vmatprep.subr.bf16.mxu0 0
        %2080 = vmatpush1.bf16.msra.mxu0 0
        %2081 = vmatprep.subr.bf16.mxu0 0
        %2082 = vmatpush1.bf16.msra.mxu0 0
        %2083 = vmatprep.subr.bf16.mxu0 0
        %2084 = vmatpush1.bf16.msra.mxu0 0
        %2085 = vmatprep.subr.bf16.mxu0 0
        %2086 = vmatpush1.bf16.msra.mxu0 0
        %2087 = vmatprep.subr.bf16.mxu0 0
        %2088 = vmatpush1.bf16.msra.mxu0 0
        %2089 = vmatprep.mubr.bf16.mxu0 0
        %2090 = vmatmul.mubr.bf16.gmra.mrb[0].mxu0 %v2056
        %v2091 = vpop.f32.mrb[0].mxu0
        %v2092 = vadd.f32 %v608, %v2091
        %v2093 = vpop.f32.mrb[0].mxu0
        %v2094 = vpop.f32.mrb[0].mxu0
        %v2095 = vadd.f32 %v608, %v2094
        %v2096 = vpop.f32.mrb[0].mxu0
        %2097 = vdwg.mxu0
        %v2098 = vmax.f32 %v2092, 0.0
        %v2099 = vmax.f32 %v2095, 0.0
        %s2100 = scalar_lea.vmem %s453, 224 [#allocation11]
        %2101 = vst [vmem:[%s2100] sm:$0xff] %v2098
        %2102 = vst [vmem:[%s2100 + $0x8] sm:$0xff] %v2099
        %v2103 = vld [vmem:[%s405] sm:$0xff]
        %v2104 = vld [vmem:[%s405 + $0x8] sm:$0xff]
        %v2105 = vstv %s470
        %v2106 = vmul.f32 %v2103, %v2105
        %v2107 = vmul.f32 %v2104, %v2105
        %v2108 = vmul.f32 %v1904, %v512
        %v2109 = vmul.f32 %v1905, %v512
        %v2110 = vmul.f32 %v2004, %v518
        %v2111 = vmul.f32 %v2005, %v518
        %v2112 = vadd.f32 %v2108, %v2110
        %v2113 = vadd.f32 %v2109, %v2111
        %v2114 = vmul.f32 %v2106, %v526
        %v2115 = vmul.f32 %v2107, %v526
        %v2116 = vadd.f32 %v2112, %v2114
        %v2117 = vadd.f32 %v2113, %v2115
        %v2118 = vmul.f32 %v1904, %v534
        %v2119 = vmul.f32 %v1905, %v534
        %v2120 = vmul.f32 %v2004, %v540
        %v2121 = vmul.f32 %v2005, %v540
        %v2122 = vadd.f32 %v2118, %v2120
        %v2123 = vadd.f32 %v2119, %v2121
        %v2124 = vmul.f32 %v2106, %v548
        %v2125 = vmul.f32 %v2107, %v548
        %v2126 = vadd.f32 %v2122, %v2124
        %v2127 = vadd.f32 %v2123, %v2125
        %v2128 = vmul.f32 %v1904, %v556
        %v2129 = vmul.f32 %v1905, %v556
        %v2130 = vmul.f32 %v2004, %v562
        %v2131 = vmul.f32 %v2005, %v562
        %v2132 = vadd.f32 %v2128, %v2130
        %v2133 = vadd.f32 %v2129, %v2131
        %v2134 = vmul.f32 %v2106, %v570
        %v2135 = vmul.f32 %v2107, %v570
        %v2136 = vadd.f32 %v2132, %v2134
        %v2137 = vadd.f32 %v2133, %v2135
        %v2138 = vrot.slane %v2116, 7
        %v2139 = vrot.slane %v2117, 7
        %v2140 = vsel %vm577, %v2138, %v2139
        %v2141 = vsel %vm577, %v2139, %v2138
        %v2142 = vsel %vm495, %v2141, 0.0
        %v2143 = vsel %vm496, %v2140, 0.0
        %v2144 = vadd.f32 %v2126, %v2142
        %v2145 = vadd.f32 %v2127, %v2143
        %v2146 = vrot.slane %v2136, 1
        %v2147 = vrot.slane %v2137, 1
        %v2148 = vsel %vm586, %v2146, %v2147
        %v2149 = vsel %vm586, %v2147, %v2146
        %v2150 = vsel %vm497, %v2148, 0.0
        %v2151 = vsel %vm498, %v2149, 0.0
        %v2152 = vadd.f32 %v2144, %v2150
        %v2153 = vadd.f32 %v2145, %v2151
        %v2154 = vadd.f32 %v2152, %v597
        %v2155 = vadd.f32 %v2153, %v597
        %v2156 = vmax.f32 %v2154, 0.0
        %v2157 = vmax.f32 %v2155, 0.0
        %v2158 = vpack.c.bf16 %v2157, %v2156
        %2159 = vmatprep.subr.bf16.mxu0 0
        %2160 = vmatpush1.bf16.msra.mxu0 %v642
        %2161 = vmatprep.subr.bf16.mxu0 0
        %2162 = vmatpush1.bf16.msra.mxu0 %v643
        %2163 = vmatprep.subr.bf16.mxu0 0
        %2164 = vmatpush1.bf16.msra.mxu0 %v644
        %2165 = vmatprep.subr.bf16.mxu0 0
        %2166 = vmatpush1.bf16.msra.mxu0 %v645
        %2167 = vmatprep.subr.bf16.mxu0 0
        %2168 = vmatpush1.bf16.msra.mxu0 %v646
        %2169 = vmatprep.subr.bf16.mxu0 0
        %2170 = vmatpush1.bf16.msra.mxu0 %v647
        %2171 = vmatprep.subr.bf16.mxu0 0
        %2172 = vmatpush1.bf16.msra.mxu0 %v648
        %2173 = vmatprep.subr.bf16.mxu0 0
        %2174 = vmatpush1.bf16.msra.mxu0 %v649
        %2175 = vmatprep.subr.bf16.mxu0 0
        %2176 = vmatpush1.bf16.msra.mxu0 0
        %2177 = vmatprep.subr.bf16.mxu0 0
        %2178 = vmatpush1.bf16.msra.mxu0 0
        %2179 = vmatprep.subr.bf16.mxu0 0
        %2180 = vmatpush1.bf16.msra.mxu0 0
        %2181 = vmatprep.subr.bf16.mxu0 0
        %2182 = vmatpush1.bf16.msra.mxu0 0
        %2183 = vmatprep.subr.bf16.mxu0 0
        %2184 = vmatpush1.bf16.msra.mxu0 0
        %2185 = vmatprep.subr.bf16.mxu0 0
        %2186 = vmatpush1.bf16.msra.mxu0 0
        %2187 = vmatprep.subr.bf16.mxu0 0
        %2188 = vmatpush1.bf16.msra.mxu0 0
        %2189 = vmatprep.subr.bf16.mxu0 0
        %2190 = vmatpush1.bf16.msra.mxu0 0
        %2191 = vmatprep.mubr.bf16.mxu0 0
        %2192 = vmatmul.mubr.bf16.gmra.mrb[0].mxu0 %v2158
        %v2193 = vpop.f32.mrb[0].mxu0
        %v2194 = vadd.f32 %v608, %v2193
        %v2195 = vpop.f32.mrb[0].mxu0
        %v2196 = vpop.f32.mrb[0].mxu0
        %v2197 = vadd.f32 %v608, %v2196
        %v2198 = vpop.f32.mrb[0].mxu0
        %2199 = vdwg.mxu0
        %v2200 = vmax.f32 %v2194, 0.0
        %v2201 = vmax.f32 %v2197, 0.0
        %s2202 = scalar_lea.vmem %s453, 240 [#allocation11]
        %2203 = vst [vmem:[%s2202] sm:$0xff] %v2200
        %2204 = vst [vmem:[%s2202 + $0x8] sm:$0xff] %v2201
        %s2205 = sand.u32 %s234, 1
        %s2206 = scalar_lea.sflag [#allocation4], %s2205
        %s2207 = sand.u32 %s234, 1
        %s2208 = smul.addr %s2207, 256
        %s2209 = scalar_lea.vmem [#allocation11], %s2208
        // Predicated region
        $region69: #{tpu_custom_call.1} parent=47 // pred_check
          %p2210 = pneg %p244
        $region70: #{tpu_custom_call.1} parent=47 // pred_check_branch
          %2212 = sbr.rel (%p2210) target = $region72
        $region71: #{tpu_custom_call.1} parent=47 // pred_region
          %s2213 = smul.u32 16, %s33
          %s2215 = ssub.s32 4096, 4096
          %2216 = vsyncadd %s2206, %s2215
          %s2217 = smul.addr %s2213, 2
          %s2218 = smul.addr %s32, 32
          %s2219 = sadd.s32 %s2217, %s2218
          %s2220 = smul.addr %s2219, 128
          %s2221 = scalar_lea.hbm %s7, %s2220
          %s2222 = sshll.u32 %s2209, 4
          %s2223 = int_to_ptr.vmem [resolvable:$true] %s2222
          %2228 = dma.vmem_to_hbm [thread:$0]  %s2223, 4096, %s2221, %s2206, 128, 128, 8
        $region72: #{tpu_custom_call.1} parent=47 // pred_fallthru
          _
      $region48: #{tpu_custom_call.1} parent=5 // pred_fallthru
        _
      %p2229 = scmp.le.s32.totalorder 2, %s23
      // Predicated region
      $region73: #{tpu_custom_call.1} parent=5 // pred_check
        %p2230 = pneg %p2229
      $region74: #{tpu_custom_call.1} parent=5 // pred_check_branch
        %2232 = sbr.rel (%p2230) target = $region76
      $region75: #{tpu_custom_call.1} parent=5 // pred_region
        %s2233 = ssub.s32 %s23, 2
        // Predicated region
        $region77: #{tpu_custom_call.1} parent=75 // pred_check
          %p2234 = pneg %p250
        $region78: #{tpu_custom_call.1} parent=75 // pred_check_branch
          %2236 = sbr.rel (%p2234) target = $region80
        $region79: #{tpu_custom_call.1} parent=75 // pred_region
          %s2237 = sand.u32 %s235, 1
          %s2238 = scalar_lea.sflag [#allocation4], %s2237
          %s2239 = sand.u32 %s235, 1
          %s2240 = smul.addr %s2239, 256
          %s2241 = scalar_lea.vmem [#allocation11], %s2240
          %2242 = dma.done %s2238, 4096
        $region80: #{tpu_custom_call.1} parent=75 // pred_fallthru
          _
      $region76: #{tpu_custom_call.1} parent=5 // pred_fallthru
        _
    $region6: #{tpu_custom_call.1} parent=1 // loop_footer
      %s27 = sadd.s32 1, %s23
    $region7: #{tpu_custom_call.1} parent=1 // loop_footer_branch
      %22 = sbr.rel target = $region3
    $region8: #{tpu_custom_call.1} parent=1 // loop_exit
      _
    %2243 = vsyncpa [#allocation3], 1
    %s2244 = scalar_lea.sflag [#allocation3], 1
    %2245 = vsyncpa %s2244, 1
    %2246 = vsyncpa [#allocation6], 1
    %s2247 = scalar_lea.sflag [#allocation6], 1
    %2248 = vsyncpa %s2247, 1
    %2249 = vsyncpa [#allocation9], 1
    %2250 = vsyncpa [#allocation4], 1
    %s2251 = scalar_lea.sflag [#allocation4], 1
    %2252 = vsyncpa %s2251, 1

</llo_original>
